<compile_context>
chip_gen: v5e
topology: v5e:2x2
jax: 0.10.0
libtpu: 0.0.40
codegen_flags: <defaults>
</compile_context>

<pallas_src>
import math
import numpy as np
import jax
import jax.numpy as jnp
from jax import lax
from jax.experimental import pallas as pl
from jax.experimental.pallas import tpu as pltpu


# -----------------------------------------------------------------------------
# Pallas kernel: Discriminator forward for one batch tile.
# -----------------------------------------------------------------------------
def disc_kernel(
    ray_ref, aux_ref,
    cw1, cw2m, cw3, cw4m, cw5, cw6,
    w1c, w1a, w2, w3, w4,
    bias_ref,
    out_ref,
):
    f32 = jnp.float32
    bf16 = jnp.bfloat16

    def dot(a, w_ref):
        # bf16 operands into the MXU, f32 accumulation.
        return jnp.dot(a.astype(bf16), w_ref[...], preferred_element_type=f32)

    def bias(row, width):
        # static (1, width) slice of the packed f32 bias table (offset 0 -> no lane shift)
        return bias_ref[row:row + 1, :width]

    def lrelu(x):  # LeakyReLU(0.2), f32 VPU
        return jnp.maximum(x, 0.2 * x)

    def pooled(x, wm_ref, row):
        # conv + MaxPool1d(2,2) folded: single matmul against [even|odd] merged
        # Toeplitz, lane-aligned split at the 128-multiple midpoint, then max.
        y = dot(x, wm_ref)
        h = wm_ref.shape[1] // 2
        return lrelu(jnp.maximum(y[:, :h], y[:, h:]) + bias(row, h))

    # ---- conv_ray stack (channel-major flattened feature vectors) -----------
    x = ray_ref[...]                                          # (TB, N) f32
    x = lrelu(dot(x, cw1) + bias(0, cw1.shape[1]))            # Conv1d(1->8,k7)
    x = pooled(x, cw2m, 1)                                    # Conv1d(8->8,k3) + MaxPool
    x = lrelu(dot(x, cw3) + bias(2, cw3.shape[1]))            # Conv1d(8->16,k7)
    x = pooled(x, cw4m, 3)                                    # Conv1d(16->16,k3) + MaxPool
    x = lrelu(dot(x, cw5) + bias(4, cw5.shape[1]))            # Conv1d(16->8,k7)
    x = dot(x, cw6) + bias(5, cw6.shape[1])                   # Conv1d(8->1,k3) -> (TB, N//4)

    # ---- MLP (torch.cat realized as split/merged first-layer weights) -------
    h = jnp.maximum(dot(x, w1c) + dot(aux_ref[...], w1a) + bias(6, w1c.shape[1]), 0.0)
    h = jnp.maximum(dot(h, w2) + bias(7, w2.shape[1]), 0.0)
    h = jnp.maximum(dot(h, w3) + bias(8, w3.shape[1]), 0.0)
    out_ref[...] = dot(h, w4) + bias(9, w4.shape[1])          # (TB, 128) lane-dense


def discriminator_pallas(ray, aux, kparams, *, tile_b=128):
    B, N = ray.shape
    assert B % tile_b == 0, (B, tile_b)
    weights = kparams["weights"]
    bias_pack = kparams["bias_pack"]

    in_specs = [
        pl.BlockSpec((tile_b, N), lambda i: (i, 0)),
        pl.BlockSpec((tile_b, aux.shape[1]), lambda i: (i, 0)),
    ]
    # Weights: full-array blocks, constant index map -> DMA'd once, VMEM-resident.
    for w in weights:
        in_specs.append(pl.BlockSpec(w.shape, lambda i: (0, 0)))
    in_specs.append(pl.BlockSpec(bias_pack.shape, lambda i: (0, 0)))

    out = pl.pallas_call(
        disc_kernel,
        out_shape=jax.ShapeDtypeStruct((B, 128), jnp.float32),
        grid=(B // tile_b,),
        in_specs=in_specs,
        out_specs=pl.BlockSpec((tile_b, 128), lambda i: (i, 0)),
        compiler_params=pltpu.CompilerParams(dimension_semantics=("parallel",)),
    )(ray, aux, *weights, bias_pack)
    return out[:, :1]  # un-pad the lane-dense output head


# -----------------------------------------------------------------------------
# Host-side glue: parameter init + conv->matmul expansion + pool folding.
# -----------------------------------------------------------------------------
def conv1d_toeplitz(w, L):
    """Expand Conv1d weight (C_out, C_in, K), 'same' padding, stride 1 into a
    dense matrix (C_in*L, C_out*L) acting on channel-major flat vectors
    (feature index = c*L + l)."""
    co, ci, k = w.shape
    p = k // 2
    big = np.zeros((ci, L, co, L), np.float32)
    w = np.asarray(w, np.float32)
    for l_out in range(L):
        for t in range(k):
            m = l_out + t - p
            if 0 <= m < L:
                big[:, m, :, l_out] += w[:, :, t].T
    return big.reshape(ci * L, co * L)


def merge_even_odd_cols(T, co, L):
    """Fold MaxPool1d(2,2) into the preceding conv: split the Toeplitz output
    columns into even / odd sequence positions (channel-major at length L//2)
    and concatenate them horizontally -> one [even | odd] matrix."""
    rows = T.shape[0]
    T3 = T.reshape(rows, co, L)
    Te = np.ascontiguousarray(T3[:, :, 0::2]).reshape(rows, co * (L // 2))
    To = np.ascontiguousarray(T3[:, :, 1::2]).reshape(rows, co * (L // 2))
    return np.concatenate([Te, To], axis=1)


def init_params(key, num_points):
    N = num_points
    f32, bf16 = jnp.float32, jnp.bfloat16
    conv_specs = [(1, 8, 7), (8, 8, 3), (8, 16, 7), (16, 16, 3), (16, 8, 7), (8, 1, 3)]
    conv_L = [N, N, N // 2, N // 2, N // 4, N // 4]
    keys = jax.random.split(key, 2 * len(conv_specs) + 8)

    conv_w, conv_b = [], []
    ki = 0
    for (ci, co, k) in conv_specs:
        scale = 1.0 / math.sqrt(ci * k)
        w = jax.random.normal(keys[ki], (co, ci, k), f32) * scale; ki += 1
        b = jax.random.normal(keys[ki], (co,), f32) * scale; ki += 1
        w = w.astype(bf16).astype(f32)   # quantize: kernel (bf16) & reference share values
        conv_w.append(w); conv_b.append(b)

    # MLP: Linear(N//4 + 3 + 3 + 12, 256) -> 128 -> 64 -> 1
    in_dim = N // 4 + 3 + 3 + 12
    dims = [(in_dim, 256), (256, 128), (128, 64), (64, 1)]
    mlp_w, mlp_b = [], []
    for (di, do) in dims:
        scale = 1.0 / math.sqrt(di)
        w = jax.random.normal(keys[ki], (do, di), f32) * scale; ki += 1
        b = jax.random.normal(keys[ki], (do,), f32) * scale; ki += 1
        w = w.astype(bf16).astype(f32)
        mlp_w.append(w); mlp_b.append(b)

    raw = {"conv_w": conv_w, "conv_b": conv_b, "mlp_w": mlp_w, "mlp_b": mlp_b}

    # ---- kernel weight matrices (bf16) --------------------------------------
    T = [conv1d_toeplitz(np.asarray(w), L) for w, L in zip(conv_w, conv_L)]
    cw1 = T[0]
    cw2m = merge_even_odd_cols(T[1], 8, N)         # conv2 + pool1 folded, [even|odd]
    cw3 = T[2]
    cw4m = merge_even_odd_cols(T[3], 16, N // 2)   # conv4 + pool2 folded, [even|odd]
    cw5 = T[4]
    cw6 = T[5]

    # First Linear split along the torch.cat order
    # [conv_out (N//4), position (12), start_point (3), end_point (3)]:
    # conv block + one merged (18, 256) block for the host-concatenated aux.
    w1t = np.asarray(mlp_w[0]).T            # (in_dim, 256)
    w1c = w1t[:N // 4]                      # (N//4, 256)
    w1a = w1t[N // 4:]                      # (18, 256)
    w2 = np.asarray(mlp_w[1]).T             # (256, 128)
    w3 = np.asarray(mlp_w[2]).T             # (128, 64)
    w4 = np.zeros((64, 128), np.float32)    # lane-dense padded output head
    w4[:, 0] = np.asarray(mlp_w[3]).T[:, 0]

    weights = [jnp.asarray(a, bf16) for a in
               (cw1, cw2m, cw3, cw4m, cw5, cw6, w1c, w1a, w2, w3, w4)]

    # ---- packed bias table (f32), one row per layer, zero-padded lanes ------
    rows = [
        np.repeat(np.asarray(conv_b[0]), N),            # conv1
        np.repeat(np.asarray(conv_b[1]), N // 2),       # conv2 (pool-folded; even/odd share bias)
        np.repeat(np.asarray(conv_b[2]), N // 2),       # conv3
        np.repeat(np.asarray(conv_b[3]), N // 4),       # conv4 (pool-folded)
        np.repeat(np.asarray(conv_b[4]), N // 4),       # conv5
        np.repeat(np.asarray(conv_b[5]), N // 4),       # conv6
        np.asarray(mlp_b[0]),                           # fc1
        np.asarray(mlp_b[1]),                           # fc2
        np.asarray(mlp_b[2]),                           # fc3
        np.pad(np.asarray(mlp_b[3]), (0, 127)),         # fc4, padded to 128 lanes
    ]
    packw = max(max(r.shape[0] for r in rows), 128)
    bias_pack = np.zeros((len(rows), packw), np.float32)
    for i, r in enumerate(rows):
        bias_pack[i, :r.shape[0]] = r

    kparams = {"weights": weights, "bias_pack": jnp.asarray(bias_pack)}
    return raw, kparams


# -----------------------------------------------------------------------------
# Pure-JAX reference mirroring the PyTorch forward.  Matmul/conv inputs are
# cast to bf16 (f32 accumulation) to match the kernel's MXU precision choice,
# so the comparison validates the structural transforms tightly.
# -----------------------------------------------------------------------------
def reference_forward(raw, ray, pos, sp, ep):
    f32, bf16 = jnp.float32, jnp.bfloat16

    def conv(x, w, b):
        p = w.shape[-1] // 2
        y = lax.conv_general_dilated(
            x.astype(bf16), w.astype(bf16), (1,), [(p, p)],
            dimension_numbers=("NCH", "OIH", "NCH"),
            preferred_element_type=f32)
        return y + b[None, :, None]

    def lrelu(x):
        return jnp.where(x >= 0, x, 0.2 * x)

    def pool(x):
        B, C, L = x.shape
        return jnp.max(x.reshape(B, C, L // 2, 2), axis=-1)

    def linear(x, w, b):
        return jnp.dot(x.astype(bf16), w.T.astype(bf16),
                       preferred_element_type=f32) + b

    cw, cb = raw["conv_w"], raw["conv_b"]
    x = ray[:, None, :]
    x = lrelu(conv(x, cw[0], cb[0]))
    x = pool(lrelu(conv(x, cw[1], cb[1])))
    x = lrelu(conv(x, cw[2], cb[2]))
    x = pool(lrelu(conv(x, cw[3], cb[3])))
    x = lrelu(conv(x, cw[4], cb[4]))
    x = conv(x, cw[5], cb[5])
    conv_out = x[:, 0, :]                                   # .squeeze() (B > 1)

    h = jnp.concatenate([conv_out, pos, sp, ep], axis=1)    # torch.cat(..., dim=1)
    mw, mb = raw["mlp_w"], raw["mlp_b"]
    h = jnp.maximum(linear(h, mw[0], mb[0]), 0.0)
    h = jnp.maximum(linear(h, mw[1], mb[1]), 0.0)
    h = jnp.maximum(linear(h, mw[2], mb[2]), 0.0)
    return linear(h, mw[3], mb[3])


if __name__ == "__main__":
    NUM_POINTS = 32      # conv stack reduces it to NUM_POINTS // 4
    B = 256              # batch, tiled over the grid
    TILE_B = 128         # batch tile per grid step (multiple of 128)

    key = jax.random.PRNGKey(0)
    kp, ki = jax.random.split(key)
    raw, kparams = init_params(kp, NUM_POINTS)

    k1, k2, k3, k4 = jax.random.split(ki, 4)
    ray = jax.random.normal(k1, (B, NUM_POINTS), jnp.float32)
    position = jax.random.normal(k2, (B, 12), jnp.float32)   # pose (flattened 3x4)
    start_point = jax.random.normal(k3, (B, 3), jnp.float32)
    end_point = jax.random.normal(k4, (B, 3), jnp.float32)

    # host-side merge of the three small MLP side-inputs into one (B, 18) array
    aux = jnp.concatenate([position, start_point, end_point], axis=1)

    out = discriminator_pallas(ray, aux, kparams, tile_b=TILE_B)
    out = jax.block_until_ready(out)

    ref = jax.block_until_ready(
        reference_forward(raw, ray, position, start_point, end_point))
    assert out.shape == (B, 1), out.shape
    np.testing.assert_allclose(np.asarray(out), np.asarray(ref), rtol=1e-2, atol=1e-2)

    print("KERNEL_OK")
</pallas_src>

<mosaic_0001>
module attributes {stable_mosaic.version = 11 : i64} {
  func.func @disc_kernel(%arg0: i32, %arg1: memref<128x32xf32, #tpu.memory_space<vmem>>, %arg2: memref<128x18xf32, #tpu.memory_space<vmem>>, %arg3: memref<32x256xbf16, #tpu.memory_space<vmem>>, %arg4: memref<256x256xbf16, #tpu.memory_space<vmem>>, %arg5: memref<128x256xbf16, #tpu.memory_space<vmem>>, %arg6: memref<256x256xbf16, #tpu.memory_space<vmem>>, %arg7: memref<128x64xbf16, #tpu.memory_space<vmem>>, %arg8: memref<64x8xbf16, #tpu.memory_space<vmem>>, %arg9: memref<8x256xbf16, #tpu.memory_space<vmem>>, %arg10: memref<18x256xbf16, #tpu.memory_space<vmem>>, %arg11: memref<256x128xbf16, #tpu.memory_space<vmem>>, %arg12: memref<128x64xbf16, #tpu.memory_space<vmem>>, %arg13: memref<64x128xbf16, #tpu.memory_space<vmem>>, %arg14: memref<10x256xf32, #tpu.memory_space<vmem>>, %arg15: memref<128x128xf32, #tpu.memory_space<vmem>>) attributes {dimension_semantics = [#tpu.dimension_semantics<parallel>], iteration_bounds = array<i64: 2>, scalar_prefetch = 0 : i64, scratch_operands = 0 : i64, tpu.core_type = #tpu.core_type<tc>, window_params = [{transform_indices = @transform_0, window_bounds = array<i64: 128, 32>}, {transform_indices = @transform_1, window_bounds = array<i64: 128, 18>}, {pipeline_mode = #tpu.pipeline_mode<synchronous>, transform_indices = @transform_2, window_bounds = array<i64: 32, 256>}, {pipeline_mode = #tpu.pipeline_mode<synchronous>, transform_indices = @transform_3, window_bounds = array<i64: 256, 256>}, {pipeline_mode = #tpu.pipeline_mode<synchronous>, transform_indices = @transform_4, window_bounds = array<i64: 128, 256>}, {pipeline_mode = #tpu.pipeline_mode<synchronous>, transform_indices = @transform_5, window_bounds = array<i64: 256, 256>}, {pipeline_mode = #tpu.pipeline_mode<synchronous>, transform_indices = @transform_6, window_bounds = array<i64: 128, 64>}, {pipeline_mode = #tpu.pipeline_mode<synchronous>, transform_indices = @transform_7, window_bounds = array<i64: 64, 8>}, {pipeline_mode = #tpu.pipeline_mode<synchronous>, transform_indices = @transform_8, window_bounds = array<i64: 8, 256>}, {pipeline_mode = #tpu.pipeline_mode<synchronous>, transform_indices = @transform_9, window_bounds = array<i64: 18, 256>}, {pipeline_mode = #tpu.pipeline_mode<synchronous>, transform_indices = @transform_10, window_bounds = array<i64: 256, 128>}, {pipeline_mode = #tpu.pipeline_mode<synchronous>, transform_indices = @transform_11, window_bounds = array<i64: 128, 64>}, {pipeline_mode = #tpu.pipeline_mode<synchronous>, transform_indices = @transform_12, window_bounds = array<i64: 64, 128>}, {pipeline_mode = #tpu.pipeline_mode<synchronous>, transform_indices = @transform_13, window_bounds = array<i64: 10, 256>}, {transform_indices = @transform_14, window_bounds = array<i64: 128, 128>}]} {
    %c0 = arith.constant 0 : index
    %c0_0 = arith.constant 0 : index
    %0 = vector.load %arg1[%c0, %c0_0] : memref<128x32xf32, #tpu.memory_space<vmem>>, vector<128x32xf32>
    %1 = arith.truncf %0 : vector<128x32xf32> to vector<128x32xbf16>
    %c0_1 = arith.constant 0 : index
    %c0_2 = arith.constant 0 : index
    %2 = vector.load %arg3[%c0_1, %c0_2] : memref<32x256xbf16, #tpu.memory_space<vmem>>, vector<32x256xbf16>
    %cst = arith.constant dense<0.000000e+00> : vector<128x256xf32>
    %3 = tpu.matmul %1, %2, %cst {dimension_numbers = #tpu.dot_dimension_numbers<[1], [0], [0], [1], [0, 0, 1, 1], [], []>} : vector<128x32xbf16>, vector<32x256xbf16>, vector<128x256xf32> -> vector<128x256xf32>
    %c0_3 = arith.constant 0 : index
    %c0_4 = arith.constant 0 : index
    %4 = vector.load %arg14[%c0_3, %c0_4] : memref<10x256xf32, #tpu.memory_space<vmem>>, vector<1x256xf32>
    %5 = vector.broadcast %4 : vector<1x256xf32> to vector<128x256xf32>
    %6 = arith.addf %3, %5 : vector<128x256xf32>
    %cst_5 = arith.constant 2.000000e-01 : f32
    %7 = vector.broadcast %cst_5 : f32 to vector<128x256xf32>
    %8 = arith.mulf %7, %6 : vector<128x256xf32>
    %9 = arith.maximumf %6, %8 : vector<128x256xf32>
    %10 = arith.truncf %9 : vector<128x256xf32> to vector<128x256xbf16>
    %c0_6 = arith.constant 0 : index
    %c0_7 = arith.constant 0 : index
    %11 = vector.load %arg4[%c0_6, %c0_7] : memref<256x256xbf16, #tpu.memory_space<vmem>>, vector<256x256xbf16>
    %cst_8 = arith.constant dense<0.000000e+00> : vector<128x256xf32>
    %12 = tpu.matmul %10, %11, %cst_8 {dimension_numbers = #tpu.dot_dimension_numbers<[1], [0], [0], [1], [0, 0, 1, 1], [], []>} : vector<128x256xbf16>, vector<256x256xbf16>, vector<128x256xf32> -> vector<128x256xf32>
    %13 = vector.extract_strided_slice %12 {offsets = [0, 0], sizes = [128, 128], strides = [1, 1]} : vector<128x256xf32> to vector<128x128xf32>
    %14 = vector.extract_strided_slice %12 {offsets = [0, 128], sizes = [128, 128], strides = [1, 1]} : vector<128x256xf32> to vector<128x128xf32>
    %15 = arith.maximumf %13, %14 : vector<128x128xf32>
    %c1 = arith.constant 1 : index
    %c0_9 = arith.constant 0 : index
    %16 = vector.load %arg14[%c1, %c0_9] : memref<10x256xf32, #tpu.memory_space<vmem>>, vector<1x128xf32>
    %17 = vector.broadcast %16 : vector<1x128xf32> to vector<128x128xf32>
    %18 = arith.addf %15, %17 : vector<128x128xf32>
    %cst_10 = arith.constant 2.000000e-01 : f32
    %19 = vector.broadcast %cst_10 : f32 to vector<128x128xf32>
    %20 = arith.mulf %19, %18 : vector<128x128xf32>
    %21 = arith.maximumf %18, %20 : vector<128x128xf32>
    %22 = arith.truncf %21 : vector<128x128xf32> to vector<128x128xbf16>
    %c0_11 = arith.constant 0 : index
    %c0_12 = arith.constant 0 : index
    %23 = vector.load %arg5[%c0_11, %c0_12] : memref<128x256xbf16, #tpu.memory_space<vmem>>, vector<128x256xbf16>
    %cst_13 = arith.constant dense<0.000000e+00> : vector<128x256xf32>
    %24 = tpu.matmul %22, %23, %cst_13 {dimension_numbers = #tpu.dot_dimension_numbers<[1], [0], [0], [1], [0, 0, 1, 1], [], []>} : vector<128x128xbf16>, vector<128x256xbf16>, vector<128x256xf32> -> vector<128x256xf32>
    %c2 = arith.constant 2 : index
    %c0_14 = arith.constant 0 : index
    %25 = vector.load %arg14[%c2, %c0_14] : memref<10x256xf32, #tpu.memory_space<vmem>>, vector<1x256xf32>
    %26 = vector.broadcast %25 : vector<1x256xf32> to vector<128x256xf32>
    %27 = arith.addf %24, %26 : vector<128x256xf32>
    %cst_15 = arith.constant 2.000000e-01 : f32
    %28 = vector.broadcast %cst_15 : f32 to vector<128x256xf32>
    %29 = arith.mulf %28, %27 : vector<128x256xf32>
    %30 = arith.maximumf %27, %29 : vector<128x256xf32>
    %31 = arith.truncf %30 : vector<128x256xf32> to vector<128x256xbf16>
    %c0_16 = arith.constant 0 : index
    %c0_17 = arith.constant 0 : index
    %32 = vector.load %arg6[%c0_16, %c0_17] : memref<256x256xbf16, #tpu.memory_space<vmem>>, vector<256x256xbf16>
    %cst_18 = arith.constant dense<0.000000e+00> : vector<128x256xf32>
    %33 = tpu.matmul %31, %32, %cst_18 {dimension_numbers = #tpu.dot_dimension_numbers<[1], [0], [0], [1], [0, 0, 1, 1], [], []>} : vector<128x256xbf16>, vector<256x256xbf16>, vector<128x256xf32> -> vector<128x256xf32>
    %34 = vector.extract_strided_slice %33 {offsets = [0, 0], sizes = [128, 128], strides = [1, 1]} : vector<128x256xf32> to vector<128x128xf32>
    %35 = vector.extract_strided_slice %33 {offsets = [0, 128], sizes = [128, 128], strides = [1, 1]} : vector<128x256xf32> to vector<128x128xf32>
    %36 = arith.maximumf %34, %35 : vector<128x128xf32>
    %c3 = arith.constant 3 : index
    %c0_19 = arith.constant 0 : index
    %37 = vector.load %arg14[%c3, %c0_19] : memref<10x256xf32, #tpu.memory_space<vmem>>, vector<1x128xf32>
    %38 = vector.broadcast %37 : vector<1x128xf32> to vector<128x128xf32>
    %39 = arith.addf %36, %38 : vector<128x128xf32>
    %cst_20 = arith.constant 2.000000e-01 : f32
    %40 = vector.broadcast %cst_20 : f32 to vector<128x128xf32>
    %41 = arith.mulf %40, %39 : vector<128x128xf32>
    %42 = arith.maximumf %39, %41 : vector<128x128xf32>
    %43 = arith.truncf %42 : vector<128x128xf32> to vector<128x128xbf16>
    %c0_21 = arith.constant 0 : index
    %c0_22 = arith.constant 0 : index
    %44 = vector.load %arg7[%c0_21, %c0_22] : memref<128x64xbf16, #tpu.memory_space<vmem>>, vector<128x64xbf16>
    %cst_23 = arith.constant dense<0.000000e+00> : vector<128x64xf32>
    %45 = tpu.matmul %43, %44, %cst_23 {dimension_numbers = #tpu.dot_dimension_numbers<[1], [0], [0], [1], [0, 0, 1, 1], [], []>} : vector<128x128xbf16>, vector<128x64xbf16>, vector<128x64xf32> -> vector<128x64xf32>
    %c4 = arith.constant 4 : index
    %c0_24 = arith.constant 0 : index
    %46 = vector.load %arg14[%c4, %c0_24] : memref<10x256xf32, #tpu.memory_space<vmem>>, vector<1x64xf32>
    %47 = vector.broadcast %46 : vector<1x64xf32> to vector<128x64xf32>
    %48 = arith.addf %45, %47 : vector<128x64xf32>
    %cst_25 = arith.constant 2.000000e-01 : f32
    %49 = vector.broadcast %cst_25 : f32 to vector<128x64xf32>
    %50 = arith.mulf %49, %48 : vector<128x64xf32>
    %51 = arith.maximumf %48, %50 : vector<128x64xf32>
    %52 = arith.truncf %51 : vector<128x64xf32> to vector<128x64xbf16>
    %c0_26 = arith.constant 0 : index
    %c0_27 = arith.constant 0 : index
    %53 = vector.load %arg8[%c0_26, %c0_27] : memref<64x8xbf16, #tpu.memory_space<vmem>>, vector<64x8xbf16>
    %cst_28 = arith.constant dense<0.000000e+00> : vector<128x8xf32>
    %54 = tpu.matmul %52, %53, %cst_28 {dimension_numbers = #tpu.dot_dimension_numbers<[1], [0], [0], [1], [0, 0, 1, 1], [], []>} : vector<128x64xbf16>, vector<64x8xbf16>, vector<128x8xf32> -> vector<128x8xf32>
    %c5 = arith.constant 5 : index
    %c0_29 = arith.constant 0 : index
    %55 = vector.load %arg14[%c5, %c0_29] : memref<10x256xf32, #tpu.memory_space<vmem>>, vector<1x8xf32>
    %56 = vector.broadcast %55 : vector<1x8xf32> to vector<128x8xf32>
    %57 = arith.addf %54, %56 : vector<128x8xf32>
    %58 = arith.truncf %57 : vector<128x8xf32> to vector<128x8xbf16>
    %c0_30 = arith.constant 0 : index
    %c0_31 = arith.constant 0 : index
    %59 = vector.load %arg9[%c0_30, %c0_31] : memref<8x256xbf16, #tpu.memory_space<vmem>>, vector<8x256xbf16>
    %cst_32 = arith.constant dense<0.000000e+00> : vector<128x256xf32>
    %60 = tpu.matmul %58, %59, %cst_32 {dimension_numbers = #tpu.dot_dimension_numbers<[1], [0], [0], [1], [0, 0, 1, 1], [], []>} : vector<128x8xbf16>, vector<8x256xbf16>, vector<128x256xf32> -> vector<128x256xf32>
    %c0_33 = arith.constant 0 : index
    %c0_34 = arith.constant 0 : index
    %61 = vector.load %arg2[%c0_33, %c0_34] : memref<128x18xf32, #tpu.memory_space<vmem>>, vector<128x18xf32>
    %62 = arith.truncf %61 : vector<128x18xf32> to vector<128x18xbf16>
    %c0_35 = arith.constant 0 : index
    %c0_36 = arith.constant 0 : index
    %63 = vector.load %arg10[%c0_35, %c0_36] : memref<18x256xbf16, #tpu.memory_space<vmem>>, vector<18x256xbf16>
    %cst_37 = arith.constant dense<0.000000e+00> : vector<128x256xf32>
    %64 = tpu.matmul %62, %63, %cst_37 {dimension_numbers = #tpu.dot_dimension_numbers<[1], [0], [0], [1], [0, 0, 1, 1], [], []>} : vector<128x18xbf16>, vector<18x256xbf16>, vector<128x256xf32> -> vector<128x256xf32>
    %65 = arith.addf %60, %64 : vector<128x256xf32>
    %c6 = arith.constant 6 : index
    %c0_38 = arith.constant 0 : index
    %66 = vector.load %arg14[%c6, %c0_38] : memref<10x256xf32, #tpu.memory_space<vmem>>, vector<1x256xf32>
    %67 = vector.broadcast %66 : vector<1x256xf32> to vector<128x256xf32>
    %68 = arith.addf %65, %67 : vector<128x256xf32>
    %cst_39 = arith.constant 0.000000e+00 : f32
    %69 = vector.broadcast %cst_39 : f32 to vector<128x256xf32>
    %70 = arith.maximumf %68, %69 : vector<128x256xf32>
    %71 = arith.truncf %70 : vector<128x256xf32> to vector<128x256xbf16>
    %c0_40 = arith.constant 0 : index
    %c0_41 = arith.constant 0 : index
    %72 = vector.load %arg11[%c0_40, %c0_41] : memref<256x128xbf16, #tpu.memory_space<vmem>>, vector<256x128xbf16>
    %cst_42 = arith.constant dense<0.000000e+00> : vector<128x128xf32>
    %73 = tpu.matmul %71, %72, %cst_42 {dimension_numbers = #tpu.dot_dimension_numbers<[1], [0], [0], [1], [0, 0, 1, 1], [], []>} : vector<128x256xbf16>, vector<256x128xbf16>, vector<128x128xf32> -> vector<128x128xf32>
    %c7 = arith.constant 7 : index
    %c0_43 = arith.constant 0 : index
    %74 = vector.load %arg14[%c7, %c0_43] : memref<10x256xf32, #tpu.memory_space<vmem>>, vector<1x128xf32>
    %75 = vector.broadcast %74 : vector<1x128xf32> to vector<128x128xf32>
    %76 = arith.addf %73, %75 : vector<128x128xf32>
    %cst_44 = arith.constant 0.000000e+00 : f32
    %77 = vector.broadcast %cst_44 : f32 to vector<128x128xf32>
    %78 = arith.maximumf %76, %77 : vector<128x128xf32>
    %79 = arith.truncf %78 : vector<128x128xf32> to vector<128x128xbf16>
    %c0_45 = arith.constant 0 : index
    %c0_46 = arith.constant 0 : index
    %80 = vector.load %arg12[%c0_45, %c0_46] : memref<128x64xbf16, #tpu.memory_space<vmem>>, vector<128x64xbf16>
    %cst_47 = arith.constant dense<0.000000e+00> : vector<128x64xf32>
    %81 = tpu.matmul %79, %80, %cst_47 {dimension_numbers = #tpu.dot_dimension_numbers<[1], [0], [0], [1], [0, 0, 1, 1], [], []>} : vector<128x128xbf16>, vector<128x64xbf16>, vector<128x64xf32> -> vector<128x64xf32>
    %c8 = arith.constant 8 : index
    %c0_48 = arith.constant 0 : index
    %82 = vector.load %arg14[%c8, %c0_48] : memref<10x256xf32, #tpu.memory_space<vmem>>, vector<1x64xf32>
    %83 = vector.broadcast %82 : vector<1x64xf32> to vector<128x64xf32>
    %84 = arith.addf %81, %83 : vector<128x64xf32>
    %cst_49 = arith.constant 0.000000e+00 : f32
    %85 = vector.broadcast %cst_49 : f32 to vector<128x64xf32>
    %86 = arith.maximumf %84, %85 : vector<128x64xf32>
    %87 = arith.truncf %86 : vector<128x64xf32> to vector<128x64xbf16>
    %c0_50 = arith.constant 0 : index
    %c0_51 = arith.constant 0 : index
    %88 = vector.load %arg13[%c0_50, %c0_51] : memref<64x128xbf16, #tpu.memory_space<vmem>>, vector<64x128xbf16>
    %cst_52 = arith.constant dense<0.000000e+00> : vector<128x128xf32>
    %89 = tpu.matmul %87, %88, %cst_52 {dimension_numbers = #tpu.dot_dimension_numbers<[1], [0], [0], [1], [0, 0, 1, 1], [], []>} : vector<128x64xbf16>, vector<64x128xbf16>, vector<128x128xf32> -> vector<128x128xf32>
    %c9 = arith.constant 9 : index
    %c0_53 = arith.constant 0 : index
    %90 = vector.load %arg14[%c9, %c0_53] : memref<10x256xf32, #tpu.memory_space<vmem>>, vector<1x128xf32>
    %91 = vector.broadcast %90 : vector<1x128xf32> to vector<128x128xf32>
    %92 = arith.addf %89, %91 : vector<128x128xf32>
    %c0_54 = arith.constant 0 : index
    %c0_55 = arith.constant 0 : index
    %93 = vector.load %arg15[%c0_54, %c0_55] : memref<128x128xf32, #tpu.memory_space<vmem>>, vector<128x128xf32>
    tpu.vector_store %arg15[%c0_54, %c0_55], %92 {strides = array<i32>} : memref<128x128xf32, #tpu.memory_space<vmem>>, vector<128x128xf32>,
    return
  }
  func.func @transform_0(%arg0: i32) -> (i32, i32) {
    %c0_i32 = arith.constant 0 : i32
    %c0_i32_0 = arith.constant 0 : i32
    return %arg0, %c0_i32 : i32, i32
  }
  func.func @transform_1(%arg0: i32) -> (i32, i32) {
    %c0_i32 = arith.constant 0 : i32
    %c0_i32_0 = arith.constant 0 : i32
    return %arg0, %c0_i32 : i32, i32
  }
  func.func @transform_2(%arg0: i32) -> (i32, i32) {
    %c0_i32 = arith.constant 0 : i32
    %c0_i32_0 = arith.constant 0 : i32
    %c0_i32_1 = arith.constant 0 : i32
    return %c0_i32, %c0_i32_0 : i32, i32
  }
  func.func @transform_3(%arg0: i32) -> (i32, i32) {
    %c0_i32 = arith.constant 0 : i32
    %c0_i32_0 = arith.constant 0 : i32
    %c0_i32_1 = arith.constant 0 : i32
    return %c0_i32, %c0_i32_0 : i32, i32
  }
  func.func @transform_4(%arg0: i32) -> (i32, i32) {
    %c0_i32 = arith.constant 0 : i32
    %c0_i32_0 = arith.constant 0 : i32
    %c0_i32_1 = arith.constant 0 : i32
    return %c0_i32, %c0_i32_0 : i32, i32
  }
  func.func @transform_5(%arg0: i32) -> (i32, i32) {
    %c0_i32 = arith.constant 0 : i32
    %c0_i32_0 = arith.constant 0 : i32
    %c0_i32_1 = arith.constant 0 : i32
    return %c0_i32, %c0_i32_0 : i32, i32
  }
  func.func @transform_6(%arg0: i32) -> (i32, i32) {
    %c0_i32 = arith.constant 0 : i32
    %c0_i32_0 = arith.constant 0 : i32
    %c0_i32_1 = arith.constant 0 : i32
    return %c0_i32, %c0_i32_0 : i32, i32
  }
  func.func @transform_7(%arg0: i32) -> (i32, i32) {
    %c0_i32 = arith.constant 0 : i32
    %c0_i32_0 = arith.constant 0 : i32
    %c0_i32_1 = arith.constant 0 : i32
    return %c0_i32, %c0_i32_0 : i32, i32
  }
  func.func @transform_8(%arg0: i32) -> (i32, i32) {
    %c0_i32 = arith.constant 0 : i32
    %c0_i32_0 = arith.constant 0 : i32
    %c0_i32_1 = arith.constant 0 : i32
    return %c0_i32, %c0_i32_0 : i32, i32
  }
  func.func @transform_9(%arg0: i32) -> (i32, i32) {
    %c0_i32 = arith.constant 0 : i32
    %c0_i32_0 = arith.constant 0 : i32
    %c0_i32_1 = arith.constant 0 : i32
    return %c0_i32, %c0_i32_0 : i32, i32
  }
  func.func @transform_10(%arg0: i32) -> (i32, i32) {
    %c0_i32 = arith.constant 0 : i32
    %c0_i32_0 = arith.constant 0 : i32
    %c0_i32_1 = arith.constant 0 : i32
    return %c0_i32, %c0_i32_0 : i32, i32
  }
  func.func @transform_11(%arg0: i32) -> (i32, i32) {
    %c0_i32 = arith.constant 0 : i32
    %c0_i32_0 = arith.constant 0 : i32
    %c0_i32_1 = arith.constant 0 : i32
    return %c0_i32, %c0_i32_0 : i32, i32
  }
  func.func @transform_12(%arg0: i32) -> (i32, i32) {
    %c0_i32 = arith.constant 0 : i32
    %c0_i32_0 = arith.constant 0 : i32
    %c0_i32_1 = arith.constant 0 : i32
    return %c0_i32, %c0_i32_0 : i32, i32
  }
  func.func @transform_13(%arg0: i32) -> (i32, i32) {
    %c0_i32 = arith.constant 0 : i32
    %c0_i32_0 = arith.constant 0 : i32
    %c0_i32_1 = arith.constant 0 : i32
    return %c0_i32, %c0_i32_0 : i32, i32
  }
  func.func @transform_14(%arg0: i32) -> (i32, i32) {
    %c0_i32 = arith.constant 0 : i32
    %c0_i32_0 = arith.constant 0 : i32
    return %arg0, %c0_i32 : i32, i32
  }
}

</mosaic_0001>

<llo_original>
// kernel: tpu_custom_call.1
$region0: #{tpu_custom_call.1}
  #allocation0 [shape = 'u32[]', space=smem, size = 0x4, offset = 0x4, fixed_abs, tag = 'smem constant byte address 0x4 - core index']
  #allocation1 [shape = 'u32[72,128]{1,0:T(1,128)}', space=vmem, size = 0x9000, scoped, tag = 'internal scratch']
  %s0 = inlined_call_operand.vmem [shape: f32[256,32], index: 0, kind: input, shape index: {}]
  %s1 = inlined_call_operand.vmem [shape: f32[256,18], index: 1, kind: input, shape index: {}]
  %s2 = inlined_call_operand.vmem [shape: bf16[32,256], index: 2, kind: input, shape index: {}]
  %s3 = inlined_call_operand.vmem [shape: bf16[256,256], index: 3, kind: input, shape index: {}]
  %s4 = inlined_call_operand.hbm [shape: bf16[128,256], index: 4, kind: input, shape index: {}]
  %s5 = inlined_call_operand.vmem [shape: bf16[256,256], index: 5, kind: input, shape index: {}]
  %s6 = inlined_call_operand.vmem [shape: bf16[128,64], index: 6, kind: input, shape index: {}]
  %s7 = inlined_call_operand.vmem [shape: bf16[64,8], index: 7, kind: input, shape index: {}]
  %s8 = inlined_call_operand.vmem [shape: bf16[8,256], index: 8, kind: input, shape index: {}]
  %s9 = inlined_call_operand.vmem [shape: bf16[18,256], index: 9, kind: input, shape index: {}]
  %s10 = inlined_call_operand.hbm [shape: bf16[256,128], index: 10, kind: input, shape index: {}]
  %s11 = inlined_call_operand.vmem [shape: bf16[128,64], index: 11, kind: input, shape index: {}]
  %s12 = inlined_call_operand.vmem [shape: bf16[64,128], index: 12, kind: input, shape index: {}]
  %s13 = inlined_call_operand.vmem [shape: f32[10,256], index: 13, kind: input, shape index: {}]
  %s14 = inlined_call_operand.hbm [shape: f32[256,128], index: 14, kind: output, shape index: {}]
  %s15 = sld [smem:[#allocation0]]
  $region97: #{tpu_custom_call.1} parent=0
    _
  %s17 = ssub.s32 1, %s15
  %s18 = scalar_select 0, %s17, %s15
  $region1: #{tpu_custom_call.1} parent=0
    #allocation2 [shape = 'u8[65536]{0}', space=vmem, size = 0x10000, scoped, tag = 'input window, operand 4, single buffered']
    #allocation3 [shape = 's32[2]{0}', space=sflag, size = 0x8, scoped, tag = 'scoped memory for tpu_custom_call.1']
    #allocation4 [shape = 's32[2]{0}', space=sflag, size = 0x8, scoped, tag = 'scoped memory for tpu_custom_call.1']
    #allocation5 [shape = 'u8[65536]{0}', space=vmem, size = 0x10000, scoped, tag = 'input window, operand 10, single buffered']
    #allocation6 [shape = 's32[1]{0}', space=sflag, size = 0x4, scoped, tag = 'scoped memory for tpu_custom_call.1']
    #allocation7 [shape = 'u8[131072]{0}', space=vmem, size = 0x20000, scoped, tag = 'output window, operand 0']
    %19 = vsyncpa [#allocation3], 0
    %20 = vsyncpa [#allocation6], 0
    %21 = vsyncpa [#allocation4], 0
    %s22 = scalar_lea.sflag [#allocation4], 1
    %23 = vsyncpa %s22, 0
    loop: start=0, step=1, limit=4
    $region2: #{tpu_custom_call.1} parent=1 // loop_pre_header
      _
    $region3: #{tpu_custom_call.1} parent=1 // loop_header
      %s25 = sphi 0, %s29
      %p26 = scmp.ge.s32.totalorder %s25, 4
      %s35 = sphi 0, %s37
      %s38 = sphi 0, %s35
      %s39 = sphi 0, %s38
      %s55 = sphi 0, %s39
      %s61 = sphi 0, %s63
      %s64 = sphi 0, %s61
      %s65 = sphi 0, %s64
      %s81 = sphi 0, %s65
      %s85 = sphi 0, %s85
      %s87 = sphi 0, %s85
      %s88 = sphi 0, %s87
      %s102 = sphi 0, %s88
      %s106 = sphi 0, %s106
      %s108 = sphi 0, %s106
      %s109 = sphi 0, %s108
      %s123 = sphi 0, %s109
      %s127 = sphi 0, %s127
      %s129 = sphi 0, %s127
      %s130 = sphi 0, %s129
      %s144 = sphi 0, %s130
      %s148 = sphi 0, %s148
      %s150 = sphi 0, %s148
      %s151 = sphi 0, %s150
      %s165 = sphi 0, %s151
      %s169 = sphi 0, %s169
      %s171 = sphi 0, %s169
      %s172 = sphi 0, %s171
      %s186 = sphi 0, %s172
      %s190 = sphi 0, %s190
      %s192 = sphi 0, %s190
      %s193 = sphi 0, %s192
      %s207 = sphi 0, %s193
      %s211 = sphi 0, %s211
      %s213 = sphi 0, %s211
      %s214 = sphi 0, %s213
      %s228 = sphi 0, %s214
      %s232 = sphi 0, %s232
      %s234 = sphi 0, %s232
      %s235 = sphi 0, %s234
      %s249 = sphi 0, %s235
      %s253 = sphi 0, %s253
      %s255 = sphi 0, %s253
      %s256 = sphi 0, %s255
      %s270 = sphi 0, %s256
      %s274 = sphi 0, %s274
      %s276 = sphi 0, %s274
      %s277 = sphi 0, %s276
      %s291 = sphi 0, %s277
      %s295 = sphi 0, %s295
      %s297 = sphi 0, %s295
      %s298 = sphi 0, %s297
      %s312 = sphi 0, %s298
      %s316 = sphi 0, %s316
      %s318 = sphi 0, %s316
      %s319 = sphi 0, %s318
      %s333 = sphi 0, %s319
      %s339 = sphi 0, %s341
      %s342 = sphi 0, %s339
      %s343 = sphi 0, %s342
      %s359 = sphi 0, %s343
    $region4: #{tpu_custom_call.1} parent=1 // loop_header_branch
      %28 = sbr.rel (%p26) target = $region8
    $region5: #{tpu_custom_call.1} parent=1 // loop_body
      %s30 = ssub.s32 %s25, 1
      %s31 = ssub.s32 %s25, 2
      %s32 = sadd.s32 %s25, 1
      %s33 = ssub.s32 %s25, %s32
      %p34 = scmp.eq.s32.totalorder %s33, 0
      %s36 = sadd.s32 %s35, 1
      %s37 = scalar_select %p34, %s35, %s36
      %p40 = pneg %p34
      %p41 = scmp.eq.s32.totalorder %s25, 1
      %p42 = por %p40, %p41
      %p43 = scmp.ne.s32.totalorder %s35, %s38
      %p44 = scmp.eq.s32.totalorder %s25, 0
      %p45 = por %p43, %p44
      %p46 = scmp.ne.s32.totalorder %s35, %s38
      %p47 = scmp.eq.s32.totalorder %s30, 1
      %p48 = por %p46, %p47
      %p49 = scmp.ne.s32.totalorder %s38, %s39
      %p50 = scmp.eq.s32.totalorder %s30, 0
      %p51 = por %p49, %p50
      %p52 = scmp.ne.s32.totalorder %s38, %s39
      %p53 = scmp.eq.s32.totalorder %s31, 1
      %p54 = por %p52, %p53
      %p56 = scmp.ne.s32.totalorder %s39, %s55
      %p57 = scmp.eq.s32.totalorder %s31, 0
      %p58 = por %p56, %p57
      %s59 = ssub.s32 %s25, %s32
      %p60 = scmp.eq.s32.totalorder %s59, 0
      %s62 = sadd.s32 %s61, 1
      %s63 = scalar_select %p60, %s61, %s62
      %p66 = pneg %p60
      %p67 = scmp.eq.s32.totalorder %s25, 1
      %p68 = por %p66, %p67
      %p69 = scmp.ne.s32.totalorder %s61, %s64
      %p70 = scmp.eq.s32.totalorder %s25, 0
      %p71 = por %p69, %p70
      %p72 = scmp.ne.s32.totalorder %s61, %s64
      %p73 = scmp.eq.s32.totalorder %s30, 1
      %p74 = por %p72, %p73
      %p75 = scmp.ne.s32.totalorder %s64, %s65
      %p76 = scmp.eq.s32.totalorder %s30, 0
      %p77 = por %p75, %p76
      %p78 = scmp.ne.s32.totalorder %s64, %s65
      %p79 = scmp.eq.s32.totalorder %s31, 1
      %p80 = por %p78, %p79
      %p82 = scmp.ne.s32.totalorder %s65, %s81
      %p83 = scmp.eq.s32.totalorder %s31, 0
      %p84 = por %p82, %p83
      %s86 = sadd.s32 %s85, 1
      %p89 = scmp.eq.s32.totalorder %s25, 1
      %p90 = scmp.ne.s32.totalorder %s85, %s87
      %p91 = scmp.eq.s32.totalorder %s25, 0
      %p92 = por %p90, %p91
      %p93 = scmp.ne.s32.totalorder %s85, %s87
      %p94 = scmp.eq.s32.totalorder %s30, 1
      %p95 = por %p93, %p94
      %p96 = scmp.ne.s32.totalorder %s87, %s88
      %p97 = scmp.eq.s32.totalorder %s30, 0
      %p98 = por %p96, %p97
      %p99 = scmp.ne.s32.totalorder %s87, %s88
      %p100 = scmp.eq.s32.totalorder %s31, 1
      %p101 = por %p99, %p100
      %p103 = scmp.ne.s32.totalorder %s88, %s102
      %p104 = scmp.eq.s32.totalorder %s31, 0
      %p105 = por %p103, %p104
      %s107 = sadd.s32 %s106, 1
      %p110 = scmp.eq.s32.totalorder %s25, 1
      %p111 = scmp.ne.s32.totalorder %s106, %s108
      %p112 = scmp.eq.s32.totalorder %s25, 0
      %p113 = por %p111, %p112
      %p114 = scmp.ne.s32.totalorder %s106, %s108
      %p115 = scmp.eq.s32.totalorder %s30, 1
      %p116 = por %p114, %p115
      %p117 = scmp.ne.s32.totalorder %s108, %s109
      %p118 = scmp.eq.s32.totalorder %s30, 0
      %p119 = por %p117, %p118
      %p120 = scmp.ne.s32.totalorder %s108, %s109
      %p121 = scmp.eq.s32.totalorder %s31, 1
      %p122 = por %p120, %p121
      %p124 = scmp.ne.s32.totalorder %s109, %s123
      %p125 = scmp.eq.s32.totalorder %s31, 0
      %p126 = por %p124, %p125
      %s128 = sadd.s32 %s127, 1
      %p131 = scmp.eq.s32.totalorder %s25, 1
      %p132 = scmp.ne.s32.totalorder %s127, %s129
      %p133 = scmp.eq.s32.totalorder %s25, 0
      %p134 = por %p132, %p133
      %p135 = scmp.ne.s32.totalorder %s127, %s129
      %p136 = scmp.eq.s32.totalorder %s30, 1
      %p137 = por %p135, %p136
      %p138 = scmp.ne.s32.totalorder %s129, %s130
      %p139 = scmp.eq.s32.totalorder %s30, 0
      %p140 = por %p138, %p139
      %p141 = scmp.ne.s32.totalorder %s129, %s130
      %p142 = scmp.eq.s32.totalorder %s31, 1
      %p143 = por %p141, %p142
      %p145 = scmp.ne.s32.totalorder %s130, %s144
      %p146 = scmp.eq.s32.totalorder %s31, 0
      %p147 = por %p145, %p146
      %s149 = sadd.s32 %s148, 1
      %p152 = scmp.eq.s32.totalorder %s25, 1
      %p153 = scmp.ne.s32.totalorder %s148, %s150
      %p154 = scmp.eq.s32.totalorder %s25, 0
      %p155 = por %p153, %p154
      %p156 = scmp.ne.s32.totalorder %s148, %s150
      %p157 = scmp.eq.s32.totalorder %s30, 1
      %p158 = por %p156, %p157
      %p159 = scmp.ne.s32.totalorder %s150, %s151
      %p160 = scmp.eq.s32.totalorder %s30, 0
      %p161 = por %p159, %p160
      %p162 = scmp.ne.s32.totalorder %s150, %s151
      %p163 = scmp.eq.s32.totalorder %s31, 1
      %p164 = por %p162, %p163
      %p166 = scmp.ne.s32.totalorder %s151, %s165
      %p167 = scmp.eq.s32.totalorder %s31, 0
      %p168 = por %p166, %p167
      %s170 = sadd.s32 %s169, 1
      %p173 = scmp.eq.s32.totalorder %s25, 1
      %p174 = scmp.ne.s32.totalorder %s169, %s171
      %p175 = scmp.eq.s32.totalorder %s25, 0
      %p176 = por %p174, %p175
      %p177 = scmp.ne.s32.totalorder %s169, %s171
      %p178 = scmp.eq.s32.totalorder %s30, 1
      %p179 = por %p177, %p178
      %p180 = scmp.ne.s32.totalorder %s171, %s172
      %p181 = scmp.eq.s32.totalorder %s30, 0
      %p182 = por %p180, %p181
      %p183 = scmp.ne.s32.totalorder %s171, %s172
      %p184 = scmp.eq.s32.totalorder %s31, 1
      %p185 = por %p183, %p184
      %p187 = scmp.ne.s32.totalorder %s172, %s186
      %p188 = scmp.eq.s32.totalorder %s31, 0
      %p189 = por %p187, %p188
      %s191 = sadd.s32 %s190, 1
      %p194 = scmp.eq.s32.totalorder %s25, 1
      %p195 = scmp.ne.s32.totalorder %s190, %s192
      %p196 = scmp.eq.s32.totalorder %s25, 0
      %p197 = por %p195, %p196
      %p198 = scmp.ne.s32.totalorder %s190, %s192
      %p199 = scmp.eq.s32.totalorder %s30, 1
      %p200 = por %p198, %p199
      %p201 = scmp.ne.s32.totalorder %s192, %s193
      %p202 = scmp.eq.s32.totalorder %s30, 0
      %p203 = por %p201, %p202
      %p204 = scmp.ne.s32.totalorder %s192, %s193
      %p205 = scmp.eq.s32.totalorder %s31, 1
      %p206 = por %p204, %p205
      %p208 = scmp.ne.s32.totalorder %s193, %s207
      %p209 = scmp.eq.s32.totalorder %s31, 0
      %p210 = por %p208, %p209
      %s212 = sadd.s32 %s211, 1
      %p215 = scmp.eq.s32.totalorder %s25, 1
      %p216 = scmp.ne.s32.totalorder %s211, %s213
      %p217 = scmp.eq.s32.totalorder %s25, 0
      %p218 = por %p216, %p217
      %p219 = scmp.ne.s32.totalorder %s211, %s213
      %p220 = scmp.eq.s32.totalorder %s30, 1
      %p221 = por %p219, %p220
      %p222 = scmp.ne.s32.totalorder %s213, %s214
      %p223 = scmp.eq.s32.totalorder %s30, 0
      %p224 = por %p222, %p223
      %p225 = scmp.ne.s32.totalorder %s213, %s214
      %p226 = scmp.eq.s32.totalorder %s31, 1
      %p227 = por %p225, %p226
      %p229 = scmp.ne.s32.totalorder %s214, %s228
      %p230 = scmp.eq.s32.totalorder %s31, 0
      %p231 = por %p229, %p230
      %s233 = sadd.s32 %s232, 1
      %p236 = scmp.eq.s32.totalorder %s25, 1
      %p237 = scmp.ne.s32.totalorder %s232, %s234
      %p238 = scmp.eq.s32.totalorder %s25, 0
      %p239 = por %p237, %p238
      %p240 = scmp.ne.s32.totalorder %s232, %s234
      %p241 = scmp.eq.s32.totalorder %s30, 1
      %p242 = por %p240, %p241
      %p243 = scmp.ne.s32.totalorder %s234, %s235
      %p244 = scmp.eq.s32.totalorder %s30, 0
      %p245 = por %p243, %p244
      %p246 = scmp.ne.s32.totalorder %s234, %s235
      %p247 = scmp.eq.s32.totalorder %s31, 1
      %p248 = por %p246, %p247
      %p250 = scmp.ne.s32.totalorder %s235, %s249
      %p251 = scmp.eq.s32.totalorder %s31, 0
      %p252 = por %p250, %p251
      %s254 = sadd.s32 %s253, 1
      %p257 = scmp.eq.s32.totalorder %s25, 1
      %p258 = scmp.ne.s32.totalorder %s253, %s255
      %p259 = scmp.eq.s32.totalorder %s25, 0
      %p260 = por %p258, %p259
      %p261 = scmp.ne.s32.totalorder %s253, %s255
      %p262 = scmp.eq.s32.totalorder %s30, 1
      %p263 = por %p261, %p262
      %p264 = scmp.ne.s32.totalorder %s255, %s256
      %p265 = scmp.eq.s32.totalorder %s30, 0
      %p266 = por %p264, %p265
      %p267 = scmp.ne.s32.totalorder %s255, %s256
      %p268 = scmp.eq.s32.totalorder %s31, 1
      %p269 = por %p267, %p268
      %p271 = scmp.ne.s32.totalorder %s256, %s270
      %p272 = scmp.eq.s32.totalorder %s31, 0
      %p273 = por %p271, %p272
      %s275 = sadd.s32 %s274, 1
      %p278 = scmp.eq.s32.totalorder %s25, 1
      %p279 = scmp.ne.s32.totalorder %s274, %s276
      %p280 = scmp.eq.s32.totalorder %s25, 0
      %p281 = por %p279, %p280
      %p282 = scmp.ne.s32.totalorder %s274, %s276
      %p283 = scmp.eq.s32.totalorder %s30, 1
      %p284 = por %p282, %p283
      %p285 = scmp.ne.s32.totalorder %s276, %s277
      %p286 = scmp.eq.s32.totalorder %s30, 0
      %p287 = por %p285, %p286
      %p288 = scmp.ne.s32.totalorder %s276, %s277
      %p289 = scmp.eq.s32.totalorder %s31, 1
      %p290 = por %p288, %p289
      %p292 = scmp.ne.s32.totalorder %s277, %s291
      %p293 = scmp.eq.s32.totalorder %s31, 0
      %p294 = por %p292, %p293
      %s296 = sadd.s32 %s295, 1
      %p299 = scmp.eq.s32.totalorder %s25, 1
      %p300 = scmp.ne.s32.totalorder %s295, %s297
      %p301 = scmp.eq.s32.totalorder %s25, 0
      %p302 = por %p300, %p301
      %p303 = scmp.ne.s32.totalorder %s295, %s297
      %p304 = scmp.eq.s32.totalorder %s30, 1
      %p305 = por %p303, %p304
      %p306 = scmp.ne.s32.totalorder %s297, %s298
      %p307 = scmp.eq.s32.totalorder %s30, 0
      %p308 = por %p306, %p307
      %p309 = scmp.ne.s32.totalorder %s297, %s298
      %p310 = scmp.eq.s32.totalorder %s31, 1
      %p311 = por %p309, %p310
      %p313 = scmp.ne.s32.totalorder %s298, %s312
      %p314 = scmp.eq.s32.totalorder %s31, 0
      %p315 = por %p313, %p314
      %s317 = sadd.s32 %s316, 1
      %p320 = scmp.eq.s32.totalorder %s25, 1
      %p321 = scmp.ne.s32.totalorder %s316, %s318
      %p322 = scmp.eq.s32.totalorder %s25, 0
      %p323 = por %p321, %p322
      %p324 = scmp.ne.s32.totalorder %s316, %s318
      %p325 = scmp.eq.s32.totalorder %s30, 1
      %p326 = por %p324, %p325
      %p327 = scmp.ne.s32.totalorder %s318, %s319
      %p328 = scmp.eq.s32.totalorder %s30, 0
      %p329 = por %p327, %p328
      %p330 = scmp.ne.s32.totalorder %s318, %s319
      %p331 = scmp.eq.s32.totalorder %s31, 1
      %p332 = por %p330, %p331
      %p334 = scmp.ne.s32.totalorder %s319, %s333
      %p335 = scmp.eq.s32.totalorder %s31, 0
      %p336 = por %p334, %p335
      %s337 = ssub.s32 %s25, %s32
      %p338 = scmp.eq.s32.totalorder %s337, 0
      %s340 = sadd.s32 %s339, 1
      %s341 = scalar_select %p338, %s339, %s340
      %p344 = pneg %p338
      %p345 = scmp.eq.s32.totalorder %s25, 1
      %p346 = por %p344, %p345
      %p347 = scmp.ne.s32.totalorder %s339, %s342
      %p348 = scmp.eq.s32.totalorder %s25, 0
      %p349 = por %p347, %p348
      %p350 = scmp.ne.s32.totalorder %s339, %s342
      %p351 = scmp.eq.s32.totalorder %s30, 1
      %p352 = por %p350, %p351
      %p353 = scmp.ne.s32.totalorder %s342, %s343
      %p354 = scmp.eq.s32.totalorder %s30, 0
      %p355 = por %p353, %p354
      %p356 = scmp.ne.s32.totalorder %s342, %s343
      %p357 = scmp.eq.s32.totalorder %s31, 1
      %p358 = por %p356, %p357
      %p360 = scmp.ne.s32.totalorder %s343, %s359
      %p361 = scmp.eq.s32.totalorder %s31, 0
      %p362 = por %p360, %p361
      %p363 = scmp.le.s32.totalorder 1, %s25
      %p364 = scmp.lt.s32.totalorder %s25, 3
      %p365 = pnand %p363, %p364
      %p366 = pneg %p365
      // Predicated region
      $region9: #{tpu_custom_call.1} parent=5 // pred_check
        _
      $region10: #{tpu_custom_call.1} parent=5 // pred_check_branch
        %368 = sbr.rel (%p365) target = $region12
      $region11: #{tpu_custom_call.1} parent=5 // pred_region
        %s369 = ssub.s32 %s25, 1
        // Predicated region
        $region13: #{tpu_custom_call.1} parent=11 // pred_check
          %p370 = pneg %p98
        $region14: #{tpu_custom_call.1} parent=11 // pred_check_branch
          %372 = sbr.rel (%p370) target = $region16
        $region15: #{tpu_custom_call.1} parent=11 // pred_region
          _
        $region16: #{tpu_custom_call.1} parent=11 // pred_fallthru
          _
        // Predicated region
        $region17: #{tpu_custom_call.1} parent=11 // pred_check
          %p373 = pneg %p119
        $region18: #{tpu_custom_call.1} parent=11 // pred_check_branch
          %375 = sbr.rel (%p373) target = $region20
        $region19: #{tpu_custom_call.1} parent=11 // pred_region
          _
        $region20: #{tpu_custom_call.1} parent=11 // pred_fallthru
          _
        // Predicated region
        $region21: #{tpu_custom_call.1} parent=11 // pred_check
          %p376 = pneg %p140
        $region22: #{tpu_custom_call.1} parent=11 // pred_check_branch
          %378 = sbr.rel (%p376) target = $region24
        $region23: #{tpu_custom_call.1} parent=11 // pred_region
          %380 = vsyncadd [#allocation3], 0
          %s381 = sshll.u32 %s4, 4
          %s382 = int_to_ptr.hbm [resolvable:$true] %s381
          %s383 = sshll.u32 [#allocation2], 4
          %s384 = int_to_ptr.vmem [resolvable:$true] %s383
          %389 = dma.hbm_to_vmem [thread:$0]  %s382, 2048, %s384, [#allocation3], 128, 128, 8
        $region24: #{tpu_custom_call.1} parent=11 // pred_fallthru
          _
        // Predicated region
        $region25: #{tpu_custom_call.1} parent=11 // pred_check
          %p390 = pneg %p161
        $region26: #{tpu_custom_call.1} parent=11 // pred_check_branch
          %392 = sbr.rel (%p390) target = $region28
        $region27: #{tpu_custom_call.1} parent=11 // pred_region
          _
        $region28: #{tpu_custom_call.1} parent=11 // pred_fallthru
          _
        // Predicated region
        $region29: #{tpu_custom_call.1} parent=11 // pred_check
          %p393 = pneg %p182
        $region30: #{tpu_custom_call.1} parent=11 // pred_check_branch
          %395 = sbr.rel (%p393) target = $region32
        $region31: #{tpu_custom_call.1} parent=11 // pred_region
          _
        $region32: #{tpu_custom_call.1} parent=11 // pred_fallthru
          _
        // Predicated region
        $region33: #{tpu_custom_call.1} parent=11 // pred_check
          %p396 = pneg %p203
        $region34: #{tpu_custom_call.1} parent=11 // pred_check_branch
          %398 = sbr.rel (%p396) target = $region36
        $region35: #{tpu_custom_call.1} parent=11 // pred_region
          _
        $region36: #{tpu_custom_call.1} parent=11 // pred_fallthru
          _
        // Predicated region
        $region37: #{tpu_custom_call.1} parent=11 // pred_check
          %p399 = pneg %p224
        $region38: #{tpu_custom_call.1} parent=11 // pred_check_branch
          %401 = sbr.rel (%p399) target = $region40
        $region39: #{tpu_custom_call.1} parent=11 // pred_region
          _
        $region40: #{tpu_custom_call.1} parent=11 // pred_fallthru
          _
        // Predicated region
        $region41: #{tpu_custom_call.1} parent=11 // pred_check
          %p402 = pneg %p245
        $region42: #{tpu_custom_call.1} parent=11 // pred_check_branch
          %404 = sbr.rel (%p402) target = $region44
        $region43: #{tpu_custom_call.1} parent=11 // pred_region
          _
        $region44: #{tpu_custom_call.1} parent=11 // pred_fallthru
          _
        // Predicated region
        $region45: #{tpu_custom_call.1} parent=11 // pred_check
          %p405 = pneg %p266
        $region46: #{tpu_custom_call.1} parent=11 // pred_check_branch
          %407 = sbr.rel (%p405) target = $region48
        $region47: #{tpu_custom_call.1} parent=11 // pred_region
          %409 = vsyncadd [#allocation6], 0
          %s410 = sshll.u32 %s10, 4
          %s411 = int_to_ptr.hbm [resolvable:$true] %s410
          %s412 = sshll.u32 [#allocation5], 4
          %s413 = int_to_ptr.vmem [resolvable:$true] %s412
          %418 = dma.hbm_to_vmem [thread:$0]  %s411, 2048, %s413, [#allocation6], 64, 64, 4
        $region48: #{tpu_custom_call.1} parent=11 // pred_fallthru
          _
        // Predicated region
        $region49: #{tpu_custom_call.1} parent=11 // pred_check
          %p419 = pneg %p287
        $region50: #{tpu_custom_call.1} parent=11 // pred_check_branch
          %421 = sbr.rel (%p419) target = $region52
        $region51: #{tpu_custom_call.1} parent=11 // pred_region
          _
        $region52: #{tpu_custom_call.1} parent=11 // pred_fallthru
          _
        // Predicated region
        $region53: #{tpu_custom_call.1} parent=11 // pred_check
          %p422 = pneg %p308
        $region54: #{tpu_custom_call.1} parent=11 // pred_check_branch
          %424 = sbr.rel (%p422) target = $region56
        $region55: #{tpu_custom_call.1} parent=11 // pred_region
          _
        $region56: #{tpu_custom_call.1} parent=11 // pred_fallthru
          _
        // Predicated region
        $region57: #{tpu_custom_call.1} parent=11 // pred_check
          %p425 = pneg %p329
        $region58: #{tpu_custom_call.1} parent=11 // pred_check_branch
          %427 = sbr.rel (%p425) target = $region60
        $region59: #{tpu_custom_call.1} parent=11 // pred_region
          _
        $region60: #{tpu_custom_call.1} parent=11 // pred_fallthru
          _
      $region12: #{tpu_custom_call.1} parent=5 // pred_fallthru
        _
      %p428 = scmp.lt.s32.totalorder %s25, 2
      // Predicated region
      $region61: #{tpu_custom_call.1} parent=5 // pred_check
        %p429 = pneg %p428
      $region62: #{tpu_custom_call.1} parent=5 // pred_check_branch
        %431 = sbr.rel (%p429) target = $region64
      $region63: #{tpu_custom_call.1} parent=5 // pred_region
        // Predicated region
        $region65: #{tpu_custom_call.1} parent=63 // pred_check
          %p432 = pneg %p45
        $region66: #{tpu_custom_call.1} parent=63 // pred_check_branch
          %434 = sbr.rel (%p432) target = $region68
        $region67: #{tpu_custom_call.1} parent=63 // pred_region
          %s435 = smul.u32 16, %s25
          %p436 = scmp.lt.s32.totalorder %s435, 31
          %s437 = scalar_select %p436, %s435, 31
          %s438 = smul.addr %s437, 8
          %s439 = scalar_lea.vmem %s0, %s438
          %s440 = smul.u32 16, %s25
        $region68: #{tpu_custom_call.1} parent=63 // pred_fallthru
          _
        // Predicated region
        $region69: #{tpu_custom_call.1} parent=63 // pred_check
          %p441 = pneg %p71
        $region70: #{tpu_custom_call.1} parent=63 // pred_check_branch
          %443 = sbr.rel (%p441) target = $region72
        $region71: #{tpu_custom_call.1} parent=63 // pred_region
          %s444 = smul.u32 16, %s25
          %p445 = scmp.lt.s32.totalorder %s444, 31
          %s446 = scalar_select %p445, %s444, 31
          %s447 = smul.addr %s446, 8
          %s448 = scalar_lea.vmem %s1, %s447
          %s449 = smul.u32 16, %s25
        $region72: #{tpu_custom_call.1} parent=63 // pred_fallthru
          _
      $region64: #{tpu_custom_call.1} parent=5 // pred_fallthru
        _
      %p450 = scmp.le.s32.totalorder 1, %s25
      %p451 = scmp.lt.s32.totalorder %s25, 3
      %p452 = pnand %p450, %p451
      %p453 = pneg %p452
      // Predicated region
      $region73: #{tpu_custom_call.1} parent=5 // pred_check
        _
      $region74: #{tpu_custom_call.1} parent=5 // pred_check_branch
        %455 = sbr.rel (%p452) target = $region76
      $region75: #{tpu_custom_call.1} parent=5 // pred_region
        %s456 = ssub.s32 %s25, 1
        // Predicated region
        $region77: #{tpu_custom_call.1} parent=75 // pred_check
          %p457 = pneg %p140
        $region78: #{tpu_custom_call.1} parent=75 // pred_check_branch
          %459 = sbr.rel (%p457) target = $region80
        $region79: #{tpu_custom_call.1} parent=75 // pred_region
          %461 = dma.done [#allocation3], 2048
        $region80: #{tpu_custom_call.1} parent=75 // pred_fallthru
          _
        // Predicated region
        $region81: #{tpu_custom_call.1} parent=75 // pred_check
          %p462 = pneg %p266
        $region82: #{tpu_custom_call.1} parent=75 // pred_check_branch
          %464 = sbr.rel (%p462) target = $region84
        $region83: #{tpu_custom_call.1} parent=75 // pred_region
          %466 = dma.done [#allocation6], 2048
        $region84: #{tpu_custom_call.1} parent=75 // pred_fallthru
          _
        %s467 = smul.u32 16, %s30
        %p468 = scmp.lt.s32.totalorder %s467, 31
        %s469 = scalar_select %p468, %s467, 31
        %s470 = smul.addr %s469, 8
        %s471 = scalar_lea.vmem %s0, %s470
        %p472 = pneg %p51
        %p473 = pneg %p48
        %s474 = smul.u32 16, %s30
        %p475 = scmp.lt.s32.totalorder %s474, 31
        %s476 = scalar_select %p475, %s474, 31
        %s477 = smul.addr %s476, 8
        %s478 = scalar_lea.vmem %s1, %s477
        %p479 = pneg %p77
        %p480 = pneg %p74
        %p481 = pneg %p98
        %p482 = pneg %p95
        %p483 = pneg %p119
        %p484 = pneg %p116
        %p485 = pneg %p140
        %p486 = pneg %p137
        %p487 = pneg %p161
        %p488 = pneg %p158
        %p489 = pneg %p182
        %p490 = pneg %p179
        %p491 = pneg %p203
        %p492 = pneg %p200
        %p493 = pneg %p224
        %p494 = pneg %p221
        %p495 = pneg %p245
        %p496 = pneg %p242
        %p497 = pneg %p266
        %p498 = pneg %p263
        %p499 = pneg %p287
        %p500 = pneg %p284
        %p501 = pneg %p308
        %p502 = pneg %p305
        %p503 = pneg %p329
        %p504 = pneg %p326
        %p505 = pneg %p355
        %p506 = pneg %p352
        %s507 = sand.u32 %s342, 1
        %s508 = scalar_lea.sflag [#allocation4], %s507
        %s509 = sand.u32 %s342, 1
        %s510 = smul.addr %s509, 128
        %s511 = scalar_lea.vmem [#allocation7], %s510
        %s512 = smul.u32 16, %s30
        %p513 = scmp.lt.s32.totalorder %s512, 31
        %s514 = scalar_select %p513, %s512, 31
        %s515 = smul.addr %s514, 8
        %s516 = scalar_lea.vmem %s0, %s515
        %s517 = smul.u32 16, %s30
        %s518 = smul.u32 16, %s30
        %p519 = scmp.lt.s32.totalorder %s518, 31
        %s520 = scalar_select %p519, %s518, 31
        %s521 = smul.addr %s520, 8
        %s522 = scalar_lea.vmem %s1, %s521
        %s523 = smul.u32 16, %s30
        %s524 = smul.u32 16, %s30
        %v526 = vld [vmem:[%s516] sm:$0xff]
        %v527 = vld [vmem:[%s516 + $0x8] sm:$0xff]
        %v528 = vld [vmem:[%s516 + $0x10] sm:$0xff]
        %v529 = vld [vmem:[%s516 + $0x18] sm:$0xff]
        %v530 = vld [vmem:[%s516 + $0x20] sm:$0xff]
        %v531 = vld [vmem:[%s516 + $0x28] sm:$0xff]
        %v532 = vld [vmem:[%s516 + $0x30] sm:$0xff]
        %v533 = vld [vmem:[%s516 + $0x38] sm:$0xff]
        %v534 = vld [vmem:[%s516 + $0x40] sm:$0xff]
        %v535 = vld [vmem:[%s516 + $0x48] sm:$0xff]
        %v536 = vld [vmem:[%s516 + $0x50] sm:$0xff]
        %v537 = vld [vmem:[%s516 + $0x58] sm:$0xff]
        %v538 = vld [vmem:[%s516 + $0x60] sm:$0xff]
        %v539 = vld [vmem:[%s516 + $0x68] sm:$0xff]
        %v540 = vld [vmem:[%s516 + $0x70] sm:$0xff]
        %v541 = vld [vmem:[%s516 + $0x78] sm:$0xff]
        %v542 = vpack.c.bf16 %v527, %v526
        %v543 = vpack.c.bf16 %v529, %v528
        %v544 = vpack.c.bf16 %v531, %v530
        %v545 = vpack.c.bf16 %v533, %v532
        %v546 = vpack.c.bf16 %v535, %v534
        %v547 = vpack.c.bf16 %v537, %v536
        %v548 = vpack.c.bf16 %v539, %v538
        %v549 = vpack.c.bf16 %v541, %v540
        %v550 = vld [vmem:[%s2] sm:$0xff]
        %v551 = vld [vmem:[%s2 + $0x8] sm:$0xff]
        %v552 = vld [vmem:[%s2 + $0x10] sm:$0xff]
        %v553 = vld [vmem:[%s2 + $0x18] sm:$0xff]
        %v554 = vld [vmem:[%s13] ss:$8 sm:$0x3]
        %v556 = vperm.slane %v554, 0
        %v557 = vperm.slane %v554, 1
        %v564 = vunpack.c.l.b16 %v550
        %v565 = vunpack.c.h.b16 %v550
        %v566 = vunpack.c.l.b16 %v551
        %v567 = vunpack.c.h.b16 %v551
        %v568 = vunpack.c.l.b16 %v552
        %v569 = vunpack.c.h.b16 %v552
        %v570 = vunpack.c.l.b16 %v553
        %v571 = vunpack.c.h.b16 %v553
        %v572 = vpack.c.b16 %v566, %v564
        %v573 = vpack.c.b16 %v567, %v565
        %v574 = vpack.c.b16 %v570, %v568
        %v575 = vpack.c.b16 %v571, %v569
        %vm580 = vcmask 261120
        %v582 = vsel %vm580, %v542, 0
        %v585 = vsel %vm580, %v543, 0
        %v588 = vsel %vm580, %v544, 0
        %v591 = vsel %vm580, %v545, 0
        %v594 = vsel %vm580, %v546, 0
        %v597 = vsel %vm580, %v547, 0
        %v600 = vsel %vm580, %v548, 0
        %v603 = vsel %vm580, %v549, 0
        %605 = vmatpush.bf16.msra.mxu0 0
        %606 = vmatpush.bf16.msra.mxu0 0
        %607 = vmatpush.bf16.msra.mxu0 0
        %608 = vmatpush.bf16.msra.mxu0 0
        %609 = vmatpush.bf16.msra.mxu0 0
        %610 = vmatpush.bf16.msra.mxu0 0
        %611 = vmatpush.bf16.msra.mxu0 %v574
        %612 = vmatpush.bf16.msra.mxu0 %v572
        %613 = vmatmul.bf16.gmra.mxu0 %v582
        %v614 = vpop.f32.mrf.mxu0
        %v615 = vadd.f32 %v556, %v614
        %v616 = vpop.f32.mrf.mxu0
        %v617 = vadd.f32 %v556, %v616
        %618 = vmatmul.bf16.gmra.mxu0 %v585
        %v619 = vpop.f32.mrf.mxu0
        %v620 = vadd.f32 %v556, %v619
        %v621 = vpop.f32.mrf.mxu0
        %v622 = vadd.f32 %v556, %v621
        %623 = vmatmul.bf16.gmra.mxu0 %v588
        %v624 = vpop.f32.mrf.mxu0
        %v625 = vadd.f32 %v556, %v624
        %v626 = vpop.f32.mrf.mxu0
        %v627 = vadd.f32 %v556, %v626
        %628 = vmatmul.bf16.gmra.mxu0 %v591
        %v629 = vpop.f32.mrf.mxu0
        %v630 = vadd.f32 %v556, %v629
        %v631 = vpop.f32.mrf.mxu0
        %v632 = vadd.f32 %v556, %v631
        %633 = vmatmul.bf16.gmra.mxu0 %v594
        %v634 = vpop.f32.mrf.mxu0
        %v635 = vadd.f32 %v556, %v634
        %v636 = vpop.f32.mrf.mxu0
        %v637 = vadd.f32 %v556, %v636
        %638 = vmatmul.bf16.gmra.mxu0 %v597
        %v639 = vpop.f32.mrf.mxu0
        %v640 = vadd.f32 %v556, %v639
        %v641 = vpop.f32.mrf.mxu0
        %v642 = vadd.f32 %v556, %v641
        %643 = vmatmul.bf16.gmra.mxu0 %v600
        %v644 = vpop.f32.mrf.mxu0
        %v645 = vadd.f32 %v556, %v644
        %v646 = vpop.f32.mrf.mxu0
        %v647 = vadd.f32 %v556, %v646
        %648 = vmatmul.bf16.gmra.mxu0 %v603
        %v649 = vpop.f32.mrf.mxu0
        %v650 = vadd.f32 %v556, %v649
        %v651 = vpop.f32.mrf.mxu0
        %v652 = vadd.f32 %v556, %v651
        %653 = vdwg.mxu0
        %654 = vmatpush.bf16.msra.mxu0 0
        %655 = vmatpush.bf16.msra.mxu0 0
        %656 = vmatpush.bf16.msra.mxu0 0
        %657 = vmatpush.bf16.msra.mxu0 0
        %658 = vmatpush.bf16.msra.mxu0 0
        %659 = vmatpush.bf16.msra.mxu0 0
        %660 = vmatpush.bf16.msra.mxu0 %v575
        %661 = vmatpush.bf16.msra.mxu0 %v573
        %662 = vmatmul.bf16.gmra.mxu0 %v582
        %v663 = vpop.f32.mrf.mxu0
        %v664 = vadd.f32 %v557, %v663
        %v665 = vpop.f32.mrf.mxu0
        %v666 = vadd.f32 %v557, %v665
        %667 = vmatmul.bf16.gmra.mxu0 %v585
        %v668 = vpop.f32.mrf.mxu0
        %v669 = vadd.f32 %v557, %v668
        %v670 = vpop.f32.mrf.mxu0
        %v671 = vadd.f32 %v557, %v670
        %672 = vmatmul.bf16.gmra.mxu0 %v588
        %v673 = vpop.f32.mrf.mxu0
        %v674 = vadd.f32 %v557, %v673
        %v675 = vpop.f32.mrf.mxu0
        %v676 = vadd.f32 %v557, %v675
        %677 = vmatmul.bf16.gmra.mxu0 %v591
        %v678 = vpop.f32.mrf.mxu0
        %v679 = vadd.f32 %v557, %v678
        %v680 = vpop.f32.mrf.mxu0
        %v681 = vadd.f32 %v557, %v680
        %682 = vmatmul.bf16.gmra.mxu0 %v594
        %v683 = vpop.f32.mrf.mxu0
        %v684 = vadd.f32 %v557, %v683
        %v685 = vpop.f32.mrf.mxu0
        %v686 = vadd.f32 %v557, %v685
        %687 = vmatmul.bf16.gmra.mxu0 %v597
        %v688 = vpop.f32.mrf.mxu0
        %v689 = vadd.f32 %v557, %v688
        %v690 = vpop.f32.mrf.mxu0
        %v691 = vadd.f32 %v557, %v690
        %692 = vmatmul.bf16.gmra.mxu0 %v600
        %v693 = vpop.f32.mrf.mxu0
        %v694 = vadd.f32 %v557, %v693
        %v695 = vpop.f32.mrf.mxu0
        %v696 = vadd.f32 %v557, %v695
        %697 = vmatmul.bf16.gmra.mxu0 %v603
        %v698 = vpop.f32.mrf.mxu0
        %v699 = vadd.f32 %v557, %v698
        %v700 = vpop.f32.mrf.mxu0
        %v701 = vadd.f32 %v557, %v700
        %702 = vdwg.mxu0
        %v703 = vmul.f32 %v615, 0.2
        %v704 = vmul.f32 %v664, 0.2
        %v705 = vmul.f32 %v617, 0.2
        %v706 = vmul.f32 %v666, 0.2
        %v707 = vmul.f32 %v620, 0.2
        %v708 = vmul.f32 %v669, 0.2
        %v709 = vmul.f32 %v622, 0.2
        %v710 = vmul.f32 %v671, 0.2
        %v711 = vmul.f32 %v625, 0.2
        %v712 = vmul.f32 %v674, 0.2
        %v713 = vmul.f32 %v627, 0.2
        %v714 = vmul.f32 %v676, 0.2
        %v715 = vmul.f32 %v630, 0.2
        %v716 = vmul.f32 %v679, 0.2
        %v717 = vmul.f32 %v632, 0.2
        %v718 = vmul.f32 %v681, 0.2
        %v719 = vmul.f32 %v635, 0.2
        %v720 = vmul.f32 %v684, 0.2
        %v721 = vmul.f32 %v637, 0.2
        %v722 = vmul.f32 %v686, 0.2
        %v723 = vmul.f32 %v640, 0.2
        %v724 = vmul.f32 %v689, 0.2
        %v725 = vmul.f32 %v642, 0.2
        %v726 = vmul.f32 %v691, 0.2
        %v727 = vmul.f32 %v645, 0.2
        %v728 = vmul.f32 %v694, 0.2
        %v729 = vmul.f32 %v647, 0.2
        %v730 = vmul.f32 %v696, 0.2
        %v731 = vmul.f32 %v650, 0.2
        %v732 = vmul.f32 %v699, 0.2
        %v733 = vmul.f32 %v652, 0.2
        %v734 = vmul.f32 %v701, 0.2
        %v735 = vmax.f32 %v615, %v703
        %v736 = vmax.f32 %v664, %v704
        %v737 = vmax.f32 %v617, %v705
        %v738 = vmax.f32 %v666, %v706
        %v739 = vmax.f32 %v620, %v707
        %v740 = vmax.f32 %v669, %v708
        %v741 = vmax.f32 %v622, %v709
        %v742 = vmax.f32 %v671, %v710
        %v743 = vmax.f32 %v625, %v711
        %v744 = vmax.f32 %v674, %v712
        %v745 = vmax.f32 %v627, %v713
        %v746 = vmax.f32 %v676, %v714
        %v747 = vmax.f32 %v630, %v715
        %v748 = vmax.f32 %v679, %v716
        %v749 = vmax.f32 %v632, %v717
        %v750 = vmax.f32 %v681, %v718
        %v751 = vmax.f32 %v635, %v719
        %v752 = vmax.f32 %v684, %v720
        %v753 = vmax.f32 %v637, %v721
        %v754 = vmax.f32 %v686, %v722
        %v755 = vmax.f32 %v640, %v723
        %v756 = vmax.f32 %v689, %v724
        %v757 = vmax.f32 %v642, %v725
        %v758 = vmax.f32 %v691, %v726
        %v759 = vmax.f32 %v645, %v727
        %v760 = vmax.f32 %v694, %v728
        %v761 = vmax.f32 %v647, %v729
        %v762 = vmax.f32 %v696, %v730
        %v763 = vmax.f32 %v650, %v731
        %v764 = vmax.f32 %v699, %v732
        %v765 = vmax.f32 %v652, %v733
        %v766 = vmax.f32 %v701, %v734
        %v767 = vpack.c.bf16 %v737, %v735
        %v768 = vpack.c.bf16 %v738, %v736
        %v769 = vpack.c.bf16 %v741, %v739
        %v770 = vpack.c.bf16 %v742, %v740
        %v771 = vpack.c.bf16 %v745, %v743
        %v772 = vpack.c.bf16 %v746, %v744
        %v773 = vpack.c.bf16 %v749, %v747
        %v774 = vpack.c.bf16 %v750, %v748
        %v775 = vpack.c.bf16 %v753, %v751
        %v776 = vpack.c.bf16 %v754, %v752
        %v777 = vpack.c.bf16 %v757, %v755
        %v778 = vpack.c.bf16 %v758, %v756
        %v779 = vpack.c.bf16 %v761, %v759
        %v780 = vpack.c.bf16 %v762, %v760
        %v781 = vpack.c.bf16 %v765, %v763
        %v782 = vpack.c.bf16 %v766, %v764
        %v783 = vld [vmem:[%s3] sm:$0xff]
        %v784 = vld [vmem:[%s3 + $0x8] sm:$0xff]
        %v785 = vld [vmem:[%s3 + $0x10] sm:$0xff]
        %v786 = vld [vmem:[%s3 + $0x18] sm:$0xff]
        %v787 = vld [vmem:[%s3 + $0x20] sm:$0xff]
        %v788 = vld [vmem:[%s3 + $0x28] sm:$0xff]
        %v789 = vld [vmem:[%s3 + $0x30] sm:$0xff]
        %v790 = vld [vmem:[%s3 + $0x38] sm:$0xff]
        %v791 = vld [vmem:[%s3 + $0x40] sm:$0xff]
        %v792 = vld [vmem:[%s3 + $0x48] sm:$0xff]
        %v793 = vld [vmem:[%s3 + $0x50] sm:$0xff]
        %v794 = vld [vmem:[%s3 + $0x58] sm:$0xff]
        %v795 = vld [vmem:[%s3 + $0x60] sm:$0xff]
        %v796 = vld [vmem:[%s3 + $0x68] sm:$0xff]
        %v797 = vld [vmem:[%s3 + $0x70] sm:$0xff]
        %v798 = vld [vmem:[%s3 + $0x78] sm:$0xff]
        %v799 = vld [vmem:[%s3 + $0x80] sm:$0xff]
        %v800 = vld [vmem:[%s3 + $0x88] sm:$0xff]
        %v801 = vld [vmem:[%s3 + $0x90] sm:$0xff]
        %v802 = vld [vmem:[%s3 + $0x98] sm:$0xff]
        %v803 = vld [vmem:[%s3 + $0xa0] sm:$0xff]
        %v804 = vld [vmem:[%s3 + $0xa8] sm:$0xff]
        %v805 = vld [vmem:[%s3 + $0xb0] sm:$0xff]
        %v806 = vld [vmem:[%s3 + $0xb8] sm:$0xff]
        %v807 = vld [vmem:[%s3 + $0xc0] sm:$0xff]
        %v808 = vld [vmem:[%s3 + $0xc8] sm:$0xff]
        %v809 = vld [vmem:[%s3 + $0xd0] sm:$0xff]
        %v810 = vld [vmem:[%s3 + $0xd8] sm:$0xff]
        %v811 = vld [vmem:[%s3 + $0xe0] sm:$0xff]
        %v812 = vld [vmem:[%s3 + $0xe8] sm:$0xff]
        %v813 = vld [vmem:[%s3 + $0xf0] sm:$0xff]
        %v814 = vld [vmem:[%s3 + $0xf8] sm:$0xff]
        %v847 = vunpack.c.l.b16 %v783
        %v848 = vunpack.c.h.b16 %v783
        %v849 = vunpack.c.l.b16 %v784
        %v850 = vunpack.c.h.b16 %v784
        %v851 = vunpack.c.l.b16 %v785
        %v852 = vunpack.c.h.b16 %v785
        %v853 = vunpack.c.l.b16 %v786
        %v854 = vunpack.c.h.b16 %v786
        %v855 = vunpack.c.l.b16 %v787
        %v856 = vunpack.c.h.b16 %v787
        %v857 = vunpack.c.l.b16 %v788
        %v858 = vunpack.c.h.b16 %v788
        %v859 = vunpack.c.l.b16 %v789
        %v860 = vunpack.c.h.b16 %v789
        %v861 = vunpack.c.l.b16 %v790
        %v862 = vunpack.c.h.b16 %v790
        %v863 = vunpack.c.l.b16 %v791
        %v864 = vunpack.c.h.b16 %v791
        %v865 = vunpack.c.l.b16 %v792
        %v866 = vunpack.c.h.b16 %v792
        %v867 = vunpack.c.l.b16 %v793
        %v868 = vunpack.c.h.b16 %v793
        %v869 = vunpack.c.l.b16 %v794
        %v870 = vunpack.c.h.b16 %v794
        %v871 = vunpack.c.l.b16 %v795
        %v872 = vunpack.c.h.b16 %v795
        %v873 = vunpack.c.l.b16 %v796
        %v874 = vunpack.c.h.b16 %v796
        %v875 = vunpack.c.l.b16 %v797
        %v876 = vunpack.c.h.b16 %v797
        %v877 = vunpack.c.l.b16 %v798
        %v878 = vunpack.c.h.b16 %v798
        %v879 = vunpack.c.l.b16 %v799
        %v880 = vunpack.c.h.b16 %v799
        %v881 = vunpack.c.l.b16 %v800
        %v882 = vunpack.c.h.b16 %v800
        %v883 = vunpack.c.l.b16 %v801
        %v884 = vunpack.c.h.b16 %v801
        %v885 = vunpack.c.l.b16 %v802
        %v886 = vunpack.c.h.b16 %v802
        %v887 = vunpack.c.l.b16 %v803
        %v888 = vunpack.c.h.b16 %v803
        %v889 = vunpack.c.l.b16 %v804
        %v890 = vunpack.c.h.b16 %v804
        %v891 = vunpack.c.l.b16 %v805
        %v892 = vunpack.c.h.b16 %v805
        %v893 = vunpack.c.l.b16 %v806
        %v894 = vunpack.c.h.b16 %v806
        %v895 = vunpack.c.l.b16 %v807
        %v896 = vunpack.c.h.b16 %v807
        %v897 = vunpack.c.l.b16 %v808
        %v898 = vunpack.c.h.b16 %v808
        %v899 = vunpack.c.l.b16 %v809
        %v900 = vunpack.c.h.b16 %v809
        %v901 = vunpack.c.l.b16 %v810
        %v902 = vunpack.c.h.b16 %v810
        %v903 = vunpack.c.l.b16 %v811
        %v904 = vunpack.c.h.b16 %v811
        %v905 = vunpack.c.l.b16 %v812
        %v906 = vunpack.c.h.b16 %v812
        %v907 = vunpack.c.l.b16 %v813
        %v908 = vunpack.c.h.b16 %v813
        %v909 = vunpack.c.l.b16 %v814
        %v910 = vunpack.c.h.b16 %v814
        %v911 = vpack.c.b16 %v849, %v847
        %v912 = vpack.c.b16 %v850, %v848
        %v913 = vpack.c.b16 %v853, %v851
        %v914 = vpack.c.b16 %v854, %v852
        %v915 = vpack.c.b16 %v857, %v855
        %v916 = vpack.c.b16 %v858, %v856
        %v917 = vpack.c.b16 %v861, %v859
        %v918 = vpack.c.b16 %v862, %v860
        %v919 = vpack.c.b16 %v865, %v863
        %v920 = vpack.c.b16 %v866, %v864
        %v921 = vpack.c.b16 %v869, %v867
        %v922 = vpack.c.b16 %v870, %v868
        %v923 = vpack.c.b16 %v873, %v871
        %v924 = vpack.c.b16 %v874, %v872
        %v925 = vpack.c.b16 %v877, %v875
        %v926 = vpack.c.b16 %v878, %v876
        %v927 = vpack.c.b16 %v881, %v879
        %v928 = vpack.c.b16 %v882, %v880
        %v929 = vpack.c.b16 %v885, %v883
        %v930 = vpack.c.b16 %v886, %v884
        %v931 = vpack.c.b16 %v889, %v887
        %v932 = vpack.c.b16 %v890, %v888
        %v933 = vpack.c.b16 %v893, %v891
        %v934 = vpack.c.b16 %v894, %v892
        %v935 = vpack.c.b16 %v897, %v895
        %v936 = vpack.c.b16 %v898, %v896
        %v937 = vpack.c.b16 %v901, %v899
        %v938 = vpack.c.b16 %v902, %v900
        %v939 = vpack.c.b16 %v905, %v903
        %v940 = vpack.c.b16 %v906, %v904
        %v941 = vpack.c.b16 %v909, %v907
        %v942 = vpack.c.b16 %v910, %v908
        %975 = vmatpush.bf16.msra.mxu0 %v925
        %976 = vmatpush.bf16.msra.mxu0 %v923
        %977 = vmatpush.bf16.msra.mxu0 %v921
        %978 = vmatpush.bf16.msra.mxu0 %v919
        %979 = vmatpush.bf16.msra.mxu0 %v917
        %980 = vmatpush.bf16.msra.mxu0 %v915
        %981 = vmatpush.bf16.msra.mxu0 %v913
        %982 = vmatpush.bf16.msra.mxu0 %v911
        %983 = vmatmul.bf16.gmra.mxu0 %v767
        %v984 = vpop.f32.mrf.mxu0
        %v985 = vadd.f32 0.0, %v984
        %v986 = vpop.f32.mrf.mxu0
        %v987 = vadd.f32 0.0, %v986
        %988 = vmatmul.bf16.gmra.mxu0 %v769
        %v989 = vpop.f32.mrf.mxu0
        %v990 = vadd.f32 0.0, %v989
        %v991 = vpop.f32.mrf.mxu0
        %v992 = vadd.f32 0.0, %v991
        %993 = vmatmul.bf16.gmra.mxu0 %v771
        %v994 = vpop.f32.mrf.mxu0
        %v995 = vadd.f32 0.0, %v994
        %v996 = vpop.f32.mrf.mxu0
        %v997 = vadd.f32 0.0, %v996
        %998 = vmatmul.bf16.gmra.mxu0 %v773
        %v999 = vpop.f32.mrf.mxu0
        %v1000 = vadd.f32 0.0, %v999
        %v1001 = vpop.f32.mrf.mxu0
        %v1002 = vadd.f32 0.0, %v1001
        %1003 = vmatmul.bf16.gmra.mxu0 %v775
        %v1004 = vpop.f32.mrf.mxu0
        %v1005 = vadd.f32 0.0, %v1004
        %v1006 = vpop.f32.mrf.mxu0
        %v1007 = vadd.f32 0.0, %v1006
        %1008 = vmatmul.bf16.gmra.mxu0 %v777
        %v1009 = vpop.f32.mrf.mxu0
        %v1010 = vadd.f32 0.0, %v1009
        %v1011 = vpop.f32.mrf.mxu0
        %v1012 = vadd.f32 0.0, %v1011
        %1013 = vmatmul.bf16.gmra.mxu0 %v779
        %v1014 = vpop.f32.mrf.mxu0
        %v1015 = vadd.f32 0.0, %v1014
        %v1016 = vpop.f32.mrf.mxu0
        %v1017 = vadd.f32 0.0, %v1016
        %1018 = vmatmul.bf16.gmra.mxu0 %v781
        %v1019 = vpop.f32.mrf.mxu0
        %v1020 = vadd.f32 0.0, %v1019
        %v1021 = vpop.f32.mrf.mxu0
        %v1022 = vadd.f32 0.0, %v1021
        %1023 = vdwg.mxu0
        %1024 = vmatpush.bf16.msra.mxu0 %v941
        %1025 = vmatpush.bf16.msra.mxu0 %v939
        %1026 = vmatpush.bf16.msra.mxu0 %v937
        %1027 = vmatpush.bf16.msra.mxu0 %v935
        %1028 = vmatpush.bf16.msra.mxu0 %v933
        %1029 = vmatpush.bf16.msra.mxu0 %v931
        %1030 = vmatpush.bf16.msra.mxu0 %v929
        %1031 = vmatpush.bf16.msra.mxu0 %v927
        %1032 = vmatmul.bf16.gmra.mxu0 %v768
        %v1033 = vpop.f32.mrf.mxu0
        %v1034 = vadd.f32 %v985, %v1033
        %v1035 = vpop.f32.mrf.mxu0
        %v1036 = vadd.f32 %v987, %v1035
        %1037 = vmatmul.bf16.gmra.mxu0 %v770
        %v1038 = vpop.f32.mrf.mxu0
        %v1039 = vadd.f32 %v990, %v1038
        %v1040 = vpop.f32.mrf.mxu0
        %v1041 = vadd.f32 %v992, %v1040
        %1042 = vmatmul.bf16.gmra.mxu0 %v772
        %v1043 = vpop.f32.mrf.mxu0
        %v1044 = vadd.f32 %v995, %v1043
        %v1045 = vpop.f32.mrf.mxu0
        %v1046 = vadd.f32 %v997, %v1045
        %1047 = vmatmul.bf16.gmra.mxu0 %v774
        %v1048 = vpop.f32.mrf.mxu0
        %v1049 = vadd.f32 %v1000, %v1048
        %v1050 = vpop.f32.mrf.mxu0
        %v1051 = vadd.f32 %v1002, %v1050
        %1052 = vmatmul.bf16.gmra.mxu0 %v776
        %v1053 = vpop.f32.mrf.mxu0
        %v1054 = vadd.f32 %v1005, %v1053
        %v1055 = vpop.f32.mrf.mxu0
        %v1056 = vadd.f32 %v1007, %v1055
        %1057 = vmatmul.bf16.gmra.mxu0 %v778
        %v1058 = vpop.f32.mrf.mxu0
        %v1059 = vadd.f32 %v1010, %v1058
        %v1060 = vpop.f32.mrf.mxu0
        %v1061 = vadd.f32 %v1012, %v1060
        %1062 = vmatmul.bf16.gmra.mxu0 %v780
        %v1063 = vpop.f32.mrf.mxu0
        %v1064 = vadd.f32 %v1015, %v1063
        %v1065 = vpop.f32.mrf.mxu0
        %v1066 = vadd.f32 %v1017, %v1065
        %1067 = vmatmul.bf16.gmra.mxu0 %v782
        %v1068 = vpop.f32.mrf.mxu0
        %v1069 = vadd.f32 %v1020, %v1068
        %v1070 = vpop.f32.mrf.mxu0
        %v1071 = vadd.f32 %v1022, %v1070
        %1072 = vdwg.mxu0
        %1073 = vmatpush.bf16.msra.mxu0 %v926
        %1074 = vmatpush.bf16.msra.mxu0 %v924
        %1075 = vmatpush.bf16.msra.mxu0 %v922
        %1076 = vmatpush.bf16.msra.mxu0 %v920
        %1077 = vmatpush.bf16.msra.mxu0 %v918
        %1078 = vmatpush.bf16.msra.mxu0 %v916
        %1079 = vmatpush.bf16.msra.mxu0 %v914
        %1080 = vmatpush.bf16.msra.mxu0 %v912
        %1081 = vmatmul.bf16.gmra.mxu0 %v767
        %v1082 = vpop.f32.mrf.mxu0
        %v1083 = vadd.f32 0.0, %v1082
        %v1084 = vpop.f32.mrf.mxu0
        %v1085 = vadd.f32 0.0, %v1084
        %1086 = vmatmul.bf16.gmra.mxu0 %v769
        %v1087 = vpop.f32.mrf.mxu0
        %v1088 = vadd.f32 0.0, %v1087
        %v1089 = vpop.f32.mrf.mxu0
        %v1090 = vadd.f32 0.0, %v1089
        %1091 = vmatmul.bf16.gmra.mxu0 %v771
        %v1092 = vpop.f32.mrf.mxu0
        %v1093 = vadd.f32 0.0, %v1092
        %v1094 = vpop.f32.mrf.mxu0
        %v1095 = vadd.f32 0.0, %v1094
        %1096 = vmatmul.bf16.gmra.mxu0 %v773
        %v1097 = vpop.f32.mrf.mxu0
        %v1098 = vadd.f32 0.0, %v1097
        %v1099 = vpop.f32.mrf.mxu0
        %v1100 = vadd.f32 0.0, %v1099
        %1101 = vmatmul.bf16.gmra.mxu0 %v775
        %v1102 = vpop.f32.mrf.mxu0
        %v1103 = vadd.f32 0.0, %v1102
        %v1104 = vpop.f32.mrf.mxu0
        %v1105 = vadd.f32 0.0, %v1104
        %1106 = vmatmul.bf16.gmra.mxu0 %v777
        %v1107 = vpop.f32.mrf.mxu0
        %v1108 = vadd.f32 0.0, %v1107
        %v1109 = vpop.f32.mrf.mxu0
        %v1110 = vadd.f32 0.0, %v1109
        %1111 = vmatmul.bf16.gmra.mxu0 %v779
        %v1112 = vpop.f32.mrf.mxu0
        %v1113 = vadd.f32 0.0, %v1112
        %v1114 = vpop.f32.mrf.mxu0
        %v1115 = vadd.f32 0.0, %v1114
        %1116 = vmatmul.bf16.gmra.mxu0 %v781
        %v1117 = vpop.f32.mrf.mxu0
        %v1118 = vadd.f32 0.0, %v1117
        %v1119 = vpop.f32.mrf.mxu0
        %v1120 = vadd.f32 0.0, %v1119
        %1121 = vdwg.mxu0
        %1122 = vmatpush.bf16.msra.mxu0 %v942
        %1123 = vmatpush.bf16.msra.mxu0 %v940
        %1124 = vmatpush.bf16.msra.mxu0 %v938
        %1125 = vmatpush.bf16.msra.mxu0 %v936
        %1126 = vmatpush.bf16.msra.mxu0 %v934
        %1127 = vmatpush.bf16.msra.mxu0 %v932
        %1128 = vmatpush.bf16.msra.mxu0 %v930
        %1129 = vmatpush.bf16.msra.mxu0 %v928
        %1130 = vmatmul.bf16.gmra.mxu0 %v768
        %v1131 = vpop.f32.mrf.mxu0
        %v1132 = vadd.f32 %v1083, %v1131
        %v1133 = vpop.f32.mrf.mxu0
        %v1134 = vadd.f32 %v1085, %v1133
        %1135 = vmatmul.bf16.gmra.mxu0 %v770
        %v1136 = vpop.f32.mrf.mxu0
        %v1137 = vadd.f32 %v1088, %v1136
        %v1138 = vpop.f32.mrf.mxu0
        %v1139 = vadd.f32 %v1090, %v1138
        %1140 = vmatmul.bf16.gmra.mxu0 %v772
        %v1141 = vpop.f32.mrf.mxu0
        %v1142 = vadd.f32 %v1093, %v1141
        %v1143 = vpop.f32.mrf.mxu0
        %v1144 = vadd.f32 %v1095, %v1143
        %1145 = vmatmul.bf16.gmra.mxu0 %v774
        %v1146 = vpop.f32.mrf.mxu0
        %v1147 = vadd.f32 %v1098, %v1146
        %v1148 = vpop.f32.mrf.mxu0
        %v1149 = vadd.f32 %v1100, %v1148
        %1150 = vmatmul.bf16.gmra.mxu0 %v776
        %v1151 = vpop.f32.mrf.mxu0
        %v1152 = vadd.f32 %v1103, %v1151
        %v1153 = vpop.f32.mrf.mxu0
        %v1154 = vadd.f32 %v1105, %v1153
        %1155 = vmatmul.bf16.gmra.mxu0 %v778
        %v1156 = vpop.f32.mrf.mxu0
        %v1157 = vadd.f32 %v1108, %v1156
        %v1158 = vpop.f32.mrf.mxu0
        %v1159 = vadd.f32 %v1110, %v1158
        %1160 = vmatmul.bf16.gmra.mxu0 %v780
        %v1161 = vpop.f32.mrf.mxu0
        %v1162 = vadd.f32 %v1113, %v1161
        %v1163 = vpop.f32.mrf.mxu0
        %v1164 = vadd.f32 %v1115, %v1163
        %1165 = vmatmul.bf16.gmra.mxu0 %v782
        %v1166 = vpop.f32.mrf.mxu0
        %v1167 = vadd.f32 %v1118, %v1166
        %v1168 = vpop.f32.mrf.mxu0
        %v1169 = vadd.f32 %v1120, %v1168
        %1170 = vdwg.mxu0
        %v1171 = vmax.f32 %v1034, %v1132
        %v1172 = vmax.f32 %v1036, %v1134
        %v1173 = vmax.f32 %v1039, %v1137
        %v1174 = vmax.f32 %v1041, %v1139
        %v1175 = vmax.f32 %v1044, %v1142
        %v1176 = vmax.f32 %v1046, %v1144
        %v1177 = vmax.f32 %v1049, %v1147
        %v1178 = vmax.f32 %v1051, %v1149
        %v1179 = vmax.f32 %v1054, %v1152
        %v1180 = vmax.f32 %v1056, %v1154
        %v1181 = vmax.f32 %v1059, %v1157
        %v1182 = vmax.f32 %v1061, %v1159
        %v1183 = vmax.f32 %v1064, %v1162
        %v1184 = vmax.f32 %v1066, %v1164
        %v1185 = vmax.f32 %v1069, %v1167
        %v1186 = vmax.f32 %v1071, %v1169
        %v1187 = vld [vmem:[%s13 + $0x1] ss:$0 sm:$0xff]
        %v1188 = vadd.f32 %v1171, %v1187
        %v1189 = vadd.f32 %v1172, %v1187
        %v1190 = vadd.f32 %v1173, %v1187
        %v1191 = vadd.f32 %v1174, %v1187
        %v1192 = vadd.f32 %v1175, %v1187
        %v1193 = vadd.f32 %v1176, %v1187
        %v1194 = vadd.f32 %v1177, %v1187
        %v1195 = vadd.f32 %v1178, %v1187
        %v1196 = vadd.f32 %v1179, %v1187
        %v1197 = vadd.f32 %v1180, %v1187
        %v1198 = vadd.f32 %v1181, %v1187
        %v1199 = vadd.f32 %v1182, %v1187
        %v1200 = vadd.f32 %v1183, %v1187
        %v1201 = vadd.f32 %v1184, %v1187
        %v1202 = vadd.f32 %v1185, %v1187
        %v1203 = vadd.f32 %v1186, %v1187
        %v1204 = vmul.f32 %v1188, 0.2
        %v1205 = vmul.f32 %v1189, 0.2
        %v1206 = vmul.f32 %v1190, 0.2
        %v1207 = vmul.f32 %v1191, 0.2
        %v1208 = vmul.f32 %v1192, 0.2
        %v1209 = vmul.f32 %v1193, 0.2
        %v1210 = vmul.f32 %v1194, 0.2
        %v1211 = vmul.f32 %v1195, 0.2
        %v1212 = vmul.f32 %v1196, 0.2
        %v1213 = vmul.f32 %v1197, 0.2
        %v1214 = vmul.f32 %v1198, 0.2
        %v1215 = vmul.f32 %v1199, 0.2
        %v1216 = vmul.f32 %v1200, 0.2
        %v1217 = vmul.f32 %v1201, 0.2
        %v1218 = vmul.f32 %v1202, 0.2
        %v1219 = vmul.f32 %v1203, 0.2
        %v1220 = vmax.f32 %v1188, %v1204
        %v1221 = vmax.f32 %v1189, %v1205
        %v1222 = vmax.f32 %v1190, %v1206
        %v1223 = vmax.f32 %v1191, %v1207
        %v1224 = vmax.f32 %v1192, %v1208
        %v1225 = vmax.f32 %v1193, %v1209
        %v1226 = vmax.f32 %v1194, %v1210
        %v1227 = vmax.f32 %v1195, %v1211
        %v1228 = vmax.f32 %v1196, %v1212
        %v1229 = vmax.f32 %v1197, %v1213
        %v1230 = vmax.f32 %v1198, %v1214
        %v1231 = vmax.f32 %v1199, %v1215
        %v1232 = vmax.f32 %v1200, %v1216
        %v1233 = vmax.f32 %v1201, %v1217
        %v1234 = vmax.f32 %v1202, %v1218
        %v1235 = vmax.f32 %v1203, %v1219
        %v1236 = vpack.c.bf16 %v1221, %v1220
        %v1237 = vpack.c.bf16 %v1223, %v1222
        %v1238 = vpack.c.bf16 %v1225, %v1224
        %v1239 = vpack.c.bf16 %v1227, %v1226
        %v1240 = vpack.c.bf16 %v1229, %v1228
        %v1241 = vpack.c.bf16 %v1231, %v1230
        %v1242 = vpack.c.bf16 %v1233, %v1232
        %v1243 = vpack.c.bf16 %v1235, %v1234
        %v1244 = vld [vmem:[#allocation2] sm:$0xff]
        %v1245 = vld [vmem:[#allocation2 + $0x8] sm:$0xff]
        %v1246 = vld [vmem:[#allocation2 + $0x10] sm:$0xff]
        %v1247 = vld [vmem:[#allocation2 + $0x18] sm:$0xff]
        %v1248 = vld [vmem:[#allocation2 + $0x20] sm:$0xff]
        %v1249 = vld [vmem:[#allocation2 + $0x28] sm:$0xff]
        %v1250 = vld [vmem:[#allocation2 + $0x30] sm:$0xff]
        %v1251 = vld [vmem:[#allocation2 + $0x38] sm:$0xff]
        %v1252 = vld [vmem:[#allocation2 + $0x40] sm:$0xff]
        %v1253 = vld [vmem:[#allocation2 + $0x48] sm:$0xff]
        %v1254 = vld [vmem:[#allocation2 + $0x50] sm:$0xff]
        %v1255 = vld [vmem:[#allocation2 + $0x58] sm:$0xff]
        %v1256 = vld [vmem:[#allocation2 + $0x60] sm:$0xff]
        %v1257 = vld [vmem:[#allocation2 + $0x68] sm:$0xff]
        %v1258 = vld [vmem:[#allocation2 + $0x70] sm:$0xff]
        %v1259 = vld [vmem:[#allocation2 + $0x78] sm:$0xff]
        %s1260 = scalar_lea.vmem %s13, 2
        %v1261 = vld [vmem:[%s1260] ss:$8 sm:$0x3]
        %v1263 = vperm.slane %v1261, 0
        %v1264 = vperm.slane %v1261, 1
        %v1283 = vunpack.c.l.b16 %v1244
        %v1284 = vunpack.c.h.b16 %v1244
        %v1285 = vunpack.c.l.b16 %v1245
        %v1286 = vunpack.c.h.b16 %v1245
        %v1287 = vunpack.c.l.b16 %v1246
        %v1288 = vunpack.c.h.b16 %v1246
        %v1289 = vunpack.c.l.b16 %v1247
        %v1290 = vunpack.c.h.b16 %v1247
        %v1291 = vunpack.c.l.b16 %v1248
        %v1292 = vunpack.c.h.b16 %v1248
        %v1293 = vunpack.c.l.b16 %v1249
        %v1294 = vunpack.c.h.b16 %v1249
        %v1295 = vunpack.c.l.b16 %v1250
        %v1296 = vunpack.c.h.b16 %v1250
        %v1297 = vunpack.c.l.b16 %v1251
        %v1298 = vunpack.c.h.b16 %v1251
        %v1299 = vunpack.c.l.b16 %v1252
        %v1300 = vunpack.c.h.b16 %v1252
        %v1301 = vunpack.c.l.b16 %v1253
        %v1302 = vunpack.c.h.b16 %v1253
        %v1303 = vunpack.c.l.b16 %v1254
        %v1304 = vunpack.c.h.b16 %v1254
        %v1305 = vunpack.c.l.b16 %v1255
        %v1306 = vunpack.c.h.b16 %v1255
        %v1307 = vunpack.c.l.b16 %v1256
        %v1308 = vunpack.c.h.b16 %v1256
        %v1309 = vunpack.c.l.b16 %v1257
        %v1310 = vunpack.c.h.b16 %v1257
        %v1311 = vunpack.c.l.b16 %v1258
        %v1312 = vunpack.c.h.b16 %v1258
        %v1313 = vunpack.c.l.b16 %v1259
        %v1314 = vunpack.c.h.b16 %v1259
        %v1315 = vpack.c.b16 %v1285, %v1283
        %v1316 = vpack.c.b16 %v1286, %v1284
        %v1317 = vpack.c.b16 %v1289, %v1287
        %v1318 = vpack.c.b16 %v1290, %v1288
        %v1319 = vpack.c.b16 %v1293, %v1291
        %v1320 = vpack.c.b16 %v1294, %v1292
        %v1321 = vpack.c.b16 %v1297, %v1295
        %v1322 = vpack.c.b16 %v1298, %v1296
        %v1323 = vpack.c.b16 %v1301, %v1299
        %v1324 = vpack.c.b16 %v1302, %v1300
        %v1325 = vpack.c.b16 %v1305, %v1303
        %v1326 = vpack.c.b16 %v1306, %v1304
        %v1327 = vpack.c.b16 %v1309, %v1307
        %v1328 = vpack.c.b16 %v1310, %v1308
        %v1329 = vpack.c.b16 %v1313, %v1311
        %v1330 = vpack.c.b16 %v1314, %v1312
        %1347 = vmatpush.bf16.msra.mxu0 %v1329
        %1348 = vmatpush.bf16.msra.mxu0 %v1327
        %1349 = vmatpush.bf16.msra.mxu0 %v1325
        %1350 = vmatpush.bf16.msra.mxu0 %v1323
        %1351 = vmatpush.bf16.msra.mxu0 %v1321
        %1352 = vmatpush.bf16.msra.mxu0 %v1319
        %1353 = vmatpush.bf16.msra.mxu0 %v1317
        %1354 = vmatpush.bf16.msra.mxu0 %v1315
        %1355 = vmatmul.bf16.gmra.mxu0 %v1236
        %v1356 = vpop.f32.mrf.mxu0
        %v1357 = vadd.f32 %v1263, %v1356
        %v1358 = vpop.f32.mrf.mxu0
        %v1359 = vadd.f32 %v1263, %v1358
        %1360 = vmatmul.bf16.gmra.mxu0 %v1237
        %v1361 = vpop.f32.mrf.mxu0
        %v1362 = vadd.f32 %v1263, %v1361
        %v1363 = vpop.f32.mrf.mxu0
        %v1364 = vadd.f32 %v1263, %v1363
        %1365 = vmatmul.bf16.gmra.mxu0 %v1238
        %v1366 = vpop.f32.mrf.mxu0
        %v1367 = vadd.f32 %v1263, %v1366
        %v1368 = vpop.f32.mrf.mxu0
        %v1369 = vadd.f32 %v1263, %v1368
        %1370 = vmatmul.bf16.gmra.mxu0 %v1239
        %v1371 = vpop.f32.mrf.mxu0
        %v1372 = vadd.f32 %v1263, %v1371
        %v1373 = vpop.f32.mrf.mxu0
        %v1374 = vadd.f32 %v1263, %v1373
        %1375 = vmatmul.bf16.gmra.mxu0 %v1240
        %v1376 = vpop.f32.mrf.mxu0
        %v1377 = vadd.f32 %v1263, %v1376
        %v1378 = vpop.f32.mrf.mxu0
        %v1379 = vadd.f32 %v1263, %v1378
        %1380 = vmatmul.bf16.gmra.mxu0 %v1241
        %v1381 = vpop.f32.mrf.mxu0
        %v1382 = vadd.f32 %v1263, %v1381
        %v1383 = vpop.f32.mrf.mxu0
        %v1384 = vadd.f32 %v1263, %v1383
        %1385 = vmatmul.bf16.gmra.mxu0 %v1242
        %v1386 = vpop.f32.mrf.mxu0
        %v1387 = vadd.f32 %v1263, %v1386
        %v1388 = vpop.f32.mrf.mxu0
        %v1389 = vadd.f32 %v1263, %v1388
        %1390 = vmatmul.bf16.gmra.mxu0 %v1243
        %v1391 = vpop.f32.mrf.mxu0
        %v1392 = vadd.f32 %v1263, %v1391
        %v1393 = vpop.f32.mrf.mxu0
        %v1394 = vadd.f32 %v1263, %v1393
        %1395 = vdwg.mxu0
        %1396 = vmatpush.bf16.msra.mxu0 %v1330
        %1397 = vmatpush.bf16.msra.mxu0 %v1328
        %1398 = vmatpush.bf16.msra.mxu0 %v1326
        %1399 = vmatpush.bf16.msra.mxu0 %v1324
        %1400 = vmatpush.bf16.msra.mxu0 %v1322
        %1401 = vmatpush.bf16.msra.mxu0 %v1320
        %1402 = vmatpush.bf16.msra.mxu0 %v1318
        %1403 = vmatpush.bf16.msra.mxu0 %v1316
        %1404 = vmatmul.bf16.gmra.mxu0 %v1236
        %v1405 = vpop.f32.mrf.mxu0
        %v1406 = vadd.f32 %v1264, %v1405
        %v1407 = vpop.f32.mrf.mxu0
        %v1408 = vadd.f32 %v1264, %v1407
        %1409 = vmatmul.bf16.gmra.mxu0 %v1237
        %v1410 = vpop.f32.mrf.mxu0
        %v1411 = vadd.f32 %v1264, %v1410
        %v1412 = vpop.f32.mrf.mxu0
        %v1413 = vadd.f32 %v1264, %v1412
        %1414 = vmatmul.bf16.gmra.mxu0 %v1238
        %v1415 = vpop.f32.mrf.mxu0
        %v1416 = vadd.f32 %v1264, %v1415
        %v1417 = vpop.f32.mrf.mxu0
        %v1418 = vadd.f32 %v1264, %v1417
        %1419 = vmatmul.bf16.gmra.mxu0 %v1239
        %v1420 = vpop.f32.mrf.mxu0
        %v1421 = vadd.f32 %v1264, %v1420
        %v1422 = vpop.f32.mrf.mxu0
        %v1423 = vadd.f32 %v1264, %v1422
        %1424 = vmatmul.bf16.gmra.mxu0 %v1240
        %v1425 = vpop.f32.mrf.mxu0
        %v1426 = vadd.f32 %v1264, %v1425
        %v1427 = vpop.f32.mrf.mxu0
        %v1428 = vadd.f32 %v1264, %v1427
        %1429 = vmatmul.bf16.gmra.mxu0 %v1241
        %v1430 = vpop.f32.mrf.mxu0
        %v1431 = vadd.f32 %v1264, %v1430
        %v1432 = vpop.f32.mrf.mxu0
        %v1433 = vadd.f32 %v1264, %v1432
        %1434 = vmatmul.bf16.gmra.mxu0 %v1242
        %v1435 = vpop.f32.mrf.mxu0
        %v1436 = vadd.f32 %v1264, %v1435
        %v1437 = vpop.f32.mrf.mxu0
        %v1438 = vadd.f32 %v1264, %v1437
        %1439 = vmatmul.bf16.gmra.mxu0 %v1243
        %v1440 = vpop.f32.mrf.mxu0
        %v1441 = vadd.f32 %v1264, %v1440
        %v1442 = vpop.f32.mrf.mxu0
        %v1443 = vadd.f32 %v1264, %v1442
        %1444 = vdwg.mxu0
        %v1445 = vmul.f32 %v1357, 0.2
        %v1446 = vmul.f32 %v1406, 0.2
        %v1447 = vmul.f32 %v1359, 0.2
        %v1448 = vmul.f32 %v1408, 0.2
        %v1449 = vmul.f32 %v1362, 0.2
        %v1450 = vmul.f32 %v1411, 0.2
        %v1451 = vmul.f32 %v1364, 0.2
        %v1452 = vmul.f32 %v1413, 0.2
        %v1453 = vmul.f32 %v1367, 0.2
        %v1454 = vmul.f32 %v1416, 0.2
        %v1455 = vmul.f32 %v1369, 0.2
        %v1456 = vmul.f32 %v1418, 0.2
        %v1457 = vmul.f32 %v1372, 0.2
        %v1458 = vmul.f32 %v1421, 0.2
        %v1459 = vmul.f32 %v1374, 0.2
        %v1460 = vmul.f32 %v1423, 0.2
        %v1461 = vmul.f32 %v1377, 0.2
        %v1462 = vmul.f32 %v1426, 0.2
        %v1463 = vmul.f32 %v1379, 0.2
        %v1464 = vmul.f32 %v1428, 0.2
        %v1465 = vmul.f32 %v1382, 0.2
        %v1466 = vmul.f32 %v1431, 0.2
        %v1467 = vmul.f32 %v1384, 0.2
        %v1468 = vmul.f32 %v1433, 0.2
        %v1469 = vmul.f32 %v1387, 0.2
        %v1470 = vmul.f32 %v1436, 0.2
        %v1471 = vmul.f32 %v1389, 0.2
        %v1472 = vmul.f32 %v1438, 0.2
        %v1473 = vmul.f32 %v1392, 0.2
        %v1474 = vmul.f32 %v1441, 0.2
        %v1475 = vmul.f32 %v1394, 0.2
        %v1476 = vmul.f32 %v1443, 0.2
        %v1477 = vmax.f32 %v1357, %v1445
        %v1478 = vmax.f32 %v1406, %v1446
        %v1479 = vmax.f32 %v1359, %v1447
        %v1480 = vmax.f32 %v1408, %v1448
        %v1481 = vmax.f32 %v1362, %v1449
        %v1482 = vmax.f32 %v1411, %v1450
        %v1483 = vmax.f32 %v1364, %v1451
        %v1484 = vmax.f32 %v1413, %v1452
        %v1485 = vmax.f32 %v1367, %v1453
        %v1486 = vmax.f32 %v1416, %v1454
        %v1487 = vmax.f32 %v1369, %v1455
        %v1488 = vmax.f32 %v1418, %v1456
        %v1489 = vmax.f32 %v1372, %v1457
        %v1490 = vmax.f32 %v1421, %v1458
        %v1491 = vmax.f32 %v1374, %v1459
        %v1492 = vmax.f32 %v1423, %v1460
        %v1493 = vmax.f32 %v1377, %v1461
        %v1494 = vmax.f32 %v1426, %v1462
        %v1495 = vmax.f32 %v1379, %v1463
        %v1496 = vmax.f32 %v1428, %v1464
        %v1497 = vmax.f32 %v1382, %v1465
        %v1498 = vmax.f32 %v1431, %v1466
        %v1499 = vmax.f32 %v1384, %v1467
        %v1500 = vmax.f32 %v1433, %v1468
        %v1501 = vmax.f32 %v1387, %v1469
        %v1502 = vmax.f32 %v1436, %v1470
        %v1503 = vmax.f32 %v1389, %v1471
        %v1504 = vmax.f32 %v1438, %v1472
        %v1505 = vmax.f32 %v1392, %v1473
        %v1506 = vmax.f32 %v1441, %v1474
        %v1507 = vmax.f32 %v1394, %v1475
        %v1508 = vmax.f32 %v1443, %v1476
        %v1509 = vpack.c.bf16 %v1479, %v1477
        %v1510 = vpack.c.bf16 %v1480, %v1478
        %v1511 = vpack.c.bf16 %v1483, %v1481
        %v1512 = vpack.c.bf16 %v1484, %v1482
        %v1513 = vpack.c.bf16 %v1487, %v1485
        %v1514 = vpack.c.bf16 %v1488, %v1486
        %v1515 = vpack.c.bf16 %v1491, %v1489
        %v1516 = vpack.c.bf16 %v1492, %v1490
        %v1517 = vpack.c.bf16 %v1495, %v1493
        %v1518 = vpack.c.bf16 %v1496, %v1494
        %v1519 = vpack.c.bf16 %v1499, %v1497
        %v1520 = vpack.c.bf16 %v1500, %v1498
        %v1521 = vpack.c.bf16 %v1503, %v1501
        %v1522 = vpack.c.bf16 %v1504, %v1502
        %v1523 = vpack.c.bf16 %v1507, %v1505
        %v1524 = vpack.c.bf16 %v1508, %v1506
        %v1525 = vld [vmem:[%s5] sm:$0xff]
        %v1526 = vld [vmem:[%s5 + $0x8] sm:$0xff]
        %v1527 = vld [vmem:[%s5 + $0x10] sm:$0xff]
        %v1528 = vld [vmem:[%s5 + $0x18] sm:$0xff]
        %v1529 = vld [vmem:[%s5 + $0x20] sm:$0xff]
        %v1530 = vld [vmem:[%s5 + $0x28] sm:$0xff]
        %v1531 = vld [vmem:[%s5 + $0x30] sm:$0xff]
        %v1532 = vld [vmem:[%s5 + $0x38] sm:$0xff]
        %v1533 = vld [vmem:[%s5 + $0x40] sm:$0xff]
        %v1534 = vld [vmem:[%s5 + $0x48] sm:$0xff]
        %v1535 = vld [vmem:[%s5 + $0x50] sm:$0xff]
        %v1536 = vld [vmem:[%s5 + $0x58] sm:$0xff]
        %v1537 = vld [vmem:[%s5 + $0x60] sm:$0xff]
        %v1538 = vld [vmem:[%s5 + $0x68] sm:$0xff]
        %v1539 = vld [vmem:[%s5 + $0x70] sm:$0xff]
        %v1540 = vld [vmem:[%s5 + $0x78] sm:$0xff]
        %v1541 = vld [vmem:[%s5 + $0x80] sm:$0xff]
        %v1542 = vld [vmem:[%s5 + $0x88] sm:$0xff]
        %v1543 = vld [vmem:[%s5 + $0x90] sm:$0xff]
        %v1544 = vld [vmem:[%s5 + $0x98] sm:$0xff]
        %v1545 = vld [vmem:[%s5 + $0xa0] sm:$0xff]
        %v1546 = vld [vmem:[%s5 + $0xa8] sm:$0xff]
        %v1547 = vld [vmem:[%s5 + $0xb0] sm:$0xff]
        %v1548 = vld [vmem:[%s5 + $0xb8] sm:$0xff]
        %v1549 = vld [vmem:[%s5 + $0xc0] sm:$0xff]
        %v1550 = vld [vmem:[%s5 + $0xc8] sm:$0xff]
        %v1551 = vld [vmem:[%s5 + $0xd0] sm:$0xff]
        %v1552 = vld [vmem:[%s5 + $0xd8] sm:$0xff]
        %v1553 = vld [vmem:[%s5 + $0xe0] sm:$0xff]
        %v1554 = vld [vmem:[%s5 + $0xe8] sm:$0xff]
        %v1555 = vld [vmem:[%s5 + $0xf0] sm:$0xff]
        %v1556 = vld [vmem:[%s5 + $0xf8] sm:$0xff]
        %v1589 = vunpack.c.l.b16 %v1525
        %v1590 = vunpack.c.h.b16 %v1525
        %v1591 = vunpack.c.l.b16 %v1526
        %v1592 = vunpack.c.h.b16 %v1526
        %v1593 = vunpack.c.l.b16 %v1527
        %v1594 = vunpack.c.h.b16 %v1527
        %v1595 = vunpack.c.l.b16 %v1528
        %v1596 = vunpack.c.h.b16 %v1528
        %v1597 = vunpack.c.l.b16 %v1529
        %v1598 = vunpack.c.h.b16 %v1529
        %v1599 = vunpack.c.l.b16 %v1530
        %v1600 = vunpack.c.h.b16 %v1530
        %v1601 = vunpack.c.l.b16 %v1531
        %v1602 = vunpack.c.h.b16 %v1531
        %v1603 = vunpack.c.l.b16 %v1532
        %v1604 = vunpack.c.h.b16 %v1532
        %v1605 = vunpack.c.l.b16 %v1533
        %v1606 = vunpack.c.h.b16 %v1533
        %v1607 = vunpack.c.l.b16 %v1534
        %v1608 = vunpack.c.h.b16 %v1534
        %v1609 = vunpack.c.l.b16 %v1535
        %v1610 = vunpack.c.h.b16 %v1535
        %v1611 = vunpack.c.l.b16 %v1536
        %v1612 = vunpack.c.h.b16 %v1536
        %v1613 = vunpack.c.l.b16 %v1537
        %v1614 = vunpack.c.h.b16 %v1537
        %v1615 = vunpack.c.l.b16 %v1538
        %v1616 = vunpack.c.h.b16 %v1538
        %v1617 = vunpack.c.l.b16 %v1539
        %v1618 = vunpack.c.h.b16 %v1539
        %v1619 = vunpack.c.l.b16 %v1540
        %v1620 = vunpack.c.h.b16 %v1540
        %v1621 = vunpack.c.l.b16 %v1541
        %v1622 = vunpack.c.h.b16 %v1541
        %v1623 = vunpack.c.l.b16 %v1542
        %v1624 = vunpack.c.h.b16 %v1542
        %v1625 = vunpack.c.l.b16 %v1543
        %v1626 = vunpack.c.h.b16 %v1543
        %v1627 = vunpack.c.l.b16 %v1544
        %v1628 = vunpack.c.h.b16 %v1544
        %v1629 = vunpack.c.l.b16 %v1545
        %v1630 = vunpack.c.h.b16 %v1545
        %v1631 = vunpack.c.l.b16 %v1546
        %v1632 = vunpack.c.h.b16 %v1546
        %v1633 = vunpack.c.l.b16 %v1547
        %v1634 = vunpack.c.h.b16 %v1547
        %v1635 = vunpack.c.l.b16 %v1548
        %v1636 = vunpack.c.h.b16 %v1548
        %v1637 = vunpack.c.l.b16 %v1549
        %v1638 = vunpack.c.h.b16 %v1549
        %v1639 = vunpack.c.l.b16 %v1550
        %v1640 = vunpack.c.h.b16 %v1550
        %v1641 = vunpack.c.l.b16 %v1551
        %v1642 = vunpack.c.h.b16 %v1551
        %v1643 = vunpack.c.l.b16 %v1552
        %v1644 = vunpack.c.h.b16 %v1552
        %v1645 = vunpack.c.l.b16 %v1553
        %v1646 = vunpack.c.h.b16 %v1553
        %v1647 = vunpack.c.l.b16 %v1554
        %v1648 = vunpack.c.h.b16 %v1554
        %v1649 = vunpack.c.l.b16 %v1555
        %v1650 = vunpack.c.h.b16 %v1555
        %v1651 = vunpack.c.l.b16 %v1556
        %v1652 = vunpack.c.h.b16 %v1556
        %v1653 = vpack.c.b16 %v1591, %v1589
        %v1654 = vpack.c.b16 %v1592, %v1590
        %v1655 = vpack.c.b16 %v1595, %v1593
        %v1656 = vpack.c.b16 %v1596, %v1594
        %v1657 = vpack.c.b16 %v1599, %v1597
        %v1658 = vpack.c.b16 %v1600, %v1598
        %v1659 = vpack.c.b16 %v1603, %v1601
        %v1660 = vpack.c.b16 %v1604, %v1602
        %v1661 = vpack.c.b16 %v1607, %v1605
        %v1662 = vpack.c.b16 %v1608, %v1606
        %v1663 = vpack.c.b16 %v1611, %v1609
        %v1664 = vpack.c.b16 %v1612, %v1610
        %v1665 = vpack.c.b16 %v1615, %v1613
        %v1666 = vpack.c.b16 %v1616, %v1614
        %v1667 = vpack.c.b16 %v1619, %v1617
        %v1668 = vpack.c.b16 %v1620, %v1618
        %v1669 = vpack.c.b16 %v1623, %v1621
        %v1670 = vpack.c.b16 %v1624, %v1622
        %v1671 = vpack.c.b16 %v1627, %v1625
        %v1672 = vpack.c.b16 %v1628, %v1626
        %v1673 = vpack.c.b16 %v1631, %v1629
        %v1674 = vpack.c.b16 %v1632, %v1630
        %v1675 = vpack.c.b16 %v1635, %v1633
        %v1676 = vpack.c.b16 %v1636, %v1634
        %v1677 = vpack.c.b16 %v1639, %v1637
        %v1678 = vpack.c.b16 %v1640, %v1638
        %v1679 = vpack.c.b16 %v1643, %v1641
        %v1680 = vpack.c.b16 %v1644, %v1642
        %v1681 = vpack.c.b16 %v1647, %v1645
        %v1682 = vpack.c.b16 %v1648, %v1646
        %v1683 = vpack.c.b16 %v1651, %v1649
        %v1684 = vpack.c.b16 %v1652, %v1650
        %1717 = vmatpush.bf16.msra.mxu0 %v1667
        %1718 = vmatpush.bf16.msra.mxu0 %v1665
        %1719 = vmatpush.bf16.msra.mxu0 %v1663
        %1720 = vmatpush.bf16.msra.mxu0 %v1661
        %1721 = vmatpush.bf16.msra.mxu0 %v1659
        %1722 = vmatpush.bf16.msra.mxu0 %v1657
        %1723 = vmatpush.bf16.msra.mxu0 %v1655
        %1724 = vmatpush.bf16.msra.mxu0 %v1653
        %1725 = vmatmul.bf16.gmra.mxu0 %v1509
        %v1726 = vpop.f32.mrf.mxu0
        %v1727 = vadd.f32 0.0, %v1726
        %v1728 = vpop.f32.mrf.mxu0
        %v1729 = vadd.f32 0.0, %v1728
        %1730 = vmatmul.bf16.gmra.mxu0 %v1511
        %v1731 = vpop.f32.mrf.mxu0
        %v1732 = vadd.f32 0.0, %v1731
        %v1733 = vpop.f32.mrf.mxu0
        %v1734 = vadd.f32 0.0, %v1733
        %1735 = vmatmul.bf16.gmra.mxu0 %v1513
        %v1736 = vpop.f32.mrf.mxu0
        %v1737 = vadd.f32 0.0, %v1736
        %v1738 = vpop.f32.mrf.mxu0
        %v1739 = vadd.f32 0.0, %v1738
        %1740 = vmatmul.bf16.gmra.mxu0 %v1515
        %v1741 = vpop.f32.mrf.mxu0
        %v1742 = vadd.f32 0.0, %v1741
        %v1743 = vpop.f32.mrf.mxu0
        %v1744 = vadd.f32 0.0, %v1743
        %1745 = vmatmul.bf16.gmra.mxu0 %v1517
        %v1746 = vpop.f32.mrf.mxu0
        %v1747 = vadd.f32 0.0, %v1746
        %v1748 = vpop.f32.mrf.mxu0
        %v1749 = vadd.f32 0.0, %v1748
        %1750 = vmatmul.bf16.gmra.mxu0 %v1519
        %v1751 = vpop.f32.mrf.mxu0
        %v1752 = vadd.f32 0.0, %v1751
        %v1753 = vpop.f32.mrf.mxu0
        %v1754 = vadd.f32 0.0, %v1753
        %1755 = vmatmul.bf16.gmra.mxu0 %v1521
        %v1756 = vpop.f32.mrf.mxu0
        %v1757 = vadd.f32 0.0, %v1756
        %v1758 = vpop.f32.mrf.mxu0
        %v1759 = vadd.f32 0.0, %v1758
        %1760 = vmatmul.bf16.gmra.mxu0 %v1523
        %v1761 = vpop.f32.mrf.mxu0
        %v1762 = vadd.f32 0.0, %v1761
        %v1763 = vpop.f32.mrf.mxu0
        %v1764 = vadd.f32 0.0, %v1763
        %1765 = vdwg.mxu0
        %1766 = vmatpush.bf16.msra.mxu0 %v1683
        %1767 = vmatpush.bf16.msra.mxu0 %v1681
        %1768 = vmatpush.bf16.msra.mxu0 %v1679
        %1769 = vmatpush.bf16.msra.mxu0 %v1677
        %1770 = vmatpush.bf16.msra.mxu0 %v1675
        %1771 = vmatpush.bf16.msra.mxu0 %v1673
        %1772 = vmatpush.bf16.msra.mxu0 %v1671
        %1773 = vmatpush.bf16.msra.mxu0 %v1669
        %1774 = vmatmul.bf16.gmra.mxu0 %v1510
        %v1775 = vpop.f32.mrf.mxu0
        %v1776 = vadd.f32 %v1727, %v1775
        %v1777 = vpop.f32.mrf.mxu0
        %v1778 = vadd.f32 %v1729, %v1777
        %1779 = vmatmul.bf16.gmra.mxu0 %v1512
        %v1780 = vpop.f32.mrf.mxu0
        %v1781 = vadd.f32 %v1732, %v1780
        %v1782 = vpop.f32.mrf.mxu0
        %v1783 = vadd.f32 %v1734, %v1782
        %1784 = vmatmul.bf16.gmra.mxu0 %v1514
        %v1785 = vpop.f32.mrf.mxu0
        %v1786 = vadd.f32 %v1737, %v1785
        %v1787 = vpop.f32.mrf.mxu0
        %v1788 = vadd.f32 %v1739, %v1787
        %1789 = vmatmul.bf16.gmra.mxu0 %v1516
        %v1790 = vpop.f32.mrf.mxu0
        %v1791 = vadd.f32 %v1742, %v1790
        %v1792 = vpop.f32.mrf.mxu0
        %v1793 = vadd.f32 %v1744, %v1792
        %1794 = vmatmul.bf16.gmra.mxu0 %v1518
        %v1795 = vpop.f32.mrf.mxu0
        %v1796 = vadd.f32 %v1747, %v1795
        %v1797 = vpop.f32.mrf.mxu0
        %v1798 = vadd.f32 %v1749, %v1797
        %1799 = vmatmul.bf16.gmra.mxu0 %v1520
        %v1800 = vpop.f32.mrf.mxu0
        %v1801 = vadd.f32 %v1752, %v1800
        %v1802 = vpop.f32.mrf.mxu0
        %v1803 = vadd.f32 %v1754, %v1802
        %1804 = vmatmul.bf16.gmra.mxu0 %v1522
        %v1805 = vpop.f32.mrf.mxu0
        %v1806 = vadd.f32 %v1757, %v1805
        %v1807 = vpop.f32.mrf.mxu0
        %v1808 = vadd.f32 %v1759, %v1807
        %1809 = vmatmul.bf16.gmra.mxu0 %v1524
        %v1810 = vpop.f32.mrf.mxu0
        %v1811 = vadd.f32 %v1762, %v1810
        %v1812 = vpop.f32.mrf.mxu0
        %v1813 = vadd.f32 %v1764, %v1812
        %1814 = vdwg.mxu0
        %1815 = vmatpush.bf16.msra.mxu0 %v1668
        %1816 = vmatpush.bf16.msra.mxu0 %v1666
        %1817 = vmatpush.bf16.msra.mxu0 %v1664
        %1818 = vmatpush.bf16.msra.mxu0 %v1662
        %1819 = vmatpush.bf16.msra.mxu0 %v1660
        %1820 = vmatpush.bf16.msra.mxu0 %v1658
        %1821 = vmatpush.bf16.msra.mxu0 %v1656
        %1822 = vmatpush.bf16.msra.mxu0 %v1654
        %1823 = vmatmul.bf16.gmra.mxu0 %v1509
        %v1824 = vpop.f32.mrf.mxu0
        %v1825 = vadd.f32 0.0, %v1824
        %v1826 = vpop.f32.mrf.mxu0
        %v1827 = vadd.f32 0.0, %v1826
        %1828 = vmatmul.bf16.gmra.mxu0 %v1511
        %v1829 = vpop.f32.mrf.mxu0
        %v1830 = vadd.f32 0.0, %v1829
        %v1831 = vpop.f32.mrf.mxu0
        %v1832 = vadd.f32 0.0, %v1831
        %1833 = vmatmul.bf16.gmra.mxu0 %v1513
        %v1834 = vpop.f32.mrf.mxu0
        %v1835 = vadd.f32 0.0, %v1834
        %v1836 = vpop.f32.mrf.mxu0
        %v1837 = vadd.f32 0.0, %v1836
        %1838 = vmatmul.bf16.gmra.mxu0 %v1515
        %v1839 = vpop.f32.mrf.mxu0
        %v1840 = vadd.f32 0.0, %v1839
        %v1841 = vpop.f32.mrf.mxu0
        %v1842 = vadd.f32 0.0, %v1841
        %1843 = vmatmul.bf16.gmra.mxu0 %v1517
        %v1844 = vpop.f32.mrf.mxu0
        %v1845 = vadd.f32 0.0, %v1844
        %v1846 = vpop.f32.mrf.mxu0
        %v1847 = vadd.f32 0.0, %v1846
        %1848 = vmatmul.bf16.gmra.mxu0 %v1519
        %v1849 = vpop.f32.mrf.mxu0
        %v1850 = vadd.f32 0.0, %v1849
        %v1851 = vpop.f32.mrf.mxu0
        %v1852 = vadd.f32 0.0, %v1851
        %1853 = vmatmul.bf16.gmra.mxu0 %v1521
        %v1854 = vpop.f32.mrf.mxu0
        %v1855 = vadd.f32 0.0, %v1854
        %v1856 = vpop.f32.mrf.mxu0
        %v1857 = vadd.f32 0.0, %v1856
        %1858 = vmatmul.bf16.gmra.mxu0 %v1523
        %v1859 = vpop.f32.mrf.mxu0
        %v1860 = vadd.f32 0.0, %v1859
        %v1861 = vpop.f32.mrf.mxu0
        %v1862 = vadd.f32 0.0, %v1861
        %1863 = vdwg.mxu0
        %1864 = vmatpush.bf16.msra.mxu0 %v1684
        %1865 = vmatpush.bf16.msra.mxu0 %v1682
        %1866 = vmatpush.bf16.msra.mxu0 %v1680
        %1867 = vmatpush.bf16.msra.mxu0 %v1678
        %1868 = vmatpush.bf16.msra.mxu0 %v1676
        %1869 = vmatpush.bf16.msra.mxu0 %v1674
        %1870 = vmatpush.bf16.msra.mxu0 %v1672
        %1871 = vmatpush.bf16.msra.mxu0 %v1670
        %1872 = vmatmul.bf16.gmra.mxu0 %v1510
        %v1873 = vpop.f32.mrf.mxu0
        %v1874 = vadd.f32 %v1825, %v1873
        %v1875 = vpop.f32.mrf.mxu0
        %v1876 = vadd.f32 %v1827, %v1875
        %1877 = vmatmul.bf16.gmra.mxu0 %v1512
        %v1878 = vpop.f32.mrf.mxu0
        %v1879 = vadd.f32 %v1830, %v1878
        %v1880 = vpop.f32.mrf.mxu0
        %v1881 = vadd.f32 %v1832, %v1880
        %1882 = vmatmul.bf16.gmra.mxu0 %v1514
        %v1883 = vpop.f32.mrf.mxu0
        %v1884 = vadd.f32 %v1835, %v1883
        %v1885 = vpop.f32.mrf.mxu0
        %v1886 = vadd.f32 %v1837, %v1885
        %1887 = vmatmul.bf16.gmra.mxu0 %v1516
        %v1888 = vpop.f32.mrf.mxu0
        %v1889 = vadd.f32 %v1840, %v1888
        %v1890 = vpop.f32.mrf.mxu0
        %v1891 = vadd.f32 %v1842, %v1890
        %1892 = vmatmul.bf16.gmra.mxu0 %v1518
        %v1893 = vpop.f32.mrf.mxu0
        %v1894 = vadd.f32 %v1845, %v1893
        %v1895 = vpop.f32.mrf.mxu0
        %v1896 = vadd.f32 %v1847, %v1895
        %1897 = vmatmul.bf16.gmra.mxu0 %v1520
        %v1898 = vpop.f32.mrf.mxu0
        %v1899 = vadd.f32 %v1850, %v1898
        %v1900 = vpop.f32.mrf.mxu0
        %v1901 = vadd.f32 %v1852, %v1900
        %1902 = vmatmul.bf16.gmra.mxu0 %v1522
        %v1903 = vpop.f32.mrf.mxu0
        %v1904 = vadd.f32 %v1855, %v1903
        %v1905 = vpop.f32.mrf.mxu0
        %v1906 = vadd.f32 %v1857, %v1905
        %1907 = vmatmul.bf16.gmra.mxu0 %v1524
        %v1908 = vpop.f32.mrf.mxu0
        %v1909 = vadd.f32 %v1860, %v1908
        %v1910 = vpop.f32.mrf.mxu0
        %v1911 = vadd.f32 %v1862, %v1910
        %1912 = vdwg.mxu0
        %v1913 = vmax.f32 %v1776, %v1874
        %v1914 = vmax.f32 %v1778, %v1876
        %v1915 = vmax.f32 %v1781, %v1879
        %v1916 = vmax.f32 %v1783, %v1881
        %v1917 = vmax.f32 %v1786, %v1884
        %v1918 = vmax.f32 %v1788, %v1886
        %v1919 = vmax.f32 %v1791, %v1889
        %v1920 = vmax.f32 %v1793, %v1891
        %v1921 = vmax.f32 %v1796, %v1894
        %v1922 = vmax.f32 %v1798, %v1896
        %v1923 = vmax.f32 %v1801, %v1899
        %v1924 = vmax.f32 %v1803, %v1901
        %v1925 = vmax.f32 %v1806, %v1904
        %v1926 = vmax.f32 %v1808, %v1906
        %v1927 = vmax.f32 %v1811, %v1909
        %v1928 = vmax.f32 %v1813, %v1911
        %v1929 = vld [vmem:[%s13 + $0x3] ss:$0 sm:$0xff]
        %v1930 = vadd.f32 %v1913, %v1929
        %v1931 = vadd.f32 %v1914, %v1929
        %v1932 = vadd.f32 %v1915, %v1929
        %v1933 = vadd.f32 %v1916, %v1929
        %v1934 = vadd.f32 %v1917, %v1929
        %v1935 = vadd.f32 %v1918, %v1929
        %v1936 = vadd.f32 %v1919, %v1929
        %v1937 = vadd.f32 %v1920, %v1929
        %v1938 = vadd.f32 %v1921, %v1929
        %v1939 = vadd.f32 %v1922, %v1929
        %v1940 = vadd.f32 %v1923, %v1929
        %v1941 = vadd.f32 %v1924, %v1929
        %v1942 = vadd.f32 %v1925, %v1929
        %v1943 = vadd.f32 %v1926, %v1929
        %v1944 = vadd.f32 %v1927, %v1929
        %v1945 = vadd.f32 %v1928, %v1929
        %v1946 = vmul.f32 %v1930, 0.2
        %v1947 = vmul.f32 %v1931, 0.2
        %v1948 = vmul.f32 %v1932, 0.2
        %v1949 = vmul.f32 %v1933, 0.2
        %v1950 = vmul.f32 %v1934, 0.2
        %v1951 = vmul.f32 %v1935, 0.2
        %v1952 = vmul.f32 %v1936, 0.2
        %v1953 = vmul.f32 %v1937, 0.2
        %v1954 = vmul.f32 %v1938, 0.2
        %v1955 = vmul.f32 %v1939, 0.2
        %v1956 = vmul.f32 %v1940, 0.2
        %v1957 = vmul.f32 %v1941, 0.2
        %v1958 = vmul.f32 %v1942, 0.2
        %v1959 = vmul.f32 %v1943, 0.2
        %v1960 = vmul.f32 %v1944, 0.2
        %v1961 = vmul.f32 %v1945, 0.2
        %v1962 = vmax.f32 %v1930, %v1946
        %v1963 = vmax.f32 %v1931, %v1947
        %v1964 = vmax.f32 %v1932, %v1948
        %v1965 = vmax.f32 %v1933, %v1949
        %v1966 = vmax.f32 %v1934, %v1950
        %v1967 = vmax.f32 %v1935, %v1951
        %v1968 = vmax.f32 %v1936, %v1952
        %v1969 = vmax.f32 %v1937, %v1953
        %v1970 = vmax.f32 %v1938, %v1954
        %v1971 = vmax.f32 %v1939, %v1955
        %v1972 = vmax.f32 %v1940, %v1956
        %v1973 = vmax.f32 %v1941, %v1957
        %v1974 = vmax.f32 %v1942, %v1958
        %v1975 = vmax.f32 %v1943, %v1959
        %v1976 = vmax.f32 %v1944, %v1960
        %v1977 = vmax.f32 %v1945, %v1961
        %v1978 = vpack.c.bf16 %v1963, %v1962
        %v1979 = vpack.c.bf16 %v1965, %v1964
        %v1980 = vpack.c.bf16 %v1967, %v1966
        %v1981 = vpack.c.bf16 %v1969, %v1968
        %v1982 = vpack.c.bf16 %v1971, %v1970
        %v1983 = vpack.c.bf16 %v1973, %v1972
        %v1984 = vpack.c.bf16 %v1975, %v1974
        %v1985 = vpack.c.bf16 %v1977, %v1976
        %v1986 = vld [vmem:[%s6] sm:$0xf]
        %v1987 = vld [vmem:[%s6 + $0x4] sm:$0xf]
        %v1988 = vld [vmem:[%s6 + $0x8] sm:$0xf]
        %v1989 = vld [vmem:[%s6 + $0xc] sm:$0xf]
        %v1990 = vld [vmem:[%s6 + $0x10] sm:$0xf]
        %v1991 = vld [vmem:[%s6 + $0x14] sm:$0xf]
        %v1992 = vld [vmem:[%s6 + $0x18] sm:$0xf]
        %v1993 = vld [vmem:[%s6 + $0x1c] sm:$0xf]
        %v1994 = vld [vmem:[%s6 + $0x20] sm:$0xf]
        %v1995 = vld [vmem:[%s6 + $0x24] sm:$0xf]
        %v1996 = vld [vmem:[%s6 + $0x28] sm:$0xf]
        %v1997 = vld [vmem:[%s6 + $0x2c] sm:$0xf]
        %v1998 = vld [vmem:[%s6 + $0x30] sm:$0xf]
        %v1999 = vld [vmem:[%s6 + $0x34] sm:$0xf]
        %v2000 = vld [vmem:[%s6 + $0x38] sm:$0xf]
        %v2001 = vld [vmem:[%s6 + $0x3c] sm:$0xf]
        %v2002 = vld [vmem:[%s13 + $0x4] ss:$0 sm:$0xff]
        %v2019 = vunpack.c.l.b16 %v1986
        %v2020 = vunpack.c.l.b16 %v1987
        %v2021 = vunpack.c.l.b16 %v1988
        %v2022 = vunpack.c.l.b16 %v1989
        %v2023 = vunpack.c.l.b16 %v1990
        %v2024 = vunpack.c.l.b16 %v1991
        %v2025 = vunpack.c.l.b16 %v1992
        %v2026 = vunpack.c.l.b16 %v1993
        %v2027 = vunpack.c.l.b16 %v1994
        %v2028 = vunpack.c.l.b16 %v1995
        %v2029 = vunpack.c.l.b16 %v1996
        %v2030 = vunpack.c.l.b16 %v1997
        %v2031 = vunpack.c.l.b16 %v1998
        %v2032 = vunpack.c.l.b16 %v1999
        %v2033 = vunpack.c.l.b16 %v2000
        %v2034 = vunpack.c.l.b16 %v2001
        %v2035 = vpack.c.b16 %v2020, %v2019
        %v2036 = vpack.c.b16 %v2022, %v2021
        %v2037 = vpack.c.b16 %v2024, %v2023
        %v2038 = vpack.c.b16 %v2026, %v2025
        %v2039 = vpack.c.b16 %v2028, %v2027
        %v2040 = vpack.c.b16 %v2030, %v2029
        %v2041 = vpack.c.b16 %v2032, %v2031
        %v2042 = vpack.c.b16 %v2034, %v2033
        %2051 = vmatpush.bf16.msra.mxu0 %v2042
        %2052 = vmatpush.bf16.msra.mxu0 %v2041
        %2053 = vmatpush.bf16.msra.mxu0 %v2040
        %2054 = vmatpush.bf16.msra.mxu0 %v2039
        %2055 = vmatpush.bf16.msra.mxu0 %v2038
        %2056 = vmatpush.bf16.msra.mxu0 %v2037
        %2057 = vmatpush.bf16.msra.mxu0 %v2036
        %2058 = vmatpush.bf16.msra.mxu0 %v2035
        %2059 = vmatmul.bf16.gmra.mxu0 %v1978
        %v2060 = vpop.f32.mrf.mxu0
        %v2061 = vadd.f32 %v2002, %v2060
        %v2062 = vpop.f32.mrf.mxu0
        %v2063 = vadd.f32 %v2002, %v2062
        %2064 = vmatmul.bf16.gmra.mxu0 %v1979
        %v2065 = vpop.f32.mrf.mxu0
        %v2066 = vadd.f32 %v2002, %v2065
        %v2067 = vpop.f32.mrf.mxu0
        %v2068 = vadd.f32 %v2002, %v2067
        %2069 = vmatmul.bf16.gmra.mxu0 %v1980
        %v2070 = vpop.f32.mrf.mxu0
        %v2071 = vadd.f32 %v2002, %v2070
        %v2072 = vpop.f32.mrf.mxu0
        %v2073 = vadd.f32 %v2002, %v2072
        %2074 = vmatmul.bf16.gmra.mxu0 %v1981
        %v2075 = vpop.f32.mrf.mxu0
        %v2076 = vadd.f32 %v2002, %v2075
        %v2077 = vpop.f32.mrf.mxu0
        %v2078 = vadd.f32 %v2002, %v2077
        %2079 = vmatmul.bf16.gmra.mxu0 %v1982
        %v2080 = vpop.f32.mrf.mxu0
        %v2081 = vadd.f32 %v2002, %v2080
        %v2082 = vpop.f32.mrf.mxu0
        %v2083 = vadd.f32 %v2002, %v2082
        %2084 = vmatmul.bf16.gmra.mxu0 %v1983
        %v2085 = vpop.f32.mrf.mxu0
        %v2086 = vadd.f32 %v2002, %v2085
        %v2087 = vpop.f32.mrf.mxu0
        %v2088 = vadd.f32 %v2002, %v2087
        %2089 = vmatmul.bf16.gmra.mxu0 %v1984
        %v2090 = vpop.f32.mrf.mxu0
        %v2091 = vadd.f32 %v2002, %v2090
        %v2092 = vpop.f32.mrf.mxu0
        %v2093 = vadd.f32 %v2002, %v2092
        %2094 = vmatmul.bf16.gmra.mxu0 %v1985
        %v2095 = vpop.f32.mrf.mxu0
        %v2096 = vadd.f32 %v2002, %v2095
        %v2097 = vpop.f32.mrf.mxu0
        %v2098 = vadd.f32 %v2002, %v2097
        %2099 = vdwg.mxu0
        %v2100 = vmul.f32 %v2061, 0.2
        %v2101 = vmul.f32 %v2063, 0.2
        %v2102 = vmul.f32 %v2066, 0.2
        %v2103 = vmul.f32 %v2068, 0.2
        %v2104 = vmul.f32 %v2071, 0.2
        %v2105 = vmul.f32 %v2073, 0.2
        %v2106 = vmul.f32 %v2076, 0.2
        %v2107 = vmul.f32 %v2078, 0.2
        %v2108 = vmul.f32 %v2081, 0.2
        %v2109 = vmul.f32 %v2083, 0.2
        %v2110 = vmul.f32 %v2086, 0.2
        %v2111 = vmul.f32 %v2088, 0.2
        %v2112 = vmul.f32 %v2091, 0.2
        %v2113 = vmul.f32 %v2093, 0.2
        %v2114 = vmul.f32 %v2096, 0.2
        %v2115 = vmul.f32 %v2098, 0.2
        %v2116 = vmax.f32 %v2061, %v2100
        %v2117 = vmax.f32 %v2063, %v2101
        %v2118 = vmax.f32 %v2066, %v2102
        %v2119 = vmax.f32 %v2068, %v2103
        %v2120 = vmax.f32 %v2071, %v2104
        %v2121 = vmax.f32 %v2073, %v2105
        %v2122 = vmax.f32 %v2076, %v2106
        %v2123 = vmax.f32 %v2078, %v2107
        %v2124 = vmax.f32 %v2081, %v2108
        %v2125 = vmax.f32 %v2083, %v2109
        %v2126 = vmax.f32 %v2086, %v2110
        %v2127 = vmax.f32 %v2088, %v2111
        %v2128 = vmax.f32 %v2091, %v2112
        %v2129 = vmax.f32 %v2093, %v2113
        %v2130 = vmax.f32 %v2096, %v2114
        %v2131 = vmax.f32 %v2098, %v2115
        %v2132 = vpack.c.bf16 %v2117, %v2116
        %v2133 = vpack.c.bf16 %v2119, %v2118
        %v2134 = vpack.c.bf16 %v2121, %v2120
        %v2135 = vpack.c.bf16 %v2123, %v2122
        %v2136 = vpack.c.bf16 %v2125, %v2124
        %v2137 = vpack.c.bf16 %v2127, %v2126
        %v2138 = vpack.c.bf16 %v2129, %v2128
        %v2139 = vpack.c.bf16 %v2131, %v2130
        %v2140 = vld [vmem:[%s7] sm:$0xf]
        %v2141 = vld [vmem:[%s7 + $0x4] sm:$0xf]
        %v2142 = vld [vmem:[%s7 + $0x8] sm:$0xf]
        %v2143 = vld [vmem:[%s7 + $0xc] sm:$0xf]
        %v2144 = vld [vmem:[%s7 + $0x10] sm:$0xf]
        %v2145 = vld [vmem:[%s7 + $0x14] sm:$0xf]
        %v2146 = vld [vmem:[%s7 + $0x18] sm:$0xf]
        %v2147 = vld [vmem:[%s7 + $0x1c] sm:$0xf]
        %v2148 = vld [vmem:[%s13 + $0x5] ss:$0 sm:$0xff]
        %v2157 = vunpack.c.l.b16 %v2140
        %v2158 = vunpack.c.l.b16 %v2141
        %v2159 = vunpack.c.l.b16 %v2142
        %v2160 = vunpack.c.l.b16 %v2143
        %v2161 = vunpack.c.l.b16 %v2144
        %v2162 = vunpack.c.l.b16 %v2145
        %v2163 = vunpack.c.l.b16 %v2146
        %v2164 = vunpack.c.l.b16 %v2147
        %v2165 = vpack.c.b16 %v2158, %v2157
        %v2166 = vpack.c.b16 %v2160, %v2159
        %v2167 = vpack.c.b16 %v2162, %v2161
        %v2168 = vpack.c.b16 %v2164, %v2163
        %vm2173 = vcmask 523264
        %v2175 = vsel %vm2173, %v2132, 0
        %v2178 = vsel %vm2173, %v2133, 0
        %v2181 = vsel %vm2173, %v2134, 0
        %v2184 = vsel %vm2173, %v2135, 0
        %v2187 = vsel %vm2173, %v2136, 0
        %v2190 = vsel %vm2173, %v2137, 0
        %v2193 = vsel %vm2173, %v2138, 0
        %v2196 = vsel %vm2173, %v2139, 0
        %2198 = vmatpush.bf16.msra.mxu0 0
        %2199 = vmatpush.bf16.msra.mxu0 0
        %2200 = vmatpush.bf16.msra.mxu0 0
        %2201 = vmatpush.bf16.msra.mxu0 0
        %2202 = vmatpush.bf16.msra.mxu0 %v2168
        %2203 = vmatpush.bf16.msra.mxu0 %v2167
        %2204 = vmatpush.bf16.msra.mxu0 %v2166
        %2205 = vmatpush.bf16.msra.mxu0 %v2165
        %2206 = vmatmul.bf16.gmra.mxu0 %v2175
        %v2207 = vpop.f32.mrf.mxu0
        %v2208 = vadd.f32 %v2148, %v2207
        %v2209 = vpop.f32.mrf.mxu0
        %v2210 = vadd.f32 %v2148, %v2209
        %2211 = vmatmul.bf16.gmra.mxu0 %v2178
        %v2212 = vpop.f32.mrf.mxu0
        %v2213 = vadd.f32 %v2148, %v2212
        %v2214 = vpop.f32.mrf.mxu0
        %v2215 = vadd.f32 %v2148, %v2214
        %2216 = vmatmul.bf16.gmra.mxu0 %v2181
        %v2217 = vpop.f32.mrf.mxu0
        %v2218 = vadd.f32 %v2148, %v2217
        %v2219 = vpop.f32.mrf.mxu0
        %v2220 = vadd.f32 %v2148, %v2219
        %2221 = vmatmul.bf16.gmra.mxu0 %v2184
        %v2222 = vpop.f32.mrf.mxu0
        %v2223 = vadd.f32 %v2148, %v2222
        %v2224 = vpop.f32.mrf.mxu0
        %v2225 = vadd.f32 %v2148, %v2224
        %2226 = vmatmul.bf16.gmra.mxu0 %v2187
        %v2227 = vpop.f32.mrf.mxu0
        %v2228 = vadd.f32 %v2148, %v2227
        %v2229 = vpop.f32.mrf.mxu0
        %v2230 = vadd.f32 %v2148, %v2229
        %2231 = vmatmul.bf16.gmra.mxu0 %v2190
        %v2232 = vpop.f32.mrf.mxu0
        %v2233 = vadd.f32 %v2148, %v2232
        %v2234 = vpop.f32.mrf.mxu0
        %v2235 = vadd.f32 %v2148, %v2234
        %2236 = vmatmul.bf16.gmra.mxu0 %v2193
        %v2237 = vpop.f32.mrf.mxu0
        %v2238 = vadd.f32 %v2148, %v2237
        %v2239 = vpop.f32.mrf.mxu0
        %v2240 = vadd.f32 %v2148, %v2239
        %2241 = vmatmul.bf16.gmra.mxu0 %v2196
        %v2242 = vpop.f32.mrf.mxu0
        %v2243 = vadd.f32 %v2148, %v2242
        %v2244 = vpop.f32.mrf.mxu0
        %v2245 = vadd.f32 %v2148, %v2244
        %2246 = vdwg.mxu0
        %v2247 = vpack.c.bf16 %v2210, %v2208
        %v2248 = vpack.c.bf16 %v2215, %v2213
        %v2249 = vpack.c.bf16 %v2220, %v2218
        %v2250 = vpack.c.bf16 %v2225, %v2223
        %v2251 = vpack.c.bf16 %v2230, %v2228
        %v2252 = vpack.c.bf16 %v2235, %v2233
        %v2253 = vpack.c.bf16 %v2240, %v2238
        %v2254 = vpack.c.bf16 %v2245, %v2243
        %v2255 = vld [vmem:[%s8] sm:$0xff]
        %v2256 = vld [vmem:[%s522] sm:$0xff]
        %v2257 = vld [vmem:[%s522 + $0x8] sm:$0xff]
        %v2258 = vld [vmem:[%s522 + $0x10] sm:$0xff]
        %v2259 = vld [vmem:[%s522 + $0x18] sm:$0xff]
        %v2260 = vld [vmem:[%s522 + $0x20] sm:$0xff]
        %v2261 = vld [vmem:[%s522 + $0x28] sm:$0xff]
        %v2262 = vld [vmem:[%s522 + $0x30] sm:$0xff]
        %v2263 = vld [vmem:[%s522 + $0x38] sm:$0xff]
        %v2264 = vld [vmem:[%s522 + $0x40] sm:$0xff]
        %v2265 = vld [vmem:[%s522 + $0x48] sm:$0xff]
        %v2266 = vld [vmem:[%s522 + $0x50] sm:$0xff]
        %v2267 = vld [vmem:[%s522 + $0x58] sm:$0xff]
        %v2268 = vld [vmem:[%s522 + $0x60] sm:$0xff]
        %v2269 = vld [vmem:[%s522 + $0x68] sm:$0xff]
        %v2270 = vld [vmem:[%s522 + $0x70] sm:$0xff]
        %v2271 = vld [vmem:[%s522 + $0x78] sm:$0xff]
        %v2272 = vpack.c.bf16 %v2257, %v2256
        %v2273 = vpack.c.bf16 %v2259, %v2258
        %v2274 = vpack.c.bf16 %v2261, %v2260
        %v2275 = vpack.c.bf16 %v2263, %v2262
        %v2276 = vpack.c.bf16 %v2265, %v2264
        %v2277 = vpack.c.bf16 %v2267, %v2266
        %v2278 = vpack.c.bf16 %v2269, %v2268
        %v2279 = vpack.c.bf16 %v2271, %v2270
        %v2280 = vld [vmem:[%s9] sm:$0xff]
        %v2281 = vld [vmem:[%s9 + $0x8] sm:$0xff]
        %v2282 = vld [vmem:[%s9 + $0x10] sm:$0x11]
        %v2286 = vunpack.c.l.b16 %v2280
        %v2287 = vunpack.c.h.b16 %v2280
        %v2288 = vunpack.c.l.b16 %v2281
        %v2289 = vunpack.c.h.b16 %v2281
        %v2290 = vunpack.c.l.b16 %v2282
        %v2291 = vunpack.c.h.b16 %v2282
        %v2292 = vpack.c.b16 %v2288, %v2286
        %v2293 = vpack.c.b16 %v2289, %v2287
        %v2294 = vpack.c.b16 %v2290, %v2290
        %v2295 = vpack.c.b16 %v2291, %v2291
        %vm2298 = vcmask 146432
        %v2300 = vsel %vm2298, %v2272, 0
        %v2303 = vsel %vm2298, %v2273, 0
        %v2306 = vsel %vm2298, %v2274, 0
        %v2309 = vsel %vm2298, %v2275, 0
        %v2312 = vsel %vm2298, %v2276, 0
        %v2315 = vsel %vm2298, %v2277, 0
        %v2318 = vsel %vm2298, %v2278, 0
        %v2321 = vsel %vm2298, %v2279, 0
        %vm2323 = vcmask 1040384
        %v2325 = vsel %vm2323, %v2294, 0
        %v2328 = vsel %vm2323, %v2295, 0
        %2330 = vmatpush.bf16.msra.mxu0 0
        %2331 = vmatpush.bf16.msra.mxu0 0
        %2332 = vmatpush.bf16.msra.mxu0 0
        %2333 = vmatpush.bf16.msra.mxu0 0
        %2334 = vmatpush.bf16.msra.mxu0 0
        %2335 = vmatpush.bf16.msra.mxu0 0
        %2336 = vmatpush.bf16.msra.mxu0 %v2325
        %2337 = vmatpush.bf16.msra.mxu0 %v2292
        %2338 = vmatmul.bf16.gmra.mxu0 %v2300
        %v2339 = vpop.f32.mrf.mxu0
        %v2340 = vadd.f32 0.0, %v2339
        %v2341 = vpop.f32.mrf.mxu0
        %v2342 = vadd.f32 0.0, %v2341
        %2343 = vmatmul.bf16.gmra.mxu0 %v2303
        %v2344 = vpop.f32.mrf.mxu0
        %v2345 = vadd.f32 0.0, %v2344
        %v2346 = vpop.f32.mrf.mxu0
        %v2347 = vadd.f32 0.0, %v2346
        %2348 = vmatmul.bf16.gmra.mxu0 %v2306
        %v2349 = vpop.f32.mrf.mxu0
        %v2350 = vadd.f32 0.0, %v2349
        %v2351 = vpop.f32.mrf.mxu0
        %v2352 = vadd.f32 0.0, %v2351
        %2353 = vmatmul.bf16.gmra.mxu0 %v2309
        %v2354 = vpop.f32.mrf.mxu0
        %v2355 = vadd.f32 0.0, %v2354
        %v2356 = vpop.f32.mrf.mxu0
        %v2357 = vadd.f32 0.0, %v2356
        %2358 = vmatmul.bf16.gmra.mxu0 %v2312
        %v2359 = vpop.f32.mrf.mxu0
        %v2360 = vadd.f32 0.0, %v2359
        %v2361 = vpop.f32.mrf.mxu0
        %v2362 = vadd.f32 0.0, %v2361
        %2363 = vmatmul.bf16.gmra.mxu0 %v2315
        %v2364 = vpop.f32.mrf.mxu0
        %v2365 = vadd.f32 0.0, %v2364
        %v2366 = vpop.f32.mrf.mxu0
        %v2367 = vadd.f32 0.0, %v2366
        %2368 = vmatmul.bf16.gmra.mxu0 %v2318
        %v2369 = vpop.f32.mrf.mxu0
        %v2370 = vadd.f32 0.0, %v2369
        %v2371 = vpop.f32.mrf.mxu0
        %v2372 = vadd.f32 0.0, %v2371
        %2373 = vmatmul.bf16.gmra.mxu0 %v2321
        %v2374 = vpop.f32.mrf.mxu0
        %v2375 = vadd.f32 0.0, %v2374
        %v2376 = vpop.f32.mrf.mxu0
        %v2377 = vadd.f32 0.0, %v2376
        %2378 = vdwg.mxu0
        %2379 = vmatpush.bf16.msra.mxu0 0
        %2380 = vmatpush.bf16.msra.mxu0 0
        %2381 = vmatpush.bf16.msra.mxu0 0
        %2382 = vmatpush.bf16.msra.mxu0 0
        %2383 = vmatpush.bf16.msra.mxu0 0
        %2384 = vmatpush.bf16.msra.mxu0 0
        %2385 = vmatpush.bf16.msra.mxu0 %v2328
        %2386 = vmatpush.bf16.msra.mxu0 %v2293
        %2387 = vmatmul.bf16.gmra.mxu0 %v2300
        %v2388 = vpop.f32.mrf.mxu0
        %v2389 = vadd.f32 0.0, %v2388
        %v2390 = vpop.f32.mrf.mxu0
        %v2391 = vadd.f32 0.0, %v2390
        %2392 = vmatmul.bf16.gmra.mxu0 %v2303
        %v2393 = vpop.f32.mrf.mxu0
        %v2394 = vadd.f32 0.0, %v2393
        %v2395 = vpop.f32.mrf.mxu0
        %v2396 = vadd.f32 0.0, %v2395
        %2397 = vmatmul.bf16.gmra.mxu0 %v2306
        %v2398 = vpop.f32.mrf.mxu0
        %v2399 = vadd.f32 0.0, %v2398
        %v2400 = vpop.f32.mrf.mxu0
        %v2401 = vadd.f32 0.0, %v2400
        %2402 = vmatmul.bf16.gmra.mxu0 %v2309
        %v2403 = vpop.f32.mrf.mxu0
        %v2404 = vadd.f32 0.0, %v2403
        %v2405 = vpop.f32.mrf.mxu0
        %v2406 = vadd.f32 0.0, %v2405
        %2407 = vmatmul.bf16.gmra.mxu0 %v2312
        %v2408 = vpop.f32.mrf.mxu0
        %v2409 = vadd.f32 0.0, %v2408
        %v2410 = vpop.f32.mrf.mxu0
        %v2411 = vadd.f32 0.0, %v2410
        %2412 = vmatmul.bf16.gmra.mxu0 %v2315
        %v2413 = vpop.f32.mrf.mxu0
        %v2414 = vadd.f32 0.0, %v2413
        %v2415 = vpop.f32.mrf.mxu0
        %v2416 = vadd.f32 0.0, %v2415
        %2417 = vmatmul.bf16.gmra.mxu0 %v2318
        %v2418 = vpop.f32.mrf.mxu0
        %v2419 = vadd.f32 0.0, %v2418
        %v2420 = vpop.f32.mrf.mxu0
        %v2421 = vadd.f32 0.0, %v2420
        %2422 = vmatmul.bf16.gmra.mxu0 %v2321
        %v2423 = vpop.f32.mrf.mxu0
        %v2424 = vadd.f32 0.0, %v2423
        %v2425 = vpop.f32.mrf.mxu0
        %v2426 = vadd.f32 0.0, %v2425
        %2427 = vdwg.mxu0
        %v2429 = vunpack.c.l.b16 %v2255
        %v2430 = vunpack.c.h.b16 %v2255
        %v2431 = vpack.c.b16 %v2429, %v2429
        %v2432 = vpack.c.b16 %v2430, %v2430
        %vm2433 = vcmask 64512
        %v2435 = vsel %vm2433, %v2247, 0
        %v2438 = vsel %vm2433, %v2248, 0
        %v2441 = vsel %vm2433, %v2249, 0
        %v2444 = vsel %vm2433, %v2250, 0
        %v2447 = vsel %vm2433, %v2251, 0
        %v2450 = vsel %vm2433, %v2252, 0
        %v2453 = vsel %vm2433, %v2253, 0
        %v2456 = vsel %vm2433, %v2254, 0
        %vm2458 = vcmask 1043456
        %v2460 = vsel %vm2458, %v2431, 0
        %v2463 = vsel %vm2458, %v2432, 0
        %2465 = vmatpush.bf16.msra.mxu0 0
        %2466 = vmatpush.bf16.msra.mxu0 0
        %2467 = vmatpush.bf16.msra.mxu0 0
        %2468 = vmatpush.bf16.msra.mxu0 0
        %2469 = vmatpush.bf16.msra.mxu0 0
        %2470 = vmatpush.bf16.msra.mxu0 0
        %2471 = vmatpush.bf16.msra.mxu0 0
        %2472 = vmatpush.bf16.msra.mxu0 %v2460
        %2473 = vmatmul.bf16.gmra.mxu0 %v2435
        %v2474 = vpop.f32.mrf.mxu0
        %v2475 = vadd.f32 %v2340, %v2474
        %v2476 = vpop.f32.mrf.mxu0
        %v2477 = vadd.f32 %v2342, %v2476
        %2478 = vmatmul.bf16.gmra.mxu0 %v2438
        %v2479 = vpop.f32.mrf.mxu0
        %v2480 = vadd.f32 %v2345, %v2479
        %v2481 = vpop.f32.mrf.mxu0
        %v2482 = vadd.f32 %v2347, %v2481
        %2483 = vmatmul.bf16.gmra.mxu0 %v2441
        %v2484 = vpop.f32.mrf.mxu0
        %v2485 = vadd.f32 %v2350, %v2484
        %v2486 = vpop.f32.mrf.mxu0
        %v2487 = vadd.f32 %v2352, %v2486
        %2488 = vmatmul.bf16.gmra.mxu0 %v2444
        %v2489 = vpop.f32.mrf.mxu0
        %v2490 = vadd.f32 %v2355, %v2489
        %v2491 = vpop.f32.mrf.mxu0
        %v2492 = vadd.f32 %v2357, %v2491
        %2493 = vmatmul.bf16.gmra.mxu0 %v2447
        %v2494 = vpop.f32.mrf.mxu0
        %v2495 = vadd.f32 %v2360, %v2494
        %v2496 = vpop.f32.mrf.mxu0
        %v2497 = vadd.f32 %v2362, %v2496
        %2498 = vmatmul.bf16.gmra.mxu0 %v2450
        %v2499 = vpop.f32.mrf.mxu0
        %v2500 = vadd.f32 %v2365, %v2499
        %v2501 = vpop.f32.mrf.mxu0
        %v2502 = vadd.f32 %v2367, %v2501
        %2503 = vmatmul.bf16.gmra.mxu0 %v2453
        %v2504 = vpop.f32.mrf.mxu0
        %v2505 = vadd.f32 %v2370, %v2504
        %v2506 = vpop.f32.mrf.mxu0
        %v2507 = vadd.f32 %v2372, %v2506
        %2508 = vmatmul.bf16.gmra.mxu0 %v2456
        %v2509 = vpop.f32.mrf.mxu0
        %v2510 = vadd.f32 %v2375, %v2509
        %v2511 = vpop.f32.mrf.mxu0
        %v2512 = vadd.f32 %v2377, %v2511
        %2513 = vdwg.mxu0
        %2514 = vmatpush.bf16.msra.mxu0 0
        %2515 = vmatpush.bf16.msra.mxu0 0
        %2516 = vmatpush.bf16.msra.mxu0 0
        %2517 = vmatpush.bf16.msra.mxu0 0
        %2518 = vmatpush.bf16.msra.mxu0 0
        %2519 = vmatpush.bf16.msra.mxu0 0
        %2520 = vmatpush.bf16.msra.mxu0 0
        %2521 = vmatpush.bf16.msra.mxu0 %v2463
        %2522 = vmatmul.bf16.gmra.mxu0 %v2435
        %v2523 = vpop.f32.mrf.mxu0
        %v2524 = vadd.f32 %v2389, %v2523
        %v2525 = vpop.f32.mrf.mxu0
        %v2526 = vadd.f32 %v2391, %v2525
        %2527 = vmatmul.bf16.gmra.mxu0 %v2438
        %v2528 = vpop.f32.mrf.mxu0
        %v2529 = vadd.f32 %v2394, %v2528
        %v2530 = vpop.f32.mrf.mxu0
        %v2531 = vadd.f32 %v2396, %v2530
        %2532 = vmatmul.bf16.gmra.mxu0 %v2441
        %v2533 = vpop.f32.mrf.mxu0
        %v2534 = vadd.f32 %v2399, %v2533
        %v2535 = vpop.f32.mrf.mxu0
        %v2536 = vadd.f32 %v2401, %v2535
        %2537 = vmatmul.bf16.gmra.mxu0 %v2444
        %v2538 = vpop.f32.mrf.mxu0
        %v2539 = vadd.f32 %v2404, %v2538
        %v2540 = vpop.f32.mrf.mxu0
        %v2541 = vadd.f32 %v2406, %v2540
        %2542 = vmatmul.bf16.gmra.mxu0 %v2447
        %v2543 = vpop.f32.mrf.mxu0
        %v2544 = vadd.f32 %v2409, %v2543
        %v2545 = vpop.f32.mrf.mxu0
        %v2546 = vadd.f32 %v2411, %v2545
        %2547 = vmatmul.bf16.gmra.mxu0 %v2450
        %v2548 = vpop.f32.mrf.mxu0
        %v2549 = vadd.f32 %v2414, %v2548
        %v2550 = vpop.f32.mrf.mxu0
        %v2551 = vadd.f32 %v2416, %v2550
        %2552 = vmatmul.bf16.gmra.mxu0 %v2453
        %v2553 = vpop.f32.mrf.mxu0
        %v2554 = vadd.f32 %v2419, %v2553
        %v2555 = vpop.f32.mrf.mxu0
        %v2556 = vadd.f32 %v2421, %v2555
        %2557 = vmatmul.bf16.gmra.mxu0 %v2456
        %v2558 = vpop.f32.mrf.mxu0
        %v2559 = vadd.f32 %v2424, %v2558
        %v2560 = vpop.f32.mrf.mxu0
        %v2561 = vadd.f32 %v2426, %v2560
        %2562 = vdwg.mxu0
        %s2563 = scalar_lea.vmem %s13, 6
        %v2564 = vld [vmem:[%s2563] ss:$8 sm:$0x3]
        %v2566 = vperm.slane %v2564, 0
        %v2567 = vperm.slane %v2564, 1
        %v2570 = vadd.f32 %v2475, %v2566
        %v2571 = vadd.f32 %v2524, %v2567
        %v2572 = vadd.f32 %v2477, %v2566
        %v2573 = vadd.f32 %v2526, %v2567
        %v2574 = vadd.f32 %v2480, %v2566
        %v2575 = vadd.f32 %v2529, %v2567
        %v2576 = vadd.f32 %v2482, %v2566
        %v2577 = vadd.f32 %v2531, %v2567
        %v2578 = vadd.f32 %v2485, %v2566
        %v2579 = vadd.f32 %v2534, %v2567
        %v2580 = vadd.f32 %v2487, %v2566
        %v2581 = vadd.f32 %v2536, %v2567
        %v2582 = vadd.f32 %v2490, %v2566
        %v2583 = vadd.f32 %v2539, %v2567
        %v2584 = vadd.f32 %v2492, %v2566
        %v2585 = vadd.f32 %v2541, %v2567
        %v2586 = vadd.f32 %v2495, %v2566
        %v2587 = vadd.f32 %v2544, %v2567
        %v2588 = vadd.f32 %v2497, %v2566
        %v2589 = vadd.f32 %v2546, %v2567
        %v2590 = vadd.f32 %v2500, %v2566
        %v2591 = vadd.f32 %v2549, %v2567
        %v2592 = vadd.f32 %v2502, %v2566
        %v2593 = vadd.f32 %v2551, %v2567
        %v2594 = vadd.f32 %v2505, %v2566
        %v2595 = vadd.f32 %v2554, %v2567
        %v2596 = vadd.f32 %v2507, %v2566
        %v2597 = vadd.f32 %v2556, %v2567
        %v2598 = vadd.f32 %v2510, %v2566
        %v2599 = vadd.f32 %v2559, %v2567
        %v2600 = vadd.f32 %v2512, %v2566
        %v2601 = vadd.f32 %v2561, %v2567
        %v2602 = vmax.f32 %v2570, 0.0
        %v2603 = vmax.f32 %v2571, 0.0
        %v2604 = vmax.f32 %v2572, 0.0
        %v2605 = vmax.f32 %v2573, 0.0
        %v2606 = vmax.f32 %v2574, 0.0
        %v2607 = vmax.f32 %v2575, 0.0
        %v2608 = vmax.f32 %v2576, 0.0
        %v2609 = vmax.f32 %v2577, 0.0
        %v2610 = vmax.f32 %v2578, 0.0
        %v2611 = vmax.f32 %v2579, 0.0
        %v2612 = vmax.f32 %v2580, 0.0
        %v2613 = vmax.f32 %v2581, 0.0
        %v2614 = vmax.f32 %v2582, 0.0
        %v2615 = vmax.f32 %v2583, 0.0
        %v2616 = vmax.f32 %v2584, 0.0
        %v2617 = vmax.f32 %v2585, 0.0
        %v2618 = vmax.f32 %v2586, 0.0
        %v2619 = vmax.f32 %v2587, 0.0
        %v2620 = vmax.f32 %v2588, 0.0
        %v2621 = vmax.f32 %v2589, 0.0
        %v2622 = vmax.f32 %v2590, 0.0
        %v2623 = vmax.f32 %v2591, 0.0
        %v2624 = vmax.f32 %v2592, 0.0
        %v2625 = vmax.f32 %v2593, 0.0
        %v2626 = vmax.f32 %v2594, 0.0
        %v2627 = vmax.f32 %v2595, 0.0
        %v2628 = vmax.f32 %v2596, 0.0
        %v2629 = vmax.f32 %v2597, 0.0
        %v2630 = vmax.f32 %v2598, 0.0
        %v2631 = vmax.f32 %v2599, 0.0
        %v2632 = vmax.f32 %v2600, 0.0
        %v2633 = vmax.f32 %v2601, 0.0
        %v2634 = vpack.c.bf16 %v2604, %v2602
        %v2635 = vpack.c.bf16 %v2605, %v2603
        %v2636 = vpack.c.bf16 %v2608, %v2606
        %v2637 = vpack.c.bf16 %v2609, %v2607
        %v2638 = vpack.c.bf16 %v2612, %v2610
        %v2639 = vpack.c.bf16 %v2613, %v2611
        %v2640 = vpack.c.bf16 %v2616, %v2614
        %v2641 = vpack.c.bf16 %v2617, %v2615
        %v2642 = vpack.c.bf16 %v2620, %v2618
        %v2643 = vpack.c.bf16 %v2621, %v2619
        %v2644 = vpack.c.bf16 %v2624, %v2622
        %v2645 = vpack.c.bf16 %v2625, %v2623
        %v2646 = vpack.c.bf16 %v2628, %v2626
        %v2647 = vpack.c.bf16 %v2629, %v2627
        %v2648 = vpack.c.bf16 %v2632, %v2630
        %v2649 = vpack.c.bf16 %v2633, %v2631
        %v2650 = vld [vmem:[#allocation5] sm:$0xf]
        %v2651 = vld [vmem:[#allocation5 + $0x4] sm:$0xf]
        %v2652 = vld [vmem:[#allocation5 + $0x8] sm:$0xf]
        %v2653 = vld [vmem:[#allocation5 + $0xc] sm:$0xf]
        %v2654 = vld [vmem:[#allocation5 + $0x10] sm:$0xf]
        %v2655 = vld [vmem:[#allocation5 + $0x14] sm:$0xf]
        %v2656 = vld [vmem:[#allocation5 + $0x18] sm:$0xf]
        %v2657 = vld [vmem:[#allocation5 + $0x1c] sm:$0xf]
        %v2658 = vld [vmem:[#allocation5 + $0x20] sm:$0xf]
        %v2659 = vld [vmem:[#allocation5 + $0x24] sm:$0xf]
        %v2660 = vld [vmem:[#allocation5 + $0x28] sm:$0xf]
        %v2661 = vld [vmem:[#allocation5 + $0x2c] sm:$0xf]
        %v2662 = vld [vmem:[#allocation5 + $0x30] sm:$0xf]
        %v2663 = vld [vmem:[#allocation5 + $0x34] sm:$0xf]
        %v2664 = vld [vmem:[#allocation5 + $0x38] sm:$0xf]
        %v2665 = vld [vmem:[#allocation5 + $0x3c] sm:$0xf]
        %v2666 = vld [vmem:[#allocation5 + $0x40] sm:$0xf]
        %v2667 = vld [vmem:[#allocation5 + $0x44] sm:$0xf]
        %v2668 = vld [vmem:[#allocation5 + $0x48] sm:$0xf]
        %v2669 = vld [vmem:[#allocation5 + $0x4c] sm:$0xf]
        %v2670 = vld [vmem:[#allocation5 + $0x50] sm:$0xf]
        %v2671 = vld [vmem:[#allocation5 + $0x54] sm:$0xf]
        %v2672 = vld [vmem:[#allocation5 + $0x58] sm:$0xf]
        %v2673 = vld [vmem:[#allocation5 + $0x5c] sm:$0xf]
        %v2674 = vld [vmem:[#allocation5 + $0x60] sm:$0xf]
        %v2675 = vld [vmem:[#allocation5 + $0x64] sm:$0xf]
        %v2676 = vld [vmem:[#allocation5 + $0x68] sm:$0xf]
        %v2677 = vld [vmem:[#allocation5 + $0x6c] sm:$0xf]
        %v2678 = vld [vmem:[#allocation5 + $0x70] sm:$0xf]
        %v2679 = vld [vmem:[#allocation5 + $0x74] sm:$0xf]
        %v2680 = vld [vmem:[#allocation5 + $0x78] sm:$0xf]
        %v2681 = vld [vmem:[#allocation5 + $0x7c] sm:$0xf]
        %v2682 = vld [vmem:[%s13 + $0x7] ss:$0 sm:$0xff]
        %v2715 = vunpack.c.l.b16 %v2650
        %v2716 = vunpack.c.l.b16 %v2651
        %v2717 = vunpack.c.l.b16 %v2652
        %v2718 = vunpack.c.l.b16 %v2653
        %v2719 = vunpack.c.l.b16 %v2654
        %v2720 = vunpack.c.l.b16 %v2655
        %v2721 = vunpack.c.l.b16 %v2656
        %v2722 = vunpack.c.l.b16 %v2657
        %v2723 = vunpack.c.l.b16 %v2658
        %v2724 = vunpack.c.l.b16 %v2659
        %v2725 = vunpack.c.l.b16 %v2660
        %v2726 = vunpack.c.l.b16 %v2661
        %v2727 = vunpack.c.l.b16 %v2662
        %v2728 = vunpack.c.l.b16 %v2663
        %v2729 = vunpack.c.l.b16 %v2664
        %v2730 = vunpack.c.l.b16 %v2665
        %v2731 = vunpack.c.l.b16 %v2666
        %v2732 = vunpack.c.l.b16 %v2667
        %v2733 = vunpack.c.l.b16 %v2668
        %v2734 = vunpack.c.l.b16 %v2669
        %v2735 = vunpack.c.l.b16 %v2670
        %v2736 = vunpack.c.l.b16 %v2671
        %v2737 = vunpack.c.l.b16 %v2672
        %v2738 = vunpack.c.l.b16 %v2673
        %v2739 = vunpack.c.l.b16 %v2674
        %v2740 = vunpack.c.l.b16 %v2675
        %v2741 = vunpack.c.l.b16 %v2676
        %v2742 = vunpack.c.l.b16 %v2677
        %v2743 = vunpack.c.l.b16 %v2678
        %v2744 = vunpack.c.l.b16 %v2679
        %v2745 = vunpack.c.l.b16 %v2680
        %v2746 = vunpack.c.l.b16 %v2681
        %v2747 = vpack.c.b16 %v2716, %v2715
        %v2748 = vpack.c.b16 %v2718, %v2717
        %v2749 = vpack.c.b16 %v2720, %v2719
        %v2750 = vpack.c.b16 %v2722, %v2721
        %v2751 = vpack.c.b16 %v2724, %v2723
        %v2752 = vpack.c.b16 %v2726, %v2725
        %v2753 = vpack.c.b16 %v2728, %v2727
        %v2754 = vpack.c.b16 %v2730, %v2729
        %v2755 = vpack.c.b16 %v2732, %v2731
        %v2756 = vpack.c.b16 %v2734, %v2733
        %v2757 = vpack.c.b16 %v2736, %v2735
        %v2758 = vpack.c.b16 %v2738, %v2737
        %v2759 = vpack.c.b16 %v2740, %v2739
        %v2760 = vpack.c.b16 %v2742, %v2741
        %v2761 = vpack.c.b16 %v2744, %v2743
        %v2762 = vpack.c.b16 %v2746, %v2745
        %2779 = vmatpush.bf16.msra.mxu0 %v2754
        %2780 = vmatpush.bf16.msra.mxu0 %v2753
        %2781 = vmatpush.bf16.msra.mxu0 %v2752
        %2782 = vmatpush.bf16.msra.mxu0 %v2751
        %2783 = vmatpush.bf16.msra.mxu0 %v2750
        %2784 = vmatpush.bf16.msra.mxu0 %v2749
        %2785 = vmatpush.bf16.msra.mxu0 %v2748
        %2786 = vmatpush.bf16.msra.mxu0 %v2747
        %2787 = vmatmul.bf16.gmra.mxu0 %v2634
        %v2788 = vpop.f32.mrf.mxu0
        %v2789 = vadd.f32 %v2682, %v2788
        %v2790 = vpop.f32.mrf.mxu0
        %v2791 = vadd.f32 %v2682, %v2790
        %2792 = vmatmul.bf16.gmra.mxu0 %v2636
        %v2793 = vpop.f32.mrf.mxu0
        %v2794 = vadd.f32 %v2682, %v2793
        %v2795 = vpop.f32.mrf.mxu0
        %v2796 = vadd.f32 %v2682, %v2795
        %2797 = vmatmul.bf16.gmra.mxu0 %v2638
        %v2798 = vpop.f32.mrf.mxu0
        %v2799 = vadd.f32 %v2682, %v2798
        %v2800 = vpop.f32.mrf.mxu0
        %v2801 = vadd.f32 %v2682, %v2800
        %2802 = vmatmul.bf16.gmra.mxu0 %v2640
        %v2803 = vpop.f32.mrf.mxu0
        %v2804 = vadd.f32 %v2682, %v2803
        %v2805 = vpop.f32.mrf.mxu0
        %v2806 = vadd.f32 %v2682, %v2805
        %2807 = vmatmul.bf16.gmra.mxu0 %v2642
        %v2808 = vpop.f32.mrf.mxu0
        %v2809 = vadd.f32 %v2682, %v2808
        %v2810 = vpop.f32.mrf.mxu0
        %v2811 = vadd.f32 %v2682, %v2810
        %2812 = vmatmul.bf16.gmra.mxu0 %v2644
        %v2813 = vpop.f32.mrf.mxu0
        %v2814 = vadd.f32 %v2682, %v2813
        %v2815 = vpop.f32.mrf.mxu0
        %v2816 = vadd.f32 %v2682, %v2815
        %2817 = vmatmul.bf16.gmra.mxu0 %v2646
        %v2818 = vpop.f32.mrf.mxu0
        %v2819 = vadd.f32 %v2682, %v2818
        %v2820 = vpop.f32.mrf.mxu0
        %v2821 = vadd.f32 %v2682, %v2820
        %2822 = vmatmul.bf16.gmra.mxu0 %v2648
        %v2823 = vpop.f32.mrf.mxu0
        %v2824 = vadd.f32 %v2682, %v2823
        %v2825 = vpop.f32.mrf.mxu0
        %v2826 = vadd.f32 %v2682, %v2825
        %2827 = vdwg.mxu0
        %2828 = vmatpush.bf16.msra.mxu0 %v2762
        %2829 = vmatpush.bf16.msra.mxu0 %v2761
        %2830 = vmatpush.bf16.msra.mxu0 %v2760
        %2831 = vmatpush.bf16.msra.mxu0 %v2759
        %2832 = vmatpush.bf16.msra.mxu0 %v2758
        %2833 = vmatpush.bf16.msra.mxu0 %v2757
        %2834 = vmatpush.bf16.msra.mxu0 %v2756
        %2835 = vmatpush.bf16.msra.mxu0 %v2755
        %2836 = vmatmul.bf16.gmra.mxu0 %v2635
        %v2837 = vpop.f32.mrf.mxu0
        %v2838 = vadd.f32 %v2789, %v2837
        %v2839 = vpop.f32.mrf.mxu0
        %v2840 = vadd.f32 %v2791, %v2839
        %2841 = vmatmul.bf16.gmra.mxu0 %v2637
        %v2842 = vpop.f32.mrf.mxu0
        %v2843 = vadd.f32 %v2794, %v2842
        %v2844 = vpop.f32.mrf.mxu0
        %v2845 = vadd.f32 %v2796, %v2844
        %2846 = vmatmul.bf16.gmra.mxu0 %v2639
        %v2847 = vpop.f32.mrf.mxu0
        %v2848 = vadd.f32 %v2799, %v2847
        %v2849 = vpop.f32.mrf.mxu0
        %v2850 = vadd.f32 %v2801, %v2849
        %2851 = vmatmul.bf16.gmra.mxu0 %v2641
        %v2852 = vpop.f32.mrf.mxu0
        %v2853 = vadd.f32 %v2804, %v2852
        %v2854 = vpop.f32.mrf.mxu0
        %v2855 = vadd.f32 %v2806, %v2854
        %2856 = vmatmul.bf16.gmra.mxu0 %v2643
        %v2857 = vpop.f32.mrf.mxu0
        %v2858 = vadd.f32 %v2809, %v2857
        %v2859 = vpop.f32.mrf.mxu0
        %v2860 = vadd.f32 %v2811, %v2859
        %2861 = vmatmul.bf16.gmra.mxu0 %v2645
        %v2862 = vpop.f32.mrf.mxu0
        %v2863 = vadd.f32 %v2814, %v2862
        %v2864 = vpop.f32.mrf.mxu0
        %v2865 = vadd.f32 %v2816, %v2864
        %2866 = vmatmul.bf16.gmra.mxu0 %v2647
        %v2867 = vpop.f32.mrf.mxu0
        %v2868 = vadd.f32 %v2819, %v2867
        %v2869 = vpop.f32.mrf.mxu0
        %v2870 = vadd.f32 %v2821, %v2869
        %2871 = vmatmul.bf16.gmra.mxu0 %v2649
        %v2872 = vpop.f32.mrf.mxu0
        %v2873 = vadd.f32 %v2824, %v2872
        %v2874 = vpop.f32.mrf.mxu0
        %v2875 = vadd.f32 %v2826, %v2874
        %2876 = vdwg.mxu0
        %v2877 = vmax.f32 %v2838, 0.0
        %v2878 = vmax.f32 %v2840, 0.0
        %v2879 = vmax.f32 %v2843, 0.0
        %v2880 = vmax.f32 %v2845, 0.0
        %v2881 = vmax.f32 %v2848, 0.0
        %v2882 = vmax.f32 %v2850, 0.0
        %v2883 = vmax.f32 %v2853, 0.0
        %v2884 = vmax.f32 %v2855, 0.0
        %v2885 = vmax.f32 %v2858, 0.0
        %v2886 = vmax.f32 %v2860, 0.0
        %v2887 = vmax.f32 %v2863, 0.0
        %v2888 = vmax.f32 %v2865, 0.0
        %v2889 = vmax.f32 %v2868, 0.0
        %v2890 = vmax.f32 %v2870, 0.0
        %v2891 = vmax.f32 %v2873, 0.0
        %v2892 = vmax.f32 %v2875, 0.0
        %v2893 = vpack.c.bf16 %v2878, %v2877
        %v2894 = vpack.c.bf16 %v2880, %v2879
        %v2895 = vpack.c.bf16 %v2882, %v2881
        %v2896 = vpack.c.bf16 %v2884, %v2883
        %v2897 = vpack.c.bf16 %v2886, %v2885
        %v2898 = vpack.c.bf16 %v2888, %v2887
        %v2899 = vpack.c.bf16 %v2890, %v2889
        %v2900 = vpack.c.bf16 %v2892, %v2891
        %v2901 = vld [vmem:[%s11] sm:$0xf]
        %v2902 = vld [vmem:[%s11 + $0x4] sm:$0xf]
        %v2903 = vld [vmem:[%s11 + $0x8] sm:$0xf]
        %v2904 = vld [vmem:[%s11 + $0xc] sm:$0xf]
        %v2905 = vld [vmem:[%s11 + $0x10] sm:$0xf]
        %v2906 = vld [vmem:[%s11 + $0x14] sm:$0xf]
        %v2907 = vld [vmem:[%s11 + $0x18] sm:$0xf]
        %v2908 = vld [vmem:[%s11 + $0x1c] sm:$0xf]
        %v2909 = vld [vmem:[%s11 + $0x20] sm:$0xf]
        %v2910 = vld [vmem:[%s11 + $0x24] sm:$0xf]
        %v2911 = vld [vmem:[%s11 + $0x28] sm:$0xf]
        %v2912 = vld [vmem:[%s11 + $0x2c] sm:$0xf]
        %v2913 = vld [vmem:[%s11 + $0x30] sm:$0xf]
        %v2914 = vld [vmem:[%s11 + $0x34] sm:$0xf]
        %v2915 = vld [vmem:[%s11 + $0x38] sm:$0xf]
        %v2916 = vld [vmem:[%s11 + $0x3c] sm:$0xf]
        %v2917 = vld [vmem:[%s13 + $0x10] ss:$0 sm:$0xff]
        %v2934 = vunpack.c.l.b16 %v2901
        %v2935 = vunpack.c.l.b16 %v2902
        %v2936 = vunpack.c.l.b16 %v2903
        %v2937 = vunpack.c.l.b16 %v2904
        %v2938 = vunpack.c.l.b16 %v2905
        %v2939 = vunpack.c.l.b16 %v2906
        %v2940 = vunpack.c.l.b16 %v2907
        %v2941 = vunpack.c.l.b16 %v2908
        %v2942 = vunpack.c.l.b16 %v2909
        %v2943 = vunpack.c.l.b16 %v2910
        %v2944 = vunpack.c.l.b16 %v2911
        %v2945 = vunpack.c.l.b16 %v2912
        %v2946 = vunpack.c.l.b16 %v2913
        %v2947 = vunpack.c.l.b16 %v2914
        %v2948 = vunpack.c.l.b16 %v2915
        %v2949 = vunpack.c.l.b16 %v2916
        %v2950 = vpack.c.b16 %v2935, %v2934
        %v2951 = vpack.c.b16 %v2937, %v2936
        %v2952 = vpack.c.b16 %v2939, %v2938
        %v2953 = vpack.c.b16 %v2941, %v2940
        %v2954 = vpack.c.b16 %v2943, %v2942
        %v2955 = vpack.c.b16 %v2945, %v2944
        %v2956 = vpack.c.b16 %v2947, %v2946
        %v2957 = vpack.c.b16 %v2949, %v2948
        %2966 = vmatpush.bf16.msra.mxu0 %v2957
        %2967 = vmatpush.bf16.msra.mxu0 %v2956
        %2968 = vmatpush.bf16.msra.mxu0 %v2955
        %2969 = vmatpush.bf16.msra.mxu0 %v2954
        %2970 = vmatpush.bf16.msra.mxu0 %v2953
        %2971 = vmatpush.bf16.msra.mxu0 %v2952
        %2972 = vmatpush.bf16.msra.mxu0 %v2951
        %2973 = vmatpush.bf16.msra.mxu0 %v2950
        %2974 = vmatmul.bf16.gmra.mxu0 %v2893
        %v2975 = vpop.f32.mrf.mxu0
        %v2976 = vadd.f32 %v2917, %v2975
        %v2977 = vpop.f32.mrf.mxu0
        %v2978 = vadd.f32 %v2917, %v2977
        %2979 = vmatmul.bf16.gmra.mxu0 %v2894
        %v2980 = vpop.f32.mrf.mxu0
        %v2981 = vadd.f32 %v2917, %v2980
        %v2982 = vpop.f32.mrf.mxu0
        %v2983 = vadd.f32 %v2917, %v2982
        %2984 = vmatmul.bf16.gmra.mxu0 %v2895
        %v2985 = vpop.f32.mrf.mxu0
        %v2986 = vadd.f32 %v2917, %v2985
        %v2987 = vpop.f32.mrf.mxu0
        %v2988 = vadd.f32 %v2917, %v2987
        %2989 = vmatmul.bf16.gmra.mxu0 %v2896
        %v2990 = vpop.f32.mrf.mxu0
        %v2991 = vadd.f32 %v2917, %v2990
        %v2992 = vpop.f32.mrf.mxu0
        %v2993 = vadd.f32 %v2917, %v2992
        %2994 = vmatmul.bf16.gmra.mxu0 %v2897
        %v2995 = vpop.f32.mrf.mxu0
        %v2996 = vadd.f32 %v2917, %v2995
        %v2997 = vpop.f32.mrf.mxu0
        %v2998 = vadd.f32 %v2917, %v2997
        %2999 = vmatmul.bf16.gmra.mxu0 %v2898
        %v3000 = vpop.f32.mrf.mxu0
        %v3001 = vadd.f32 %v2917, %v3000
        %v3002 = vpop.f32.mrf.mxu0
        %v3003 = vadd.f32 %v2917, %v3002
        %3004 = vmatmul.bf16.gmra.mxu0 %v2899
        %v3005 = vpop.f32.mrf.mxu0
        %v3006 = vadd.f32 %v2917, %v3005
        %v3007 = vpop.f32.mrf.mxu0
        %v3008 = vadd.f32 %v2917, %v3007
        %3009 = vmatmul.bf16.gmra.mxu0 %v2900
        %v3010 = vpop.f32.mrf.mxu0
        %v3011 = vadd.f32 %v2917, %v3010
        %v3012 = vpop.f32.mrf.mxu0
        %v3013 = vadd.f32 %v2917, %v3012
        %3014 = vdwg.mxu0
        %v3015 = vmax.f32 %v2976, 0.0
        %v3016 = vmax.f32 %v2978, 0.0
        %v3017 = vmax.f32 %v2981, 0.0
        %v3018 = vmax.f32 %v2983, 0.0
        %v3019 = vmax.f32 %v2986, 0.0
        %v3020 = vmax.f32 %v2988, 0.0
        %v3021 = vmax.f32 %v2991, 0.0
        %v3022 = vmax.f32 %v2993, 0.0
        %v3023 = vmax.f32 %v2996, 0.0
        %v3024 = vmax.f32 %v2998, 0.0
        %v3025 = vmax.f32 %v3001, 0.0
        %v3026 = vmax.f32 %v3003, 0.0
        %v3027 = vmax.f32 %v3006, 0.0
        %v3028 = vmax.f32 %v3008, 0.0
        %v3029 = vmax.f32 %v3011, 0.0
        %v3030 = vmax.f32 %v3013, 0.0
        %v3031 = vpack.c.bf16 %v3016, %v3015
        %v3032 = vpack.c.bf16 %v3018, %v3017
        %v3033 = vpack.c.bf16 %v3020, %v3019
        %v3034 = vpack.c.bf16 %v3022, %v3021
        %v3035 = vpack.c.bf16 %v3024, %v3023
        %v3036 = vpack.c.bf16 %v3026, %v3025
        %v3037 = vpack.c.bf16 %v3028, %v3027
        %v3038 = vpack.c.bf16 %v3030, %v3029
        %v3039 = vld [vmem:[%s12] sm:$0xf]
        %v3040 = vld [vmem:[%s12 + $0x4] sm:$0xf]
        %v3041 = vld [vmem:[%s12 + $0x8] sm:$0xf]
        %v3042 = vld [vmem:[%s12 + $0xc] sm:$0xf]
        %v3043 = vld [vmem:[%s12 + $0x10] sm:$0xf]
        %v3044 = vld [vmem:[%s12 + $0x14] sm:$0xf]
        %v3045 = vld [vmem:[%s12 + $0x18] sm:$0xf]
        %v3046 = vld [vmem:[%s12 + $0x1c] sm:$0xf]
        %v3047 = vld [vmem:[%s13 + $0x11] ss:$0 sm:$0xff]
        %v3056 = vunpack.c.l.b16 %v3039
        %v3057 = vunpack.c.l.b16 %v3040
        %v3058 = vunpack.c.l.b16 %v3041
        %v3059 = vunpack.c.l.b16 %v3042
        %v3060 = vunpack.c.l.b16 %v3043
        %v3061 = vunpack.c.l.b16 %v3044
        %v3062 = vunpack.c.l.b16 %v3045
        %v3063 = vunpack.c.l.b16 %v3046
        %v3064 = vpack.c.b16 %v3057, %v3056
        %v3065 = vpack.c.b16 %v3059, %v3058
        %v3066 = vpack.c.b16 %v3061, %v3060
        %v3067 = vpack.c.b16 %v3063, %v3062
        %v3073 = vsel %vm2173, %v3031, 0
        %v3076 = vsel %vm2173, %v3032, 0
        %v3079 = vsel %vm2173, %v3033, 0
        %v3082 = vsel %vm2173, %v3034, 0
        %v3085 = vsel %vm2173, %v3035, 0
        %v3088 = vsel %vm2173, %v3036, 0
        %v3091 = vsel %vm2173, %v3037, 0
        %v3094 = vsel %vm2173, %v3038, 0
        %3096 = vmatpush.bf16.msra.mxu0 0
        %3097 = vmatpush.bf16.msra.mxu0 0
        %3098 = vmatpush.bf16.msra.mxu0 0
        %3099 = vmatpush.bf16.msra.mxu0 0
        %3100 = vmatpush.bf16.msra.mxu0 %v3067
        %3101 = vmatpush.bf16.msra.mxu0 %v3066
        %3102 = vmatpush.bf16.msra.mxu0 %v3065
        %3103 = vmatpush.bf16.msra.mxu0 %v3064
        %3104 = vmatmul.bf16.gmra.mxu0 %v3073
        %v3105 = vpop.f32.mrf.mxu0
        %v3106 = vadd.f32 %v3047, %v3105
        %v3107 = vpop.f32.mrf.mxu0
        %v3108 = vadd.f32 %v3047, %v3107
        %3109 = vmatmul.bf16.gmra.mxu0 %v3076
        %v3110 = vpop.f32.mrf.mxu0
        %v3111 = vadd.f32 %v3047, %v3110
        %v3112 = vpop.f32.mrf.mxu0
        %v3113 = vadd.f32 %v3047, %v3112
        %3114 = vmatmul.bf16.gmra.mxu0 %v3079
        %v3115 = vpop.f32.mrf.mxu0
        %v3116 = vadd.f32 %v3047, %v3115
        %v3117 = vpop.f32.mrf.mxu0
        %v3118 = vadd.f32 %v3047, %v3117
        %3119 = vmatmul.bf16.gmra.mxu0 %v3082
        %v3120 = vpop.f32.mrf.mxu0
        %v3121 = vadd.f32 %v3047, %v3120
        %v3122 = vpop.f32.mrf.mxu0
        %v3123 = vadd.f32 %v3047, %v3122
        %3124 = vmatmul.bf16.gmra.mxu0 %v3085
        %v3125 = vpop.f32.mrf.mxu0
        %v3126 = vadd.f32 %v3047, %v3125
        %v3127 = vpop.f32.mrf.mxu0
        %v3128 = vadd.f32 %v3047, %v3127
        %3129 = vmatmul.bf16.gmra.mxu0 %v3088
        %v3130 = vpop.f32.mrf.mxu0
        %v3131 = vadd.f32 %v3047, %v3130
        %v3132 = vpop.f32.mrf.mxu0
        %v3133 = vadd.f32 %v3047, %v3132
        %3134 = vmatmul.bf16.gmra.mxu0 %v3091
        %v3135 = vpop.f32.mrf.mxu0
        %v3136 = vadd.f32 %v3047, %v3135
        %v3137 = vpop.f32.mrf.mxu0
        %v3138 = vadd.f32 %v3047, %v3137
        %3139 = vmatmul.bf16.gmra.mxu0 %v3094
        %v3140 = vpop.f32.mrf.mxu0
        %v3141 = vadd.f32 %v3047, %v3140
        %v3142 = vpop.f32.mrf.mxu0
        %v3143 = vadd.f32 %v3047, %v3142
        %3144 = vdwg.mxu0
        %3145 = vst [vmem:[%s511] sm:$0xff] %v3106
        %3146 = vst [vmem:[%s511 + $0x8] sm:$0xff] %v3108
        %3147 = vst [vmem:[%s511 + $0x10] sm:$0xff] %v3111
        %3148 = vst [vmem:[%s511 + $0x18] sm:$0xff] %v3113
        %3149 = vst [vmem:[%s511 + $0x20] sm:$0xff] %v3116
        %3150 = vst [vmem:[%s511 + $0x28] sm:$0xff] %v3118
        %3151 = vst [vmem:[%s511 + $0x30] sm:$0xff] %v3121
        %3152 = vst [vmem:[%s511 + $0x38] sm:$0xff] %v3123
        %3153 = vst [vmem:[%s511 + $0x40] sm:$0xff] %v3126
        %3154 = vst [vmem:[%s511 + $0x48] sm:$0xff] %v3128
        %3155 = vst [vmem:[%s511 + $0x50] sm:$0xff] %v3131
        %3156 = vst [vmem:[%s511 + $0x58] sm:$0xff] %v3133
        %3157 = vst [vmem:[%s511 + $0x60] sm:$0xff] %v3136
        %3158 = vst [vmem:[%s511 + $0x68] sm:$0xff] %v3138
        %3159 = vst [vmem:[%s511 + $0x70] sm:$0xff] %v3141
        %3160 = vst [vmem:[%s511 + $0x78] sm:$0xff] %v3143
        %s3161 = sand.u32 %s342, 1
        %s3162 = scalar_lea.sflag [#allocation4], %s3161
        %s3163 = sand.u32 %s342, 1
        %s3164 = smul.addr %s3163, 128
        %s3165 = scalar_lea.vmem [#allocation7], %s3164
        // Predicated region
        $region85: #{tpu_custom_call.1} parent=75 // pred_check
          %p3166 = pneg %p352
        $region86: #{tpu_custom_call.1} parent=75 // pred_check_branch
          %3168 = sbr.rel (%p3166) target = $region88
        $region87: #{tpu_custom_call.1} parent=75 // pred_region
          %s3169 = smul.u32 16, %s30
          %3171 = vsyncadd %s3162, 0
          %s3172 = smul.addr %s3169, 8
          %s3173 = scalar_lea.hbm %s14, %s3172
          %s3174 = sshll.u32 %s3165, 4
          %s3175 = int_to_ptr.vmem [resolvable:$true] %s3174
          %s3176 = sshll.u32 %s3173, 4
          %s3177 = int_to_ptr.hbm [resolvable:$true] %s3176
          %3182 = dma.vmem_to_hbm [thread:$0]  %s3175, 2048, %s3177, %s3162, 128, 128, 8
        $region88: #{tpu_custom_call.1} parent=75 // pred_fallthru
          _
      $region76: #{tpu_custom_call.1} parent=5 // pred_fallthru
        _
      %p3183 = scmp.le.s32.totalorder 2, %s25
      // Predicated region
      $region89: #{tpu_custom_call.1} parent=5 // pred_check
        %p3184 = pneg %p3183
      $region90: #{tpu_custom_call.1} parent=5 // pred_check_branch
        %3186 = sbr.rel (%p3184) target = $region92
      $region91: #{tpu_custom_call.1} parent=5 // pred_region
        %s3187 = ssub.s32 %s25, 2
        // Predicated region
        $region93: #{tpu_custom_call.1} parent=91 // pred_check
          %p3188 = pneg %p358
        $region94: #{tpu_custom_call.1} parent=91 // pred_check_branch
          %3190 = sbr.rel (%p3188) target = $region96
        $region95: #{tpu_custom_call.1} parent=91 // pred_region
          %s3191 = sand.u32 %s343, 1
          %s3192 = scalar_lea.sflag [#allocation4], %s3191
          %s3193 = sand.u32 %s343, 1
          %s3194 = smul.addr %s3193, 128
          %s3195 = scalar_lea.vmem [#allocation7], %s3194
          %3197 = dma.done %s3192, 2048
        $region96: #{tpu_custom_call.1} parent=91 // pred_fallthru
          _
      $region92: #{tpu_custom_call.1} parent=5 // pred_fallthru
        _
    $region6: #{tpu_custom_call.1} parent=1 // loop_footer
      %s29 = sadd.s32 1, %s25
    $region7: #{tpu_custom_call.1} parent=1 // loop_footer_branch
      %24 = sbr.rel target = $region3
    $region8: #{tpu_custom_call.1} parent=1 // loop_exit
      _
    %3198 = vsyncpa [#allocation3], 1
    %s3199 = scalar_lea.sflag [#allocation3], 1
    %3200 = vsyncpa %s3199, 1
    %3201 = vsyncpa [#allocation6], 1
    %3202 = vsyncpa [#allocation4], 1
    %s3203 = scalar_lea.sflag [#allocation4], 1
    %3204 = vsyncpa %s3203, 1

</llo_original>
